<compile_context>
chip_gen: v6e
topology: v6e:2x2x1
jax: 0.10.0
libtpu: 0.0.40
codegen_flags: <defaults>
</compile_context>

<pallas_src>
import functools

import jax
import jax.numpy as jnp
from jax import lax
from jax.experimental import pallas as pl
from jax.experimental.pallas import tpu as pltpu

# ---------------- configuration (small, consistent with the module) ----------------
D_MODEL = 32
D_FFN = 64
N_HEADS = 4
N_LEVELS = 2
N_POINTS = 2
LN_EPS = 1e-5


# ================================ in-kernel helpers ================================

def _layer_norm(z, g, b):
    mu = jnp.mean(z, axis=-1, keepdims=True)
    var = jnp.mean((z - mu) ** 2, axis=-1, keepdims=True)
    return (z - mu) * lax.rsqrt(var + LN_EPS) * g + b


def _softmax_lastdim(s):
    m = jnp.max(s, axis=-1, keepdims=True)
    e = jnp.exp(s - m)
    # divide on the EUP slot (otherwise idle) instead of a VALU divide
    return e * pl.reciprocal(jnp.sum(e, axis=-1, keepdims=True), approx=True)


# ================================ fused decoder-layer kernel ================================

def _decoder_layer_kernel(
    # per-batch activations (one batch element per grid program)
    tgt_ref, qpos_ref, kbias_ref, src_ref, srcpad_ref, ref_ref,
    # weights (matmul weights pre-cast to bf16, except the offset/attn projection)
    w_qk_ref, w_v_ref, w_o_ref, value_w_ref, w_offattn_ref, out_w_ref,
    ffn_w1_ref, ffn_w2_ref,
    # packed bias / layernorm vectors (fp32, one row each)
    vec_ref,
    # output
    o_ref,
    *, Lq, temporal_shapes, level_start):
  D, H, L, P = D_MODEL, N_HEADS, N_LEVELS, N_POINTS
  Dh = D // H
  LP = L * P
  HLP = H * LP
  f32, bf16 = jnp.float32, jnp.bfloat16

  # ---- unpack the packed bias / norm vectors: rows of a (14, 64) fp32 slab ----
  b_qk = vec_ref[0:1, :]                 # (1, 2D)
  b_v = vec_ref[1:2, :D]
  b_o = vec_ref[2:3, :D]
  n2_g = vec_ref[3:4, :D]
  n2_b = vec_ref[4:5, :D]
  value_b = vec_ref[5:6, :D]
  b_offattn = vec_ref[6:7, :2 * HLP]
  out_b = vec_ref[7:8, :D]
  n1_g = vec_ref[8:9, :D]
  n1_b = vec_ref[9:10, :D]
  ffn_b1 = vec_ref[10:11, :]             # (1, D_FFN)
  ffn_b2 = vec_ref[11:12, :D]
  n3_g = vec_ref[12:13, :D]
  n3_b = vec_ref[13:14, :D]

  x = tgt_ref[...]                       # (Lq, D) fp32
  qpos = qpos_ref[...]
  kbias = kbias_ref[...]                 # (1, Lq): 0 for valid keys, -1e9 for padded keys

  # ---------------- self attention + residual + norm2 ----------------
  # 1/sqrt(Dh) is folded into the q half of w_qk / b_qk at construction time.
  qk = jnp.dot((x + qpos).astype(bf16), w_qk_ref[...],
               preferred_element_type=f32) + b_qk                        # (Lq, 2D)
  v = jnp.dot(x.astype(bf16), w_v_ref[...],
              preferred_element_type=f32) + b_v                          # (Lq, D)

  # head-batched attention: (H, Lq, Dh)
  qh = jnp.stack([qk[:, h * Dh:(h + 1) * Dh] for h in range(H)], 0).astype(bf16)
  kh = jnp.stack([qk[:, D + h * Dh:D + (h + 1) * Dh] for h in range(H)], 0).astype(bf16)
  vh = jnp.stack([v[:, h * Dh:(h + 1) * Dh] for h in range(H)], 0).astype(bf16)

  s = jnp.einsum('hqd,hkd->hqk', qh, kh, preferred_element_type=f32)     # (H, Lq, Lq)
  s = s + kbias.reshape(1, 1, Lq)
  p = _softmax_lastdim(s)
  o = jnp.einsum('hqk,hkd->hqd', p.astype(bf16), vh, preferred_element_type=f32)
  o_flat = jnp.concatenate([o[h] for h in range(H)], axis=-1)            # (Lq, D)
  # single (Lq,D)x(D,D) output projection (heads packed first)
  sa = jnp.dot(o_flat.astype(bf16), w_o_ref[...], preferred_element_type=f32) + b_o
  tgt1 = _layer_norm(x + sa, n2_g, n2_b)

  # ---------------- deformable cross attention + residual + norm1 ----------------
  query = tgt1 + qpos
  value = jnp.dot(src_ref[...].astype(bf16), value_w_ref[...],
                  preferred_element_type=f32) + value_b                  # (Len_in, D)
  value = (value * (1.0 - srcpad_ref[...])).astype(bf16)                 # zero padded positions

  # fused [sampling_offsets | attention_logits] projection, kept fp32 for location accuracy
  offattn = jnp.dot(query, w_offattn_ref[...],
                    preferred_element_type=f32) + b_offattn              # (Lq, 2*HLP)

  ref_pts = ref_ref[...]                                                 # (Lq, L)
  # per-level constants hoisted outside the head / point loops
  cols, pos_base, sizes, starts = [], [], [], []
  for l in range(L):
    t_l = int(temporal_shapes[l])
    sizes.append(t_l)
    starts.append(int(level_start[l]))
    cols.append(lax.broadcasted_iota(jnp.int32, (Lq, t_l), 1).astype(f32))
    # grid_sample align_corners=False pixel coordinate before adding the learned offset
    pos_base.append(ref_pts[:, l:l + 1] * t_l - 0.5)

  head_outs = []
  for h in range(H):
    aw = _softmax_lastdim(offattn[:, HLP + h * LP: HLP + (h + 1) * LP])  # (Lq, L*P)
    s_h = jnp.zeros((Lq, Dh), f32)
    for l in range(L):
      t_l, start_l = sizes[l], starts[l]
      # per-level interpolation slab (Lq, t_l): the linear "hat" kernel is exactly
      # align_corners=False linear interpolation with zero padding outside the level.
      w_hl = jnp.zeros((Lq, t_l), f32)
      for pt in range(P):
        c = h * LP + l * P + pt
        pos = pos_base[l] + offattn[:, c:c + 1]                          # (Lq, 1)
        a_w = aw[:, l * P + pt: l * P + pt + 1]                          # (Lq, 1)
        w_hl = w_hl + a_w * jnp.maximum(1.0 - jnp.abs(cols[l] - pos), 0.0)
      s_h = s_h + jnp.dot(w_hl.astype(bf16),
                          value[start_l:start_l + t_l, h * Dh:(h + 1) * Dh],
                          preferred_element_type=f32)
    head_outs.append(s_h)
  sampled = jnp.concatenate(head_outs, axis=-1)                          # (Lq, D)
  # single (Lq,D)x(D,D) output projection for the deformable attention
  ca = jnp.dot(sampled.astype(bf16), out_w_ref[...],
               preferred_element_type=f32) + out_b
  tgt2 = _layer_norm(tgt1 + ca, n1_g, n1_b)

  # ---------------- FFN + residual + norm3 ----------------
  hdn = jnp.maximum(
      jnp.dot(tgt2.astype(bf16), ffn_w1_ref[...], preferred_element_type=f32) + ffn_b1,
      0.0)
  y = jnp.dot(hdn.astype(bf16), ffn_w2_ref[...], preferred_element_type=f32) + ffn_b2
  o_ref[...] = _layer_norm(tgt2 + y, n3_g, n3_b)


# ================================ module glue ================================

def make_decoder_layer_forward(params, temporal_shapes):
    temporal_shapes = tuple(int(t) for t in temporal_shapes)
    level_start, s = [], 0
    for t in temporal_shapes:
        level_start.append(s)
        s += t
    level_start = tuple(level_start)

    D, F = D_MODEL, D_FFN
    Dh = D // N_HEADS
    scale = 1.0 / (Dh ** 0.5)

    # fused [q | k] projection, 1/sqrt(Dh) folded into the q half (one-time constant fold)
    w_qk = jnp.concatenate([params['wq'] * scale, params['wk']], axis=1)
    b_qk = jnp.concatenate([params['bq'] * scale, params['bk']], axis=0)
    # fused [sampling_offsets | attention_logits] projection (kept fp32)
    w_offattn = jnp.concatenate([params['off_w'], params['attn_w']], axis=1)
    b_offattn = jnp.concatenate([params['off_b'], params['attn_b']], axis=0)

    bf16 = jnp.bfloat16
    w_qk_b = w_qk.astype(bf16)
    w_v_b = params['wv'].astype(bf16)
    w_o_b = params['wo'].astype(bf16)
    value_w_b = params['value_w'].astype(bf16)
    out_w_b = params['out_w'].astype(bf16)
    ffn_w1_b = params['ffn_w1'].astype(bf16)
    ffn_w2_b = params['ffn_w2'].astype(bf16)

    # pack all bias / LayerNorm vectors into one (14, 64) fp32 slab: 1 DMA instead of 14
    width = max(2 * D, F)

    def _row(v):
        v = jnp.asarray(v, jnp.float32).reshape(-1)
        return jnp.pad(v, (0, width - v.shape[0]))

    vecs = jnp.stack([
        _row(b_qk), _row(params['bv']), _row(params['bo']),
        _row(params['norm2_g']), _row(params['norm2_b']),
        _row(params['value_b']), _row(b_offattn), _row(params['out_b']),
        _row(params['norm1_g']), _row(params['norm1_b']),
        _row(params['ffn_b1']), _row(params['ffn_b2']),
        _row(params['norm3_g']), _row(params['norm3_b']),
    ], axis=0)

    @jax.jit
    def forward(tgt, query_pos, reference_points, src, src_padding_mask, query_mask):
        B, Lq, _ = tgt.shape
        Len_in = src.shape[1]
        # key_padding_mask = ~query_mask (True in query_mask == valid key) -> additive bias
        key_bias = jnp.where(query_mask, 0.0, -1e9).astype(jnp.float32)[:, None, :]   # (B,1,Lq)
        src_pad = src_padding_mask.astype(jnp.float32)[..., None]                     # (B,Len_in,1)
        ref3d = reference_points.reshape(B, Lq, N_LEVELS).astype(jnp.float32)

        kernel = functools.partial(
            _decoder_layer_kernel, Lq=Lq,
            temporal_shapes=temporal_shapes, level_start=level_start)

        def batch_spec(shape):
            nd = len(shape)
            return pl.BlockSpec((None,) + tuple(shape[1:]),
                                lambda b: (b,) + (0,) * (nd - 1))

        def full_spec(arr):
            nd = arr.ndim
            return pl.BlockSpec(arr.shape, lambda b: (0,) * nd)

        out = pl.pallas_call(
            kernel,
            grid=(B,),
            out_shape=jax.ShapeDtypeStruct((B, Lq, D), jnp.float32),
            in_specs=[
                batch_spec((B, Lq, D)),            # tgt
                batch_spec((B, Lq, D)),            # query_pos
                batch_spec((B, 1, Lq)),            # key bias
                batch_spec((B, Len_in, D)),        # src
                batch_spec((B, Len_in, 1)),        # src padding
                batch_spec((B, Lq, N_LEVELS)),     # reference points
                full_spec(w_qk_b), full_spec(w_v_b), full_spec(w_o_b),
                full_spec(value_w_b), full_spec(w_offattn), full_spec(out_w_b),
                full_spec(ffn_w1_b), full_spec(ffn_w2_b), full_spec(vecs),
            ],
            out_specs=pl.BlockSpec((None, Lq, D), lambda b: (b, 0, 0)),
            compiler_params=pltpu.CompilerParams(
                dimension_semantics=("parallel",),
                vmem_limit_bytes=32 * 1024 * 1024),
        )(tgt, query_pos, key_bias, src, src_pad, ref3d,
          w_qk_b, w_v_b, w_o_b, value_w_b, w_offattn, out_w_b,
          ffn_w1_b, ffn_w2_b, vecs)
        return out

    return forward


# ================================ parameter init ================================

def init_params(key):
    H, L, P, D, F = N_HEADS, N_LEVELS, N_POINTS, D_MODEL, D_FFN
    HLP = H * L * P
    shapes = {
        'wq': (D, D), 'bq': (D,), 'wk': (D, D), 'bk': (D,), 'wv': (D, D), 'bv': (D,),
        'wo': (D, D), 'bo': (D,),
        'norm2_g': (D,), 'norm2_b': (D,),
        'value_w': (D, D), 'value_b': (D,),
        'off_w': (D, HLP), 'off_b': (HLP,),
        'attn_w': (D, HLP), 'attn_b': (HLP,),
        'out_w': (D, D), 'out_b': (D,),
        'norm1_g': (D,), 'norm1_b': (D,),
        'ffn_w1': (D, F), 'ffn_b1': (F,),
        'ffn_w2': (F, D), 'ffn_b2': (D,),
        'norm3_g': (D,), 'norm3_b': (D,),
    }
    params = {}
    keys = jax.random.split(key, len(shapes))
    for (name, shape), k in zip(shapes.items(), keys):
        if name.startswith('norm') and name.endswith('_g'):
            params[name] = jnp.ones(shape, jnp.float32)
        elif name.startswith('norm') and name.endswith('_b'):
            params[name] = jnp.zeros(shape, jnp.float32)
        elif len(shape) == 1:  # bias
            params[name] = jax.random.normal(k, shape, jnp.float32) * 0.02
        else:                  # weight stored as (in, out) so kernels do x @ W
            params[name] = jax.random.normal(k, shape, jnp.float32) * 0.05
    return params


# ================================ main ================================

if __name__ == "__main__":
    key = jax.random.PRNGKey(0)
    k_p, k1, k2, k3, k4 = jax.random.split(key, 5)

    B, Lq = 2, 8
    temporal_shapes = (16, 8)
    Len_in = sum(temporal_shapes)

    params = init_params(k_p)
    forward = make_decoder_layer_forward(params, temporal_shapes)

    tgt = jax.random.normal(k1, (B, Lq, D_MODEL), jnp.float32)
    query_pos = jax.random.normal(k2, (B, Lq, D_MODEL), jnp.float32)
    reference_points = jax.random.uniform(k3, (B, Lq, N_LEVELS, 1), jnp.float32)
    src = jax.random.normal(k4, (B, Len_in, D_MODEL), jnp.float32)
    # True == padding for src_padding_mask, True == valid for query_mask
    src_padding_mask = jnp.zeros((B, Len_in), bool).at[1, -4:].set(True)
    query_mask = jnp.ones((B, Lq), bool).at[1, -2:].set(False)

    out = forward(tgt, query_pos, reference_points, src, src_padding_mask, query_mask)
    jax.block_until_ready(out)
    assert out.shape == (B, Lq, D_MODEL)
    assert bool(jnp.all(jnp.isfinite(out)))
    print("KERNEL_OK")
</pallas_src>

<mosaic_0001>
module attributes {stable_mosaic.version = 11 : i64} {
  func.func @_decoder_layer_kernel(%arg0: i32, %arg1: memref<1x8x32xf32, #tpu.memory_space<vmem>>, %arg2: memref<1x8x32xf32, #tpu.memory_space<vmem>>, %arg3: memref<1x1x8xf32, #tpu.memory_space<vmem>>, %arg4: memref<1x24x32xf32, #tpu.memory_space<vmem>>, %arg5: memref<1x24x1xf32, #tpu.memory_space<vmem>>, %arg6: memref<1x8x2xf32, #tpu.memory_space<vmem>>, %arg7: memref<32x64xbf16, #tpu.memory_space<vmem>>, %arg8: memref<32x32xbf16, #tpu.memory_space<vmem>>, %arg9: memref<32x32xbf16, #tpu.memory_space<vmem>>, %arg10: memref<32x32xbf16, #tpu.memory_space<vmem>>, %arg11: memref<32x32xf32, #tpu.memory_space<vmem>>, %arg12: memref<32x32xbf16, #tpu.memory_space<vmem>>, %arg13: memref<32x64xbf16, #tpu.memory_space<vmem>>, %arg14: memref<64x32xbf16, #tpu.memory_space<vmem>>, %arg15: memref<14x64xf32, #tpu.memory_space<vmem>>, %arg16: memref<1x8x32xf32, #tpu.memory_space<vmem>>) attributes {dimension_semantics = [#tpu.dimension_semantics<parallel>], iteration_bounds = array<i64: 2>, scalar_prefetch = 0 : i64, scratch_operands = 0 : i64, tpu.core_type = #tpu.core_type<tc>, window_params = [{transform_indices = @transform_0, window_bounds = array<i64: 1, 8, 32>}, {transform_indices = @transform_1, window_bounds = array<i64: 1, 8, 32>}, {transform_indices = @transform_2, window_bounds = array<i64: 1, 1, 8>}, {transform_indices = @transform_3, window_bounds = array<i64: 1, 24, 32>}, {transform_indices = @transform_4, window_bounds = array<i64: 1, 24, 1>}, {transform_indices = @transform_5, window_bounds = array<i64: 1, 8, 2>}, {pipeline_mode = #tpu.pipeline_mode<synchronous>, transform_indices = @transform_6, window_bounds = array<i64: 32, 64>}, {pipeline_mode = #tpu.pipeline_mode<synchronous>, transform_indices = @transform_7, window_bounds = array<i64: 32, 32>}, {pipeline_mode = #tpu.pipeline_mode<synchronous>, transform_indices = @transform_8, window_bounds = array<i64: 32, 32>}, {pipeline_mode = #tpu.pipeline_mode<synchronous>, transform_indices = @transform_9, window_bounds = array<i64: 32, 32>}, {pipeline_mode = #tpu.pipeline_mode<synchronous>, transform_indices = @transform_10, window_bounds = array<i64: 32, 32>}, {pipeline_mode = #tpu.pipeline_mode<synchronous>, transform_indices = @transform_11, window_bounds = array<i64: 32, 32>}, {pipeline_mode = #tpu.pipeline_mode<synchronous>, transform_indices = @transform_12, window_bounds = array<i64: 32, 64>}, {pipeline_mode = #tpu.pipeline_mode<synchronous>, transform_indices = @transform_13, window_bounds = array<i64: 64, 32>}, {pipeline_mode = #tpu.pipeline_mode<synchronous>, transform_indices = @transform_14, window_bounds = array<i64: 14, 64>}, {transform_indices = @transform_15, window_bounds = array<i64: 1, 8, 32>}]} {
    %c0 = arith.constant 0 : index
    %c0_0 = arith.constant 0 : index
    %0 = vector.load %arg15[%c0, %c0_0] : memref<14x64xf32, #tpu.memory_space<vmem>>, vector<1x64xf32>
    %c1 = arith.constant 1 : index
    %c0_1 = arith.constant 0 : index
    %1 = vector.load %arg15[%c1, %c0_1] : memref<14x64xf32, #tpu.memory_space<vmem>>, vector<1x32xf32>
    %c2 = arith.constant 2 : index
    %c0_2 = arith.constant 0 : index
    %2 = vector.load %arg15[%c2, %c0_2] : memref<14x64xf32, #tpu.memory_space<vmem>>, vector<1x32xf32>
    %c3 = arith.constant 3 : index
    %c0_3 = arith.constant 0 : index
    %3 = vector.load %arg15[%c3, %c0_3] : memref<14x64xf32, #tpu.memory_space<vmem>>, vector<1x32xf32>
    %c4 = arith.constant 4 : index
    %c0_4 = arith.constant 0 : index
    %4 = vector.load %arg15[%c4, %c0_4] : memref<14x64xf32, #tpu.memory_space<vmem>>, vector<1x32xf32>
    %c5 = arith.constant 5 : index
    %c0_5 = arith.constant 0 : index
    %5 = vector.load %arg15[%c5, %c0_5] : memref<14x64xf32, #tpu.memory_space<vmem>>, vector<1x32xf32>
    %c6 = arith.constant 6 : index
    %c0_6 = arith.constant 0 : index
    %6 = vector.load %arg15[%c6, %c0_6] : memref<14x64xf32, #tpu.memory_space<vmem>>, vector<1x32xf32>
    %c7 = arith.constant 7 : index
    %c0_7 = arith.constant 0 : index
    %7 = vector.load %arg15[%c7, %c0_7] : memref<14x64xf32, #tpu.memory_space<vmem>>, vector<1x32xf32>
    %c8 = arith.constant 8 : index
    %c0_8 = arith.constant 0 : index
    %8 = vector.load %arg15[%c8, %c0_8] : memref<14x64xf32, #tpu.memory_space<vmem>>, vector<1x32xf32>
    %c9 = arith.constant 9 : index
    %c0_9 = arith.constant 0 : index
    %9 = vector.load %arg15[%c9, %c0_9] : memref<14x64xf32, #tpu.memory_space<vmem>>, vector<1x32xf32>
    %c10 = arith.constant 10 : index
    %c0_10 = arith.constant 0 : index
    %10 = vector.load %arg15[%c10, %c0_10] : memref<14x64xf32, #tpu.memory_space<vmem>>, vector<1x64xf32>
    %c11 = arith.constant 11 : index
    %c0_11 = arith.constant 0 : index
    %11 = vector.load %arg15[%c11, %c0_11] : memref<14x64xf32, #tpu.memory_space<vmem>>, vector<1x32xf32>
    %c12 = arith.constant 12 : index
    %c0_12 = arith.constant 0 : index
    %12 = vector.load %arg15[%c12, %c0_12] : memref<14x64xf32, #tpu.memory_space<vmem>>, vector<1x32xf32>
    %c13 = arith.constant 13 : index
    %c0_13 = arith.constant 0 : index
    %13 = vector.load %arg15[%c13, %c0_13] : memref<14x64xf32, #tpu.memory_space<vmem>>, vector<1x32xf32>
    %c0_14 = arith.constant 0 : index
    %c0_15 = arith.constant 0 : index
    %c0_16 = arith.constant 0 : index
    %14 = vector.load %arg1[%c0_14, %c0_15, %c0_16] : memref<1x8x32xf32, #tpu.memory_space<vmem>>, vector<1x8x32xf32>
    %15 = vector.shape_cast %14 : vector<1x8x32xf32> to vector<8x32xf32>
    %c0_17 = arith.constant 0 : index
    %c0_18 = arith.constant 0 : index
    %c0_19 = arith.constant 0 : index
    %16 = vector.load %arg2[%c0_17, %c0_18, %c0_19] : memref<1x8x32xf32, #tpu.memory_space<vmem>>, vector<1x8x32xf32>
    %17 = vector.shape_cast %16 : vector<1x8x32xf32> to vector<8x32xf32>
    %c0_20 = arith.constant 0 : index
    %c0_21 = arith.constant 0 : index
    %c0_22 = arith.constant 0 : index
    %18 = vector.load %arg3[%c0_20, %c0_21, %c0_22] : memref<1x1x8xf32, #tpu.memory_space<vmem>>, vector<1x1x8xf32>
    %19 = vector.shape_cast %18 : vector<1x1x8xf32> to vector<1x8xf32>
    %20 = arith.addf %15, %17 : vector<8x32xf32>
    %21 = arith.truncf %20 : vector<8x32xf32> to vector<8x32xbf16>
    %c0_23 = arith.constant 0 : index
    %c0_24 = arith.constant 0 : index
    %22 = vector.load %arg7[%c0_23, %c0_24] : memref<32x64xbf16, #tpu.memory_space<vmem>>, vector<32x64xbf16>
    %cst = arith.constant dense<0.000000e+00> : vector<8x64xf32>
    %23 = tpu.matmul %21, %22, %cst {dimension_numbers = #tpu.dot_dimension_numbers<[1], [0], [0], [1], [0, 0, 1, 1], [], []>} : vector<8x32xbf16>, vector<32x64xbf16>, vector<8x64xf32> -> vector<8x64xf32>
    %24 = vector.broadcast %0 : vector<1x64xf32> to vector<8x64xf32>
    %25 = arith.addf %23, %24 : vector<8x64xf32>
    %26 = arith.truncf %15 : vector<8x32xf32> to vector<8x32xbf16>
    %c0_25 = arith.constant 0 : index
    %c0_26 = arith.constant 0 : index
    %27 = vector.load %arg8[%c0_25, %c0_26] : memref<32x32xbf16, #tpu.memory_space<vmem>>, vector<32x32xbf16>
    %cst_27 = arith.constant dense<0.000000e+00> : vector<8x32xf32>
    %28 = tpu.matmul %26, %27, %cst_27 {dimension_numbers = #tpu.dot_dimension_numbers<[1], [0], [0], [1], [0, 0, 1, 1], [], []>} : vector<8x32xbf16>, vector<32x32xbf16>, vector<8x32xf32> -> vector<8x32xf32>
    %29 = vector.broadcast %1 : vector<1x32xf32> to vector<8x32xf32>
    %30 = arith.addf %28, %29 : vector<8x32xf32>
    %31 = vector.extract_strided_slice %25 {offsets = [0, 0], sizes = [8, 8], strides = [1, 1]} : vector<8x64xf32> to vector<8x8xf32>
    %32 = vector.extract_strided_slice %25 {offsets = [0, 8], sizes = [8, 8], strides = [1, 1]} : vector<8x64xf32> to vector<8x8xf32>
    %33 = vector.extract_strided_slice %25 {offsets = [0, 16], sizes = [8, 8], strides = [1, 1]} : vector<8x64xf32> to vector<8x8xf32>
    %34 = vector.extract_strided_slice %25 {offsets = [0, 24], sizes = [8, 8], strides = [1, 1]} : vector<8x64xf32> to vector<8x8xf32>
    %35 = vector.shape_cast %31 : vector<8x8xf32> to vector<1x8x8xf32>
    %36 = vector.shape_cast %32 : vector<8x8xf32> to vector<1x8x8xf32>
    %37 = vector.shape_cast %33 : vector<8x8xf32> to vector<1x8x8xf32>
    %38 = vector.shape_cast %34 : vector<8x8xf32> to vector<1x8x8xf32>
    %39 = tpu.concatenate %35, %36, %37, %38 in 0 : vector<1x8x8xf32>, vector<1x8x8xf32>, vector<1x8x8xf32>, vector<1x8x8xf32> -> vector<4x8x8xf32>
    %40 = arith.truncf %39 : vector<4x8x8xf32> to vector<4x8x8xbf16>
    %41 = vector.extract_strided_slice %25 {offsets = [0, 32], sizes = [8, 8], strides = [1, 1]} : vector<8x64xf32> to vector<8x8xf32>
    %42 = vector.extract_strided_slice %25 {offsets = [0, 40], sizes = [8, 8], strides = [1, 1]} : vector<8x64xf32> to vector<8x8xf32>
    %43 = vector.extract_strided_slice %25 {offsets = [0, 48], sizes = [8, 8], strides = [1, 1]} : vector<8x64xf32> to vector<8x8xf32>
    %44 = vector.extract_strided_slice %25 {offsets = [0, 56], sizes = [8, 8], strides = [1, 1]} : vector<8x64xf32> to vector<8x8xf32>
    %45 = vector.shape_cast %41 : vector<8x8xf32> to vector<1x8x8xf32>
    %46 = vector.shape_cast %42 : vector<8x8xf32> to vector<1x8x8xf32>
    %47 = vector.shape_cast %43 : vector<8x8xf32> to vector<1x8x8xf32>
    %48 = vector.shape_cast %44 : vector<8x8xf32> to vector<1x8x8xf32>
    %49 = tpu.concatenate %45, %46, %47, %48 in 0 : vector<1x8x8xf32>, vector<1x8x8xf32>, vector<1x8x8xf32>, vector<1x8x8xf32> -> vector<4x8x8xf32>
    %50 = arith.truncf %49 : vector<4x8x8xf32> to vector<4x8x8xbf16>
    %51 = vector.extract_strided_slice %30 {offsets = [0, 0], sizes = [8, 8], strides = [1, 1]} : vector<8x32xf32> to vector<8x8xf32>
    %52 = vector.extract_strided_slice %30 {offsets = [0, 8], sizes = [8, 8], strides = [1, 1]} : vector<8x32xf32> to vector<8x8xf32>
    %53 = vector.extract_strided_slice %30 {offsets = [0, 16], sizes = [8, 8], strides = [1, 1]} : vector<8x32xf32> to vector<8x8xf32>
    %54 = vector.extract_strided_slice %30 {offsets = [0, 24], sizes = [8, 8], strides = [1, 1]} : vector<8x32xf32> to vector<8x8xf32>
    %55 = vector.shape_cast %51 : vector<8x8xf32> to vector<1x8x8xf32>
    %56 = vector.shape_cast %52 : vector<8x8xf32> to vector<1x8x8xf32>
    %57 = vector.shape_cast %53 : vector<8x8xf32> to vector<1x8x8xf32>
    %58 = vector.shape_cast %54 : vector<8x8xf32> to vector<1x8x8xf32>
    %59 = tpu.concatenate %55, %56, %57, %58 in 0 : vector<1x8x8xf32>, vector<1x8x8xf32>, vector<1x8x8xf32>, vector<1x8x8xf32> -> vector<4x8x8xf32>
    %60 = arith.truncf %59 : vector<4x8x8xf32> to vector<4x8x8xbf16>
    "tpu.trace_start"() <{level = 10 : i32, message = "hqd,hkd->hqk"}> : () -> ()
    %cst_28 = arith.constant dense<0.000000e+00> : vector<4x8x8xf32>
    %61 = tpu.matmul %40, %50, %cst_28 {dimension_numbers = #tpu.dot_dimension_numbers<[2], [2], [1], [1], [0, 0, 0, 1, 1, 1], [0], [0]>} : vector<4x8x8xbf16>, vector<4x8x8xbf16>, vector<4x8x8xf32> -> vector<4x8x8xf32>
    "tpu.trace_stop"() : () -> ()
    %62 = vector.shape_cast %19 : vector<1x8xf32> to vector<1x1x8xf32>
    %63 = vector.broadcast %62 : vector<1x1x8xf32> to vector<4x8x8xf32>
    %64 = arith.addf %61, %63 : vector<4x8x8xf32>
    %cst_29 = arith.constant dense<0xFF800000> : vector<4x8xf32>
    %65 = vector.multi_reduction <maximumf>, %64, %cst_29 [2] : vector<4x8x8xf32> to vector<4x8xf32>
    %66 = vector.shape_cast %65 : vector<4x8xf32> to vector<4x8x1xf32>
    %67 = vector.broadcast %66 : vector<4x8x1xf32> to vector<4x8x8xf32>
    %68 = arith.subf %64, %67 : vector<4x8x8xf32>
    %69 = math.exp %68 : vector<4x8x8xf32>
    %cst_30 = arith.constant dense<0.000000e+00> : vector<4x8xf32>
    %70 = vector.multi_reduction <add>, %69, %cst_30 [2] : vector<4x8x8xf32> to vector<4x8xf32>
    %71 = vector.shape_cast %70 : vector<4x8xf32> to vector<4x8x1xf32>
    %72 = tpu.reciprocal %71 {approx = true} : vector<4x8x1xf32> -> vector<4x8x1xf32>
    %73 = vector.broadcast %72 : vector<4x8x1xf32> to vector<4x8x8xf32>
    %74 = arith.mulf %69, %73 : vector<4x8x8xf32>
    %75 = arith.truncf %74 : vector<4x8x8xf32> to vector<4x8x8xbf16>
    "tpu.trace_start"() <{level = 10 : i32, message = "hqk,hkd->hqd"}> : () -> ()
    %cst_31 = arith.constant dense<0.000000e+00> : vector<4x8x8xf32>
    %76 = tpu.matmul %75, %60, %cst_31 {dimension_numbers = #tpu.dot_dimension_numbers<[2], [1], [1], [2], [0, 0, 0, 1, 1, 2], [0], [0]>} : vector<4x8x8xbf16>, vector<4x8x8xbf16>, vector<4x8x8xf32> -> vector<4x8x8xf32>
    "tpu.trace_stop"() : () -> ()
    %77 = vector.extract_strided_slice %76 {offsets = [0, 0, 0], sizes = [1, 8, 8], strides = [1, 1, 1]} : vector<4x8x8xf32> to vector<1x8x8xf32>
    %78 = vector.shape_cast %77 : vector<1x8x8xf32> to vector<8x8xf32>
    %79 = vector.extract_strided_slice %76 {offsets = [1, 0, 0], sizes = [1, 8, 8], strides = [1, 1, 1]} : vector<4x8x8xf32> to vector<1x8x8xf32>
    %80 = vector.shape_cast %79 : vector<1x8x8xf32> to vector<8x8xf32>
    %81 = vector.extract_strided_slice %76 {offsets = [2, 0, 0], sizes = [1, 8, 8], strides = [1, 1, 1]} : vector<4x8x8xf32> to vector<1x8x8xf32>
    %82 = vector.shape_cast %81 : vector<1x8x8xf32> to vector<8x8xf32>
    %83 = vector.extract_strided_slice %76 {offsets = [3, 0, 0], sizes = [1, 8, 8], strides = [1, 1, 1]} : vector<4x8x8xf32> to vector<1x8x8xf32>
    %84 = vector.shape_cast %83 : vector<1x8x8xf32> to vector<8x8xf32>
    %85 = tpu.concatenate %78, %80, %82, %84 in 1 : vector<8x8xf32>, vector<8x8xf32>, vector<8x8xf32>, vector<8x8xf32> -> vector<8x32xf32>
    %86 = arith.truncf %85 : vector<8x32xf32> to vector<8x32xbf16>
    %c0_32 = arith.constant 0 : index
    %c0_33 = arith.constant 0 : index
    %87 = vector.load %arg9[%c0_32, %c0_33] : memref<32x32xbf16, #tpu.memory_space<vmem>>, vector<32x32xbf16>
    %cst_34 = arith.constant dense<0.000000e+00> : vector<8x32xf32>
    %88 = tpu.matmul %86, %87, %cst_34 {dimension_numbers = #tpu.dot_dimension_numbers<[1], [0], [0], [1], [0, 0, 1, 1], [], []>} : vector<8x32xbf16>, vector<32x32xbf16>, vector<8x32xf32> -> vector<8x32xf32>
    %89 = vector.broadcast %2 : vector<1x32xf32> to vector<8x32xf32>
    %90 = arith.addf %88, %89 : vector<8x32xf32>
    %91 = arith.addf %15, %90 : vector<8x32xf32>
    %cst_35 = arith.constant dense<0.000000e+00> : vector<8xf32>
    %92 = vector.multi_reduction <add>, %91, %cst_35 [1] : vector<8x32xf32> to vector<8xf32>
    %93 = vector.shape_cast %92 : vector<8xf32> to vector<8x1xf32>
    %cst_36 = arith.constant 3.200000e+01 : f32
    %94 = vector.broadcast %cst_36 : f32 to vector<8x1xf32>
    %95 = arith.divf %93, %94 : vector<8x1xf32>
    %96 = vector.broadcast %95 : vector<8x1xf32> to vector<8x32xf32>
    %97 = arith.subf %91, %96 : vector<8x32xf32>
    %98 = arith.mulf %97, %97 : vector<8x32xf32>
    %cst_37 = arith.constant dense<0.000000e+00> : vector<8xf32>
    %99 = vector.multi_reduction <add>, %98, %cst_37 [1] : vector<8x32xf32> to vector<8xf32>
    %100 = vector.shape_cast %99 : vector<8xf32> to vector<8x1xf32>
    %cst_38 = arith.constant 3.200000e+01 : f32
    %101 = vector.broadcast %cst_38 : f32 to vector<8x1xf32>
    %102 = arith.divf %100, %101 : vector<8x1xf32>
    %103 = vector.broadcast %95 : vector<8x1xf32> to vector<8x32xf32>
    %104 = arith.subf %91, %103 : vector<8x32xf32>
    %cst_39 = arith.constant 9.99999974E-6 : f32
    %105 = vector.broadcast %cst_39 : f32 to vector<8x1xf32>
    %106 = arith.addf %102, %105 : vector<8x1xf32>
    %107 = math.rsqrt %106 : vector<8x1xf32>
    %108 = vector.broadcast %107 : vector<8x1xf32> to vector<8x32xf32>
    %109 = arith.mulf %104, %108 : vector<8x32xf32>
    %110 = vector.broadcast %3 : vector<1x32xf32> to vector<8x32xf32>
    %111 = arith.mulf %109, %110 : vector<8x32xf32>
    %112 = vector.broadcast %4 : vector<1x32xf32> to vector<8x32xf32>
    %113 = arith.addf %111, %112 : vector<8x32xf32>
    %114 = arith.addf %113, %17 : vector<8x32xf32>
    %c0_40 = arith.constant 0 : index
    %c0_41 = arith.constant 0 : index
    %c0_42 = arith.constant 0 : index
    %115 = vector.load %arg4[%c0_40, %c0_41, %c0_42] : memref<1x24x32xf32, #tpu.memory_space<vmem>>, vector<1x24x32xf32>
    %116 = vector.shape_cast %115 : vector<1x24x32xf32> to vector<24x32xf32>
    %117 = arith.truncf %116 : vector<24x32xf32> to vector<24x32xbf16>
    %c0_43 = arith.constant 0 : index
    %c0_44 = arith.constant 0 : index
    %118 = vector.load %arg10[%c0_43, %c0_44] : memref<32x32xbf16, #tpu.memory_space<vmem>>, vector<32x32xbf16>
    %cst_45 = arith.constant dense<0.000000e+00> : vector<24x32xf32>
    %119 = tpu.matmul %117, %118, %cst_45 {dimension_numbers = #tpu.dot_dimension_numbers<[1], [0], [0], [1], [0, 0, 1, 1], [], []>} : vector<24x32xbf16>, vector<32x32xbf16>, vector<24x32xf32> -> vector<24x32xf32>
    %120 = vector.broadcast %5 : vector<1x32xf32> to vector<24x32xf32>
    %121 = arith.addf %119, %120 : vector<24x32xf32>
    %c0_46 = arith.constant 0 : index
    %c0_47 = arith.constant 0 : index
    %c0_48 = arith.constant 0 : index
    %122 = vector.load %arg5[%c0_46, %c0_47, %c0_48] : memref<1x24x1xf32, #tpu.memory_space<vmem>>, vector<1x24x1xf32>
    %123 = vector.shape_cast %122 : vector<1x24x1xf32> to vector<24x1xf32>
    %cst_49 = arith.constant 1.000000e+00 : f32
    %124 = vector.broadcast %cst_49 : f32 to vector<24x1xf32>
    %125 = arith.subf %124, %123 : vector<24x1xf32>
    %126 = vector.broadcast %125 : vector<24x1xf32> to vector<24x32xf32>
    %127 = arith.mulf %121, %126 : vector<24x32xf32>
    %128 = arith.truncf %127 : vector<24x32xf32> to vector<24x32xbf16>
    %c0_50 = arith.constant 0 : index
    %c0_51 = arith.constant 0 : index
    %129 = vector.load %arg11[%c0_50, %c0_51] : memref<32x32xf32, #tpu.memory_space<vmem>>, vector<32x32xf32>
    %cst_52 = arith.constant dense<0.000000e+00> : vector<8x32xf32>
    %130 = tpu.matmul %114, %129, %cst_52 {dimension_numbers = #tpu.dot_dimension_numbers<[1], [0], [0], [1], [0, 0, 1, 1], [], []>} : vector<8x32xf32>, vector<32x32xf32>, vector<8x32xf32> -> vector<8x32xf32>
    %131 = vector.broadcast %6 : vector<1x32xf32> to vector<8x32xf32>
    %132 = arith.addf %130, %131 : vector<8x32xf32>
    %c0_53 = arith.constant 0 : index
    %c0_54 = arith.constant 0 : index
    %c0_55 = arith.constant 0 : index
    %133 = vector.load %arg6[%c0_53, %c0_54, %c0_55] : memref<1x8x2xf32, #tpu.memory_space<vmem>>, vector<1x8x2xf32>
    %134 = vector.shape_cast %133 : vector<1x8x2xf32> to vector<8x2xf32>
    %135 = tpu.iota {dimensions = array<i32: 1>} : vector<8x16xi32>
    %136 = arith.sitofp %135 : vector<8x16xi32> to vector<8x16xf32>
    %137 = vector.extract_strided_slice %134 {offsets = [0, 0], sizes = [8, 1], strides = [1, 1]} : vector<8x2xf32> to vector<8x1xf32>
    %cst_56 = arith.constant 1.600000e+01 : f32
    %138 = vector.broadcast %cst_56 : f32 to vector<8x1xf32>
    %139 = arith.mulf %137, %138 : vector<8x1xf32>
    %cst_57 = arith.constant 5.000000e-01 : f32
    %140 = vector.broadcast %cst_57 : f32 to vector<8x1xf32>
    %141 = arith.subf %139, %140 : vector<8x1xf32>
    %142 = tpu.iota {dimensions = array<i32: 1>} : vector<8x8xi32>
    %143 = arith.sitofp %142 : vector<8x8xi32> to vector<8x8xf32>
    %144 = vector.extract_strided_slice %134 {offsets = [0, 1], sizes = [8, 1], strides = [1, 1]} : vector<8x2xf32> to vector<8x1xf32>
    %cst_58 = arith.constant 8.000000e+00 : f32
    %145 = vector.broadcast %cst_58 : f32 to vector<8x1xf32>
    %146 = arith.mulf %144, %145 : vector<8x1xf32>
    %cst_59 = arith.constant 5.000000e-01 : f32
    %147 = vector.broadcast %cst_59 : f32 to vector<8x1xf32>
    %148 = arith.subf %146, %147 : vector<8x1xf32>
    %149 = vector.extract_strided_slice %132 {offsets = [0, 16], sizes = [8, 4], strides = [1, 1]} : vector<8x32xf32> to vector<8x4xf32>
    %cst_60 = arith.constant dense<0xFF800000> : vector<8xf32>
    %150 = vector.multi_reduction <maximumf>, %149, %cst_60 [1] : vector<8x4xf32> to vector<8xf32>
    %151 = vector.shape_cast %150 : vector<8xf32> to vector<8x1xf32>
    %152 = vector.broadcast %151 : vector<8x1xf32> to vector<8x4xf32>
    %153 = arith.subf %149, %152 : vector<8x4xf32>
    %154 = math.exp %153 : vector<8x4xf32>
    %cst_61 = arith.constant dense<0.000000e+00> : vector<8xf32>
    %155 = vector.multi_reduction <add>, %154, %cst_61 [1] : vector<8x4xf32> to vector<8xf32>
    %156 = vector.shape_cast %155 : vector<8xf32> to vector<8x1xf32>
    %157 = tpu.reciprocal %156 {approx = true} : vector<8x1xf32> -> vector<8x1xf32>
    %158 = vector.broadcast %157 : vector<8x1xf32> to vector<8x4xf32>
    %159 = arith.mulf %154, %158 : vector<8x4xf32>
    %cst_62 = arith.constant 0.000000e+00 : f32
    %160 = vector.broadcast %cst_62 : f32 to vector<8x8xf32>
    %cst_63 = arith.constant 0.000000e+00 : f32
    %161 = vector.broadcast %cst_63 : f32 to vector<8x16xf32>
    %162 = vector.extract_strided_slice %132 {offsets = [0, 0], sizes = [8, 1], strides = [1, 1]} : vector<8x32xf32> to vector<8x1xf32>
    %163 = arith.addf %141, %162 : vector<8x1xf32>
    %164 = vector.extract_strided_slice %159 {offsets = [0, 0], sizes = [8, 1], strides = [1, 1]} : vector<8x4xf32> to vector<8x1xf32>
    %165 = vector.broadcast %163 : vector<8x1xf32> to vector<8x16xf32>
    %166 = arith.subf %136, %165 : vector<8x16xf32>
    %167 = math.absf %166 : vector<8x16xf32>
    %cst_64 = arith.constant 1.000000e+00 : f32
    %168 = vector.broadcast %cst_64 : f32 to vector<8x16xf32>
    %169 = arith.subf %168, %167 : vector<8x16xf32>
    %cst_65 = arith.constant 0.000000e+00 : f32
    %170 = vector.broadcast %cst_65 : f32 to vector<8x16xf32>
    %171 = arith.maximumf %169, %170 : vector<8x16xf32>
    %172 = vector.broadcast %164 : vector<8x1xf32> to vector<8x16xf32>
    %173 = arith.mulf %172, %171 : vector<8x16xf32>
    %174 = arith.addf %161, %173 : vector<8x16xf32>
    %175 = vector.extract_strided_slice %132 {offsets = [0, 1], sizes = [8, 1], strides = [1, 1]} : vector<8x32xf32> to vector<8x1xf32>
    %176 = arith.addf %141, %175 : vector<8x1xf32>
    %177 = vector.extract_strided_slice %159 {offsets = [0, 1], sizes = [8, 1], strides = [1, 1]} : vector<8x4xf32> to vector<8x1xf32>
    %178 = vector.broadcast %176 : vector<8x1xf32> to vector<8x16xf32>
    %179 = arith.subf %136, %178 : vector<8x16xf32>
    %180 = math.absf %179 : vector<8x16xf32>
    %cst_66 = arith.constant 1.000000e+00 : f32
    %181 = vector.broadcast %cst_66 : f32 to vector<8x16xf32>
    %182 = arith.subf %181, %180 : vector<8x16xf32>
    %cst_67 = arith.constant 0.000000e+00 : f32
    %183 = vector.broadcast %cst_67 : f32 to vector<8x16xf32>
    %184 = arith.maximumf %182, %183 : vector<8x16xf32>
    %185 = vector.broadcast %177 : vector<8x1xf32> to vector<8x16xf32>
    %186 = arith.mulf %185, %184 : vector<8x16xf32>
    %187 = arith.addf %174, %186 : vector<8x16xf32>
    %188 = arith.truncf %187 : vector<8x16xf32> to vector<8x16xbf16>
    %189 = vector.extract_strided_slice %128 {offsets = [0, 0], sizes = [16, 8], strides = [1, 1]} : vector<24x32xbf16> to vector<16x8xbf16>
    %cst_68 = arith.constant dense<0.000000e+00> : vector<8x8xf32>
    %190 = tpu.matmul %188, %189, %cst_68 {dimension_numbers = #tpu.dot_dimension_numbers<[1], [0], [0], [1], [0, 0, 1, 1], [], []>} : vector<8x16xbf16>, vector<16x8xbf16>, vector<8x8xf32> -> vector<8x8xf32>
    %191 = arith.addf %160, %190 : vector<8x8xf32>
    %cst_69 = arith.constant 0.000000e+00 : f32
    %192 = vector.broadcast %cst_69 : f32 to vector<8x8xf32>
    %193 = vector.extract_strided_slice %132 {offsets = [0, 2], sizes = [8, 1], strides = [1, 1]} : vector<8x32xf32> to vector<8x1xf32>
    %194 = arith.addf %148, %193 : vector<8x1xf32>
    %195 = vector.extract_strided_slice %159 {offsets = [0, 2], sizes = [8, 1], strides = [1, 1]} : vector<8x4xf32> to vector<8x1xf32>
    %196 = vector.broadcast %194 : vector<8x1xf32> to vector<8x8xf32>
    %197 = arith.subf %143, %196 : vector<8x8xf32>
    %198 = math.absf %197 : vector<8x8xf32>
    %cst_70 = arith.constant 1.000000e+00 : f32
    %199 = vector.broadcast %cst_70 : f32 to vector<8x8xf32>
    %200 = arith.subf %199, %198 : vector<8x8xf32>
    %cst_71 = arith.constant 0.000000e+00 : f32
    %201 = vector.broadcast %cst_71 : f32 to vector<8x8xf32>
    %202 = arith.maximumf %200, %201 : vector<8x8xf32>
    %203 = vector.broadcast %195 : vector<8x1xf32> to vector<8x8xf32>
    %204 = arith.mulf %203, %202 : vector<8x8xf32>
    %205 = arith.addf %192, %204 : vector<8x8xf32>
    %206 = vector.extract_strided_slice %132 {offsets = [0, 3], sizes = [8, 1], strides = [1, 1]} : vector<8x32xf32> to vector<8x1xf32>
    %207 = arith.addf %148, %206 : vector<8x1xf32>
    %208 = vector.extract_strided_slice %159 {offsets = [0, 3], sizes = [8, 1], strides = [1, 1]} : vector<8x4xf32> to vector<8x1xf32>
    %209 = vector.broadcast %207 : vector<8x1xf32> to vector<8x8xf32>
    %210 = arith.subf %143, %209 : vector<8x8xf32>
    %211 = math.absf %210 : vector<8x8xf32>
    %cst_72 = arith.constant 1.000000e+00 : f32
    %212 = vector.broadcast %cst_72 : f32 to vector<8x8xf32>
    %213 = arith.subf %212, %211 : vector<8x8xf32>
    %cst_73 = arith.constant 0.000000e+00 : f32
    %214 = vector.broadcast %cst_73 : f32 to vector<8x8xf32>
    %215 = arith.maximumf %213, %214 : vector<8x8xf32>
    %216 = vector.broadcast %208 : vector<8x1xf32> to vector<8x8xf32>
    %217 = arith.mulf %216, %215 : vector<8x8xf32>
    %218 = arith.addf %205, %217 : vector<8x8xf32>
    %219 = arith.truncf %218 : vector<8x8xf32> to vector<8x8xbf16>
    %220 = vector.extract_strided_slice %128 {offsets = [16, 0], sizes = [8, 8], strides = [1, 1]} : vector<24x32xbf16> to vector<8x8xbf16>
    %cst_74 = arith.constant dense<0.000000e+00> : vector<8x8xf32>
    %221 = tpu.matmul %219, %220, %cst_74 {dimension_numbers = #tpu.dot_dimension_numbers<[1], [0], [0], [1], [0, 0, 1, 1], [], []>} : vector<8x8xbf16>, vector<8x8xbf16>, vector<8x8xf32> -> vector<8x8xf32>
    %222 = arith.addf %191, %221 : vector<8x8xf32>
    %223 = vector.extract_strided_slice %132 {offsets = [0, 20], sizes = [8, 4], strides = [1, 1]} : vector<8x32xf32> to vector<8x4xf32>
    %cst_75 = arith.constant dense<0xFF800000> : vector<8xf32>
    %224 = vector.multi_reduction <maximumf>, %223, %cst_75 [1] : vector<8x4xf32> to vector<8xf32>
    %225 = vector.shape_cast %224 : vector<8xf32> to vector<8x1xf32>
    %226 = vector.broadcast %225 : vector<8x1xf32> to vector<8x4xf32>
    %227 = arith.subf %223, %226 : vector<8x4xf32>
    %228 = math.exp %227 : vector<8x4xf32>
    %cst_76 = arith.constant dense<0.000000e+00> : vector<8xf32>
    %229 = vector.multi_reduction <add>, %228, %cst_76 [1] : vector<8x4xf32> to vector<8xf32>
    %230 = vector.shape_cast %229 : vector<8xf32> to vector<8x1xf32>
    %231 = tpu.reciprocal %230 {approx = true} : vector<8x1xf32> -> vector<8x1xf32>
    %232 = vector.broadcast %231 : vector<8x1xf32> to vector<8x4xf32>
    %233 = arith.mulf %228, %232 : vector<8x4xf32>
    %cst_77 = arith.constant 0.000000e+00 : f32
    %234 = vector.broadcast %cst_77 : f32 to vector<8x8xf32>
    %cst_78 = arith.constant 0.000000e+00 : f32
    %235 = vector.broadcast %cst_78 : f32 to vector<8x16xf32>
    %236 = vector.extract_strided_slice %132 {offsets = [0, 4], sizes = [8, 1], strides = [1, 1]} : vector<8x32xf32> to vector<8x1xf32>
    %237 = arith.addf %141, %236 : vector<8x1xf32>
    %238 = vector.extract_strided_slice %233 {offsets = [0, 0], sizes = [8, 1], strides = [1, 1]} : vector<8x4xf32> to vector<8x1xf32>
    %239 = vector.broadcast %237 : vector<8x1xf32> to vector<8x16xf32>
    %240 = arith.subf %136, %239 : vector<8x16xf32>
    %241 = math.absf %240 : vector<8x16xf32>
    %cst_79 = arith.constant 1.000000e+00 : f32
    %242 = vector.broadcast %cst_79 : f32 to vector<8x16xf32>
    %243 = arith.subf %242, %241 : vector<8x16xf32>
    %cst_80 = arith.constant 0.000000e+00 : f32
    %244 = vector.broadcast %cst_80 : f32 to vector<8x16xf32>
    %245 = arith.maximumf %243, %244 : vector<8x16xf32>
    %246 = vector.broadcast %238 : vector<8x1xf32> to vector<8x16xf32>
    %247 = arith.mulf %246, %245 : vector<8x16xf32>
    %248 = arith.addf %235, %247 : vector<8x16xf32>
    %249 = vector.extract_strided_slice %132 {offsets = [0, 5], sizes = [8, 1], strides = [1, 1]} : vector<8x32xf32> to vector<8x1xf32>
    %250 = arith.addf %141, %249 : vector<8x1xf32>
    %251 = vector.extract_strided_slice %233 {offsets = [0, 1], sizes = [8, 1], strides = [1, 1]} : vector<8x4xf32> to vector<8x1xf32>
    %252 = vector.broadcast %250 : vector<8x1xf32> to vector<8x16xf32>
    %253 = arith.subf %136, %252 : vector<8x16xf32>
    %254 = math.absf %253 : vector<8x16xf32>
    %cst_81 = arith.constant 1.000000e+00 : f32
    %255 = vector.broadcast %cst_81 : f32 to vector<8x16xf32>
    %256 = arith.subf %255, %254 : vector<8x16xf32>
    %cst_82 = arith.constant 0.000000e+00 : f32
    %257 = vector.broadcast %cst_82 : f32 to vector<8x16xf32>
    %258 = arith.maximumf %256, %257 : vector<8x16xf32>
    %259 = vector.broadcast %251 : vector<8x1xf32> to vector<8x16xf32>
    %260 = arith.mulf %259, %258 : vector<8x16xf32>
    %261 = arith.addf %248, %260 : vector<8x16xf32>
    %262 = arith.truncf %261 : vector<8x16xf32> to vector<8x16xbf16>
    %263 = vector.extract_strided_slice %128 {offsets = [0, 8], sizes = [16, 8], strides = [1, 1]} : vector<24x32xbf16> to vector<16x8xbf16>
    %cst_83 = arith.constant dense<0.000000e+00> : vector<8x8xf32>
    %264 = tpu.matmul %262, %263, %cst_83 {dimension_numbers = #tpu.dot_dimension_numbers<[1], [0], [0], [1], [0, 0, 1, 1], [], []>} : vector<8x16xbf16>, vector<16x8xbf16>, vector<8x8xf32> -> vector<8x8xf32>
    %265 = arith.addf %234, %264 : vector<8x8xf32>
    %cst_84 = arith.constant 0.000000e+00 : f32
    %266 = vector.broadcast %cst_84 : f32 to vector<8x8xf32>
    %267 = vector.extract_strided_slice %132 {offsets = [0, 6], sizes = [8, 1], strides = [1, 1]} : vector<8x32xf32> to vector<8x1xf32>
    %268 = arith.addf %148, %267 : vector<8x1xf32>
    %269 = vector.extract_strided_slice %233 {offsets = [0, 2], sizes = [8, 1], strides = [1, 1]} : vector<8x4xf32> to vector<8x1xf32>
    %270 = vector.broadcast %268 : vector<8x1xf32> to vector<8x8xf32>
    %271 = arith.subf %143, %270 : vector<8x8xf32>
    %272 = math.absf %271 : vector<8x8xf32>
    %cst_85 = arith.constant 1.000000e+00 : f32
    %273 = vector.broadcast %cst_85 : f32 to vector<8x8xf32>
    %274 = arith.subf %273, %272 : vector<8x8xf32>
    %cst_86 = arith.constant 0.000000e+00 : f32
    %275 = vector.broadcast %cst_86 : f32 to vector<8x8xf32>
    %276 = arith.maximumf %274, %275 : vector<8x8xf32>
    %277 = vector.broadcast %269 : vector<8x1xf32> to vector<8x8xf32>
    %278 = arith.mulf %277, %276 : vector<8x8xf32>
    %279 = arith.addf %266, %278 : vector<8x8xf32>
    %280 = vector.extract_strided_slice %132 {offsets = [0, 7], sizes = [8, 1], strides = [1, 1]} : vector<8x32xf32> to vector<8x1xf32>
    %281 = arith.addf %148, %280 : vector<8x1xf32>
    %282 = vector.extract_strided_slice %233 {offsets = [0, 3], sizes = [8, 1], strides = [1, 1]} : vector<8x4xf32> to vector<8x1xf32>
    %283 = vector.broadcast %281 : vector<8x1xf32> to vector<8x8xf32>
    %284 = arith.subf %143, %283 : vector<8x8xf32>
    %285 = math.absf %284 : vector<8x8xf32>
    %cst_87 = arith.constant 1.000000e+00 : f32
    %286 = vector.broadcast %cst_87 : f32 to vector<8x8xf32>
    %287 = arith.subf %286, %285 : vector<8x8xf32>
    %cst_88 = arith.constant 0.000000e+00 : f32
    %288 = vector.broadcast %cst_88 : f32 to vector<8x8xf32>
    %289 = arith.maximumf %287, %288 : vector<8x8xf32>
    %290 = vector.broadcast %282 : vector<8x1xf32> to vector<8x8xf32>
    %291 = arith.mulf %290, %289 : vector<8x8xf32>
    %292 = arith.addf %279, %291 : vector<8x8xf32>
    %293 = arith.truncf %292 : vector<8x8xf32> to vector<8x8xbf16>
    %294 = vector.extract_strided_slice %128 {offsets = [16, 8], sizes = [8, 8], strides = [1, 1]} : vector<24x32xbf16> to vector<8x8xbf16>
    %cst_89 = arith.constant dense<0.000000e+00> : vector<8x8xf32>
    %295 = tpu.matmul %293, %294, %cst_89 {dimension_numbers = #tpu.dot_dimension_numbers<[1], [0], [0], [1], [0, 0, 1, 1], [], []>} : vector<8x8xbf16>, vector<8x8xbf16>, vector<8x8xf32> -> vector<8x8xf32>
    %296 = arith.addf %265, %295 : vector<8x8xf32>
    %297 = vector.extract_strided_slice %132 {offsets = [0, 24], sizes = [8, 4], strides = [1, 1]} : vector<8x32xf32> to vector<8x4xf32>
    %cst_90 = arith.constant dense<0xFF800000> : vector<8xf32>
    %298 = vector.multi_reduction <maximumf>, %297, %cst_90 [1] : vector<8x4xf32> to vector<8xf32>
    %299 = vector.shape_cast %298 : vector<8xf32> to vector<8x1xf32>
    %300 = vector.broadcast %299 : vector<8x1xf32> to vector<8x4xf32>
    %301 = arith.subf %297, %300 : vector<8x4xf32>
    %302 = math.exp %301 : vector<8x4xf32>
    %cst_91 = arith.constant dense<0.000000e+00> : vector<8xf32>
    %303 = vector.multi_reduction <add>, %302, %cst_91 [1] : vector<8x4xf32> to vector<8xf32>
    %304 = vector.shape_cast %303 : vector<8xf32> to vector<8x1xf32>
    %305 = tpu.reciprocal %304 {approx = true} : vector<8x1xf32> -> vector<8x1xf32>
    %306 = vector.broadcast %305 : vector<8x1xf32> to vector<8x4xf32>
    %307 = arith.mulf %302, %306 : vector<8x4xf32>
    %cst_92 = arith.constant 0.000000e+00 : f32
    %308 = vector.broadcast %cst_92 : f32 to vector<8x8xf32>
    %cst_93 = arith.constant 0.000000e+00 : f32
    %309 = vector.broadcast %cst_93 : f32 to vector<8x16xf32>
    %310 = vector.extract_strided_slice %132 {offsets = [0, 8], sizes = [8, 1], strides = [1, 1]} : vector<8x32xf32> to vector<8x1xf32>
    %311 = arith.addf %141, %310 : vector<8x1xf32>
    %312 = vector.extract_strided_slice %307 {offsets = [0, 0], sizes = [8, 1], strides = [1, 1]} : vector<8x4xf32> to vector<8x1xf32>
    %313 = vector.broadcast %311 : vector<8x1xf32> to vector<8x16xf32>
    %314 = arith.subf %136, %313 : vector<8x16xf32>
    %315 = math.absf %314 : vector<8x16xf32>
    %cst_94 = arith.constant 1.000000e+00 : f32
    %316 = vector.broadcast %cst_94 : f32 to vector<8x16xf32>
    %317 = arith.subf %316, %315 : vector<8x16xf32>
    %cst_95 = arith.constant 0.000000e+00 : f32
    %318 = vector.broadcast %cst_95 : f32 to vector<8x16xf32>
    %319 = arith.maximumf %317, %318 : vector<8x16xf32>
    %320 = vector.broadcast %312 : vector<8x1xf32> to vector<8x16xf32>
    %321 = arith.mulf %320, %319 : vector<8x16xf32>
    %322 = arith.addf %309, %321 : vector<8x16xf32>
    %323 = vector.extract_strided_slice %132 {offsets = [0, 9], sizes = [8, 1], strides = [1, 1]} : vector<8x32xf32> to vector<8x1xf32>
    %324 = arith.addf %141, %323 : vector<8x1xf32>
    %325 = vector.extract_strided_slice %307 {offsets = [0, 1], sizes = [8, 1], strides = [1, 1]} : vector<8x4xf32> to vector<8x1xf32>
    %326 = vector.broadcast %324 : vector<8x1xf32> to vector<8x16xf32>
    %327 = arith.subf %136, %326 : vector<8x16xf32>
    %328 = math.absf %327 : vector<8x16xf32>
    %cst_96 = arith.constant 1.000000e+00 : f32
    %329 = vector.broadcast %cst_96 : f32 to vector<8x16xf32>
    %330 = arith.subf %329, %328 : vector<8x16xf32>
    %cst_97 = arith.constant 0.000000e+00 : f32
    %331 = vector.broadcast %cst_97 : f32 to vector<8x16xf32>
    %332 = arith.maximumf %330, %331 : vector<8x16xf32>
    %333 = vector.broadcast %325 : vector<8x1xf32> to vector<8x16xf32>
    %334 = arith.mulf %333, %332 : vector<8x16xf32>
    %335 = arith.addf %322, %334 : vector<8x16xf32>
    %336 = arith.truncf %335 : vector<8x16xf32> to vector<8x16xbf16>
    %337 = vector.extract_strided_slice %128 {offsets = [0, 16], sizes = [16, 8], strides = [1, 1]} : vector<24x32xbf16> to vector<16x8xbf16>
    %cst_98 = arith.constant dense<0.000000e+00> : vector<8x8xf32>
    %338 = tpu.matmul %336, %337, %cst_98 {dimension_numbers = #tpu.dot_dimension_numbers<[1], [0], [0], [1], [0, 0, 1, 1], [], []>} : vector<8x16xbf16>, vector<16x8xbf16>, vector<8x8xf32> -> vector<8x8xf32>
    %339 = arith.addf %308, %338 : vector<8x8xf32>
    %cst_99 = arith.constant 0.000000e+00 : f32
    %340 = vector.broadcast %cst_99 : f32 to vector<8x8xf32>
    %341 = vector.extract_strided_slice %132 {offsets = [0, 10], sizes = [8, 1], strides = [1, 1]} : vector<8x32xf32> to vector<8x1xf32>
    %342 = arith.addf %148, %341 : vector<8x1xf32>
    %343 = vector.extract_strided_slice %307 {offsets = [0, 2], sizes = [8, 1], strides = [1, 1]} : vector<8x4xf32> to vector<8x1xf32>
    %344 = vector.broadcast %342 : vector<8x1xf32> to vector<8x8xf32>
    %345 = arith.subf %143, %344 : vector<8x8xf32>
    %346 = math.absf %345 : vector<8x8xf32>
    %cst_100 = arith.constant 1.000000e+00 : f32
    %347 = vector.broadcast %cst_100 : f32 to vector<8x8xf32>
    %348 = arith.subf %347, %346 : vector<8x8xf32>
    %cst_101 = arith.constant 0.000000e+00 : f32
    %349 = vector.broadcast %cst_101 : f32 to vector<8x8xf32>
    %350 = arith.maximumf %348, %349 : vector<8x8xf32>
    %351 = vector.broadcast %343 : vector<8x1xf32> to vector<8x8xf32>
    %352 = arith.mulf %351, %350 : vector<8x8xf32>
    %353 = arith.addf %340, %352 : vector<8x8xf32>
    %354 = vector.extract_strided_slice %132 {offsets = [0, 11], sizes = [8, 1], strides = [1, 1]} : vector<8x32xf32> to vector<8x1xf32>
    %355 = arith.addf %148, %354 : vector<8x1xf32>
    %356 = vector.extract_strided_slice %307 {offsets = [0, 3], sizes = [8, 1], strides = [1, 1]} : vector<8x4xf32> to vector<8x1xf32>
    %357 = vector.broadcast %355 : vector<8x1xf32> to vector<8x8xf32>
    %358 = arith.subf %143, %357 : vector<8x8xf32>
    %359 = math.absf %358 : vector<8x8xf32>
    %cst_102 = arith.constant 1.000000e+00 : f32
    %360 = vector.broadcast %cst_102 : f32 to vector<8x8xf32>
    %361 = arith.subf %360, %359 : vector<8x8xf32>
    %cst_103 = arith.constant 0.000000e+00 : f32
    %362 = vector.broadcast %cst_103 : f32 to vector<8x8xf32>
    %363 = arith.maximumf %361, %362 : vector<8x8xf32>
    %364 = vector.broadcast %356 : vector<8x1xf32> to vector<8x8xf32>
    %365 = arith.mulf %364, %363 : vector<8x8xf32>
    %366 = arith.addf %353, %365 : vector<8x8xf32>
    %367 = arith.truncf %366 : vector<8x8xf32> to vector<8x8xbf16>
    %368 = vector.extract_strided_slice %128 {offsets = [16, 16], sizes = [8, 8], strides = [1, 1]} : vector<24x32xbf16> to vector<8x8xbf16>
    %cst_104 = arith.constant dense<0.000000e+00> : vector<8x8xf32>
    %369 = tpu.matmul %367, %368, %cst_104 {dimension_numbers = #tpu.dot_dimension_numbers<[1], [0], [0], [1], [0, 0, 1, 1], [], []>} : vector<8x8xbf16>, vector<8x8xbf16>, vector<8x8xf32> -> vector<8x8xf32>
    %370 = arith.addf %339, %369 : vector<8x8xf32>
    %371 = vector.extract_strided_slice %132 {offsets = [0, 28], sizes = [8, 4], strides = [1, 1]} : vector<8x32xf32> to vector<8x4xf32>
    %cst_105 = arith.constant dense<0xFF800000> : vector<8xf32>
    %372 = vector.multi_reduction <maximumf>, %371, %cst_105 [1] : vector<8x4xf32> to vector<8xf32>
    %373 = vector.shape_cast %372 : vector<8xf32> to vector<8x1xf32>
    %374 = vector.broadcast %373 : vector<8x1xf32> to vector<8x4xf32>
    %375 = arith.subf %371, %374 : vector<8x4xf32>
    %376 = math.exp %375 : vector<8x4xf32>
    %cst_106 = arith.constant dense<0.000000e+00> : vector<8xf32>
    %377 = vector.multi_reduction <add>, %376, %cst_106 [1] : vector<8x4xf32> to vector<8xf32>
    %378 = vector.shape_cast %377 : vector<8xf32> to vector<8x1xf32>
    %379 = tpu.reciprocal %378 {approx = true} : vector<8x1xf32> -> vector<8x1xf32>
    %380 = vector.broadcast %379 : vector<8x1xf32> to vector<8x4xf32>
    %381 = arith.mulf %376, %380 : vector<8x4xf32>
    %cst_107 = arith.constant 0.000000e+00 : f32
    %382 = vector.broadcast %cst_107 : f32 to vector<8x8xf32>
    %cst_108 = arith.constant 0.000000e+00 : f32
    %383 = vector.broadcast %cst_108 : f32 to vector<8x16xf32>
    %384 = vector.extract_strided_slice %132 {offsets = [0, 12], sizes = [8, 1], strides = [1, 1]} : vector<8x32xf32> to vector<8x1xf32>
    %385 = arith.addf %141, %384 : vector<8x1xf32>
    %386 = vector.extract_strided_slice %381 {offsets = [0, 0], sizes = [8, 1], strides = [1, 1]} : vector<8x4xf32> to vector<8x1xf32>
    %387 = vector.broadcast %385 : vector<8x1xf32> to vector<8x16xf32>
    %388 = arith.subf %136, %387 : vector<8x16xf32>
    %389 = math.absf %388 : vector<8x16xf32>
    %cst_109 = arith.constant 1.000000e+00 : f32
    %390 = vector.broadcast %cst_109 : f32 to vector<8x16xf32>
    %391 = arith.subf %390, %389 : vector<8x16xf32>
    %cst_110 = arith.constant 0.000000e+00 : f32
    %392 = vector.broadcast %cst_110 : f32 to vector<8x16xf32>
    %393 = arith.maximumf %391, %392 : vector<8x16xf32>
    %394 = vector.broadcast %386 : vector<8x1xf32> to vector<8x16xf32>
    %395 = arith.mulf %394, %393 : vector<8x16xf32>
    %396 = arith.addf %383, %395 : vector<8x16xf32>
    %397 = vector.extract_strided_slice %132 {offsets = [0, 13], sizes = [8, 1], strides = [1, 1]} : vector<8x32xf32> to vector<8x1xf32>
    %398 = arith.addf %141, %397 : vector<8x1xf32>
    %399 = vector.extract_strided_slice %381 {offsets = [0, 1], sizes = [8, 1], strides = [1, 1]} : vector<8x4xf32> to vector<8x1xf32>
    %400 = vector.broadcast %398 : vector<8x1xf32> to vector<8x16xf32>
    %401 = arith.subf %136, %400 : vector<8x16xf32>
    %402 = math.absf %401 : vector<8x16xf32>
    %cst_111 = arith.constant 1.000000e+00 : f32
    %403 = vector.broadcast %cst_111 : f32 to vector<8x16xf32>
    %404 = arith.subf %403, %402 : vector<8x16xf32>
    %cst_112 = arith.constant 0.000000e+00 : f32
    %405 = vector.broadcast %cst_112 : f32 to vector<8x16xf32>
    %406 = arith.maximumf %404, %405 : vector<8x16xf32>
    %407 = vector.broadcast %399 : vector<8x1xf32> to vector<8x16xf32>
    %408 = arith.mulf %407, %406 : vector<8x16xf32>
    %409 = arith.addf %396, %408 : vector<8x16xf32>
    %410 = arith.truncf %409 : vector<8x16xf32> to vector<8x16xbf16>
    %411 = vector.extract_strided_slice %128 {offsets = [0, 24], sizes = [16, 8], strides = [1, 1]} : vector<24x32xbf16> to vector<16x8xbf16>
    %cst_113 = arith.constant dense<0.000000e+00> : vector<8x8xf32>
    %412 = tpu.matmul %410, %411, %cst_113 {dimension_numbers = #tpu.dot_dimension_numbers<[1], [0], [0], [1], [0, 0, 1, 1], [], []>} : vector<8x16xbf16>, vector<16x8xbf16>, vector<8x8xf32> -> vector<8x8xf32>
    %413 = arith.addf %382, %412 : vector<8x8xf32>
    %cst_114 = arith.constant 0.000000e+00 : f32
    %414 = vector.broadcast %cst_114 : f32 to vector<8x8xf32>
    %415 = vector.extract_strided_slice %132 {offsets = [0, 14], sizes = [8, 1], strides = [1, 1]} : vector<8x32xf32> to vector<8x1xf32>
    %416 = arith.addf %148, %415 : vector<8x1xf32>
    %417 = vector.extract_strided_slice %381 {offsets = [0, 2], sizes = [8, 1], strides = [1, 1]} : vector<8x4xf32> to vector<8x1xf32>
    %418 = vector.broadcast %416 : vector<8x1xf32> to vector<8x8xf32>
    %419 = arith.subf %143, %418 : vector<8x8xf32>
    %420 = math.absf %419 : vector<8x8xf32>
    %cst_115 = arith.constant 1.000000e+00 : f32
    %421 = vector.broadcast %cst_115 : f32 to vector<8x8xf32>
    %422 = arith.subf %421, %420 : vector<8x8xf32>
    %cst_116 = arith.constant 0.000000e+00 : f32
    %423 = vector.broadcast %cst_116 : f32 to vector<8x8xf32>
    %424 = arith.maximumf %422, %423 : vector<8x8xf32>
    %425 = vector.broadcast %417 : vector<8x1xf32> to vector<8x8xf32>
    %426 = arith.mulf %425, %424 : vector<8x8xf32>
    %427 = arith.addf %414, %426 : vector<8x8xf32>
    %428 = vector.extract_strided_slice %132 {offsets = [0, 15], sizes = [8, 1], strides = [1, 1]} : vector<8x32xf32> to vector<8x1xf32>
    %429 = arith.addf %148, %428 : vector<8x1xf32>
    %430 = vector.extract_strided_slice %381 {offsets = [0, 3], sizes = [8, 1], strides = [1, 1]} : vector<8x4xf32> to vector<8x1xf32>
    %431 = vector.broadcast %429 : vector<8x1xf32> to vector<8x8xf32>
    %432 = arith.subf %143, %431 : vector<8x8xf32>
    %433 = math.absf %432 : vector<8x8xf32>
    %cst_117 = arith.constant 1.000000e+00 : f32
    %434 = vector.broadcast %cst_117 : f32 to vector<8x8xf32>
    %435 = arith.subf %434, %433 : vector<8x8xf32>
    %cst_118 = arith.constant 0.000000e+00 : f32
    %436 = vector.broadcast %cst_118 : f32 to vector<8x8xf32>
    %437 = arith.maximumf %435, %436 : vector<8x8xf32>
    %438 = vector.broadcast %430 : vector<8x1xf32> to vector<8x8xf32>
    %439 = arith.mulf %438, %437 : vector<8x8xf32>
    %440 = arith.addf %427, %439 : vector<8x8xf32>
    %441 = arith.truncf %440 : vector<8x8xf32> to vector<8x8xbf16>
    %442 = vector.extract_strided_slice %128 {offsets = [16, 24], sizes = [8, 8], strides = [1, 1]} : vector<24x32xbf16> to vector<8x8xbf16>
    %cst_119 = arith.constant dense<0.000000e+00> : vector<8x8xf32>
    %443 = tpu.matmul %441, %442, %cst_119 {dimension_numbers = #tpu.dot_dimension_numbers<[1], [0], [0], [1], [0, 0, 1, 1], [], []>} : vector<8x8xbf16>, vector<8x8xbf16>, vector<8x8xf32> -> vector<8x8xf32>
    %444 = arith.addf %413, %443 : vector<8x8xf32>
    %445 = tpu.concatenate %222, %296, %370, %444 in 1 : vector<8x8xf32>, vector<8x8xf32>, vector<8x8xf32>, vector<8x8xf32> -> vector<8x32xf32>
    %446 = arith.truncf %445 : vector<8x32xf32> to vector<8x32xbf16>
    %c0_120 = arith.constant 0 : index
    %c0_121 = arith.constant 0 : index
    %447 = vector.load %arg12[%c0_120, %c0_121] : memref<32x32xbf16, #tpu.memory_space<vmem>>, vector<32x32xbf16>
    %cst_122 = arith.constant dense<0.000000e+00> : vector<8x32xf32>
    %448 = tpu.matmul %446, %447, %cst_122 {dimension_numbers = #tpu.dot_dimension_numbers<[1], [0], [0], [1], [0, 0, 1, 1], [], []>} : vector<8x32xbf16>, vector<32x32xbf16>, vector<8x32xf32> -> vector<8x32xf32>
    %449 = vector.broadcast %7 : vector<1x32xf32> to vector<8x32xf32>
    %450 = arith.addf %448, %449 : vector<8x32xf32>
    %451 = arith.addf %113, %450 : vector<8x32xf32>
    %cst_123 = arith.constant dense<0.000000e+00> : vector<8xf32>
    %452 = vector.multi_reduction <add>, %451, %cst_123 [1] : vector<8x32xf32> to vector<8xf32>
    %453 = vector.shape_cast %452 : vector<8xf32> to vector<8x1xf32>
    %cst_124 = arith.constant 3.200000e+01 : f32
    %454 = vector.broadcast %cst_124 : f32 to vector<8x1xf32>
    %455 = arith.divf %453, %454 : vector<8x1xf32>
    %456 = vector.broadcast %455 : vector<8x1xf32> to vector<8x32xf32>
    %457 = arith.subf %451, %456 : vector<8x32xf32>
    %458 = arith.mulf %457, %457 : vector<8x32xf32>
    %cst_125 = arith.constant dense<0.000000e+00> : vector<8xf32>
    %459 = vector.multi_reduction <add>, %458, %cst_125 [1] : vector<8x32xf32> to vector<8xf32>
    %460 = vector.shape_cast %459 : vector<8xf32> to vector<8x1xf32>
    %cst_126 = arith.constant 3.200000e+01 : f32
    %461 = vector.broadcast %cst_126 : f32 to vector<8x1xf32>
    %462 = arith.divf %460, %461 : vector<8x1xf32>
    %463 = vector.broadcast %455 : vector<8x1xf32> to vector<8x32xf32>
    %464 = arith.subf %451, %463 : vector<8x32xf32>
    %cst_127 = arith.constant 9.99999974E-6 : f32
    %465 = vector.broadcast %cst_127 : f32 to vector<8x1xf32>
    %466 = arith.addf %462, %465 : vector<8x1xf32>
    %467 = math.rsqrt %466 : vector<8x1xf32>
    %468 = vector.broadcast %467 : vector<8x1xf32> to vector<8x32xf32>
    %469 = arith.mulf %464, %468 : vector<8x32xf32>
    %470 = vector.broadcast %8 : vector<1x32xf32> to vector<8x32xf32>
    %471 = arith.mulf %469, %470 : vector<8x32xf32>
    %472 = vector.broadcast %9 : vector<1x32xf32> to vector<8x32xf32>
    %473 = arith.addf %471, %472 : vector<8x32xf32>
    %474 = arith.truncf %473 : vector<8x32xf32> to vector<8x32xbf16>
    %c0_128 = arith.constant 0 : index
    %c0_129 = arith.constant 0 : index
    %475 = vector.load %arg13[%c0_128, %c0_129] : memref<32x64xbf16, #tpu.memory_space<vmem>>, vector<32x64xbf16>
    %cst_130 = arith.constant dense<0.000000e+00> : vector<8x64xf32>
    %476 = tpu.matmul %474, %475, %cst_130 {dimension_numbers = #tpu.dot_dimension_numbers<[1], [0], [0], [1], [0, 0, 1, 1], [], []>} : vector<8x32xbf16>, vector<32x64xbf16>, vector<8x64xf32> -> vector<8x64xf32>
    %477 = vector.broadcast %10 : vector<1x64xf32> to vector<8x64xf32>
    %478 = arith.addf %476, %477 : vector<8x64xf32>
    %cst_131 = arith.constant 0.000000e+00 : f32
    %479 = vector.broadcast %cst_131 : f32 to vector<8x64xf32>
    %480 = arith.maximumf %478, %479 : vector<8x64xf32>
    %481 = arith.truncf %480 : vector<8x64xf32> to vector<8x64xbf16>
    %c0_132 = arith.constant 0 : index
    %c0_133 = arith.constant 0 : index
    %482 = vector.load %arg14[%c0_132, %c0_133] : memref<64x32xbf16, #tpu.memory_space<vmem>>, vector<64x32xbf16>
    %cst_134 = arith.constant dense<0.000000e+00> : vector<8x32xf32>
    %483 = tpu.matmul %481, %482, %cst_134 {dimension_numbers = #tpu.dot_dimension_numbers<[1], [0], [0], [1], [0, 0, 1, 1], [], []>} : vector<8x64xbf16>, vector<64x32xbf16>, vector<8x32xf32> -> vector<8x32xf32>
    %484 = vector.broadcast %11 : vector<1x32xf32> to vector<8x32xf32>
    %485 = arith.addf %483, %484 : vector<8x32xf32>
    %486 = arith.addf %473, %485 : vector<8x32xf32>
    %cst_135 = arith.constant dense<0.000000e+00> : vector<8xf32>
    %487 = vector.multi_reduction <add>, %486, %cst_135 [1] : vector<8x32xf32> to vector<8xf32>
    %488 = vector.shape_cast %487 : vector<8xf32> to vector<8x1xf32>
    %cst_136 = arith.constant 3.200000e+01 : f32
    %489 = vector.broadcast %cst_136 : f32 to vector<8x1xf32>
    %490 = arith.divf %488, %489 : vector<8x1xf32>
    %491 = vector.broadcast %490 : vector<8x1xf32> to vector<8x32xf32>
    %492 = arith.subf %486, %491 : vector<8x32xf32>
    %493 = arith.mulf %492, %492 : vector<8x32xf32>
    %cst_137 = arith.constant dense<0.000000e+00> : vector<8xf32>
    %494 = vector.multi_reduction <add>, %493, %cst_137 [1] : vector<8x32xf32> to vector<8xf32>
    %495 = vector.shape_cast %494 : vector<8xf32> to vector<8x1xf32>
    %cst_138 = arith.constant 3.200000e+01 : f32
    %496 = vector.broadcast %cst_138 : f32 to vector<8x1xf32>
    %497 = arith.divf %495, %496 : vector<8x1xf32>
    %498 = vector.broadcast %490 : vector<8x1xf32> to vector<8x32xf32>
    %499 = arith.subf %486, %498 : vector<8x32xf32>
    %cst_139 = arith.constant 9.99999974E-6 : f32
    %500 = vector.broadcast %cst_139 : f32 to vector<8x1xf32>
    %501 = arith.addf %497, %500 : vector<8x1xf32>
    %502 = math.rsqrt %501 : vector<8x1xf32>
    %503 = vector.broadcast %502 : vector<8x1xf32> to vector<8x32xf32>
    %504 = arith.mulf %499, %503 : vector<8x32xf32>
    %505 = vector.broadcast %12 : vector<1x32xf32> to vector<8x32xf32>
    %506 = arith.mulf %504, %505 : vector<8x32xf32>
    %507 = vector.broadcast %13 : vector<1x32xf32> to vector<8x32xf32>
    %508 = arith.addf %506, %507 : vector<8x32xf32>
    %c0_140 = arith.constant 0 : index
    %c0_141 = arith.constant 0 : index
    %c0_142 = arith.constant 0 : index
    %509 = vector.load %arg16[%c0_140, %c0_141, %c0_142] : memref<1x8x32xf32, #tpu.memory_space<vmem>>, vector<1x8x32xf32>
    %510 = vector.shape_cast %509 : vector<1x8x32xf32> to vector<8x32xf32>
    %511 = vector.shape_cast %508 : vector<8x32xf32> to vector<1x8x32xf32>
    tpu.vector_store %arg16[%c0_140, %c0_141, %c0_142], %511 {strides = array<i32>} : memref<1x8x32xf32, #tpu.memory_space<vmem>>, vector<1x8x32xf32>,
    return
  }
  func.func @transform_0(%arg0: i32) -> (i32, i32, i32) {
    %c0_i32 = arith.constant 0 : i32
    %c0_i32_0 = arith.constant 0 : i32
    %c0_i32_1 = arith.constant 0 : i32
    return %arg0, %c0_i32, %c0_i32_0 : i32, i32, i32
  }
  func.func @transform_1(%arg0: i32) -> (i32, i32, i32) {
    %c0_i32 = arith.constant 0 : i32
    %c0_i32_0 = arith.constant 0 : i32
    %c0_i32_1 = arith.constant 0 : i32
    return %arg0, %c0_i32, %c0_i32_0 : i32, i32, i32
  }
  func.func @transform_2(%arg0: i32) -> (i32, i32, i32) {
    %c0_i32 = arith.constant 0 : i32
    %c0_i32_0 = arith.constant 0 : i32
    %c0_i32_1 = arith.constant 0 : i32
    return %arg0, %c0_i32, %c0_i32_0 : i32, i32, i32
  }
  func.func @transform_3(%arg0: i32) -> (i32, i32, i32) {
    %c0_i32 = arith.constant 0 : i32
    %c0_i32_0 = arith.constant 0 : i32
    %c0_i32_1 = arith.constant 0 : i32
    return %arg0, %c0_i32, %c0_i32_0 : i32, i32, i32
  }
  func.func @transform_4(%arg0: i32) -> (i32, i32, i32) {
    %c0_i32 = arith.constant 0 : i32
    %c0_i32_0 = arith.constant 0 : i32
    %c0_i32_1 = arith.constant 0 : i32
    return %arg0, %c0_i32, %c0_i32_0 : i32, i32, i32
  }
  func.func @transform_5(%arg0: i32) -> (i32, i32, i32) {
    %c0_i32 = arith.constant 0 : i32
    %c0_i32_0 = arith.constant 0 : i32
    %c0_i32_1 = arith.constant 0 : i32
    return %arg0, %c0_i32, %c0_i32_0 : i32, i32, i32
  }
  func.func @transform_6(%arg0: i32) -> (i32, i32) {
    %c0_i32 = arith.constant 0 : i32
    %c0_i32_0 = arith.constant 0 : i32
    %c0_i32_1 = arith.constant 0 : i32
    return %c0_i32, %c0_i32_0 : i32, i32
  }
  func.func @transform_7(%arg0: i32) -> (i32, i32) {
    %c0_i32 = arith.constant 0 : i32
    %c0_i32_0 = arith.constant 0 : i32
    %c0_i32_1 = arith.constant 0 : i32
    return %c0_i32, %c0_i32_0 : i32, i32
  }
  func.func @transform_8(%arg0: i32) -> (i32, i32) {
    %c0_i32 = arith.constant 0 : i32
    %c0_i32_0 = arith.constant 0 : i32
    %c0_i32_1 = arith.constant 0 : i32
    return %c0_i32, %c0_i32_0 : i32, i32
  }
  func.func @transform_9(%arg0: i32) -> (i32, i32) {
    %c0_i32 = arith.constant 0 : i32
    %c0_i32_0 = arith.constant 0 : i32
    %c0_i32_1 = arith.constant 0 : i32
    return %c0_i32, %c0_i32_0 : i32, i32
  }
  func.func @transform_10(%arg0: i32) -> (i32, i32) {
    %c0_i32 = arith.constant 0 : i32
    %c0_i32_0 = arith.constant 0 : i32
    %c0_i32_1 = arith.constant 0 : i32
    return %c0_i32, %c0_i32_0 : i32, i32
  }
  func.func @transform_11(%arg0: i32) -> (i32, i32) {
    %c0_i32 = arith.constant 0 : i32
    %c0_i32_0 = arith.constant 0 : i32
    %c0_i32_1 = arith.constant 0 : i32
    return %c0_i32, %c0_i32_0 : i32, i32
  }
  func.func @transform_12(%arg0: i32) -> (i32, i32) {
    %c0_i32 = arith.constant 0 : i32
    %c0_i32_0 = arith.constant 0 : i32
    %c0_i32_1 = arith.constant 0 : i32
    return %c0_i32, %c0_i32_0 : i32, i32
  }
  func.func @transform_13(%arg0: i32) -> (i32, i32) {
    %c0_i32 = arith.constant 0 : i32
    %c0_i32_0 = arith.constant 0 : i32
    %c0_i32_1 = arith.constant 0 : i32
    return %c0_i32, %c0_i32_0 : i32, i32
  }
  func.func @transform_14(%arg0: i32) -> (i32, i32) {
    %c0_i32 = arith.constant 0 : i32
    %c0_i32_0 = arith.constant 0 : i32
    %c0_i32_1 = arith.constant 0 : i32
    return %c0_i32, %c0_i32_0 : i32, i32
  }
  func.func @transform_15(%arg0: i32) -> (i32, i32, i32) {
    %c0_i32 = arith.constant 0 : i32
    %c0_i32_0 = arith.constant 0 : i32
    %c0_i32_1 = arith.constant 0 : i32
    return %arg0, %c0_i32, %c0_i32_0 : i32, i32, i32
  }
}

</mosaic_0001>

<llo_original>
// kernel: forward.1
$region0: #{forward.1}
  #allocation0 [shape = 'u32[]', space=smem, size = 0x4, offset = 0x4, fixed_abs, tag = 'smem constant byte address 0x4 - core index']
  #allocation1 [shape = 'u32[144,128]{1,0:T(1,128)}', space=vmem, size = 0x12000, scoped, tag = 'internal scratch']
  %s0 = inlined_call_operand.hbm [shape: f32[2,8,32], index: 0, kind: input, shape index: {}]
  %s1 = inlined_call_operand.hbm [shape: f32[2,8,32], index: 1, kind: input, shape index: {}]
  %s2 = inlined_call_operand.vmem [shape: f32[2,1,8], index: 2, kind: input, shape index: {}]
  %s3 = inlined_call_operand.vmem [shape: f32[2,24,32], index: 3, kind: input, shape index: {}]
  %s4 = inlined_call_operand.vmem [shape: f32[2,24,1], index: 4, kind: input, shape index: {}]
  %s5 = inlined_call_operand.vmem [shape: f32[2,8,2], index: 5, kind: input, shape index: {}]
  %s6 = inlined_call_operand.hbm [shape: bf16[32,64], index: 6, kind: input, shape index: {}]
  %s7 = inlined_call_operand.hbm [shape: bf16[32,32], index: 7, kind: input, shape index: {}]
  %s8 = inlined_call_operand.hbm [shape: bf16[32,32], index: 8, kind: input, shape index: {}]
  %s9 = inlined_call_operand.hbm [shape: bf16[32,32], index: 9, kind: input, shape index: {}]
  %s10 = inlined_call_operand.hbm [shape: f32[32,32], index: 10, kind: input, shape index: {}]
  %s11 = inlined_call_operand.hbm [shape: bf16[32,32], index: 11, kind: input, shape index: {}]
  %s12 = inlined_call_operand.hbm [shape: bf16[32,64], index: 12, kind: input, shape index: {}]
  %s13 = inlined_call_operand.vmem [shape: bf16[64,32], index: 13, kind: input, shape index: {}]
  %s14 = inlined_call_operand.vmem [shape: f32[14,64], index: 14, kind: input, shape index: {}]
  %s15 = inlined_call_operand.hbm [shape: f32[2,8,32], index: 15, kind: output, shape index: {}]
  %s16 = sld [smem:[#allocation0]]
  $region129: #{forward.1} parent=0
    _
  %s18 = ssub.s32 1, %s16
  %s19 = scalar_select 0, %s18, %s16
  $region1: #{forward.1} parent=0
    #allocation2 [shape = 'u8[8192]{0}', space=vmem, size = 0x2000, scoped, tag = 'input window, operand 0']
    #allocation3 [shape = 's32[2]{0}', space=sflag, size = 0x8, scoped, tag = 'scoped memory for forward.1']
    #allocation4 [shape = 's32[2]{0}', space=sflag, size = 0x8, scoped, tag = 'scoped memory for forward.1']
    #allocation5 [shape = 'u8[8192]{0}', space=vmem, size = 0x2000, scoped, tag = 'input window, operand 1']
    #allocation6 [shape = 's32[2]{0}', space=sflag, size = 0x8, scoped, tag = 'scoped memory for forward.1']
    #allocation7 [shape = 'u8[8192]{0}', space=vmem, size = 0x2000, scoped, tag = 'input window, operand 6, single buffered']
    #allocation8 [shape = 'u8[8192]{0}', space=vmem, size = 0x2000, scoped, tag = 'input window, operand 7, single buffered']
    #allocation9 [shape = 's32[1]{0}', space=sflag, size = 0x4, scoped, tag = 'scoped memory for forward.1']
    #allocation10 [shape = 'u8[8192]{0}', space=vmem, size = 0x2000, scoped, tag = 'input window, operand 8, single buffered']
    #allocation11 [shape = 'u8[8192]{0}', space=vmem, size = 0x2000, scoped, tag = 'input window, operand 9, single buffered']
    #allocation12 [shape = 's32[1]{0}', space=sflag, size = 0x4, scoped, tag = 'scoped memory for forward.1']
    #allocation13 [shape = 'u8[16384]{0}', space=vmem, size = 0x4000, scoped, tag = 'input window, operand 10, single buffered']
    #allocation14 [shape = 'u8[8192]{0}', space=vmem, size = 0x2000, scoped, tag = 'input window, operand 11, single buffered']
    #allocation15 [shape = 's32[1]{0}', space=sflag, size = 0x4, scoped, tag = 'scoped memory for forward.1']
    #allocation16 [shape = 'u8[8192]{0}', space=vmem, size = 0x2000, scoped, tag = 'input window, operand 12, single buffered']
    #allocation17 [shape = 'u8[8192]{0}', space=vmem, size = 0x2000, scoped, tag = 'output window, operand 0']
    %20 = vsyncpa [#allocation3], 0
    %s21 = scalar_lea.sflag [#allocation3], 1
    %22 = vsyncpa %s21, 0
    %23 = vsyncpa [#allocation6], 0
    %s24 = scalar_lea.sflag [#allocation6], 1
    %25 = vsyncpa %s24, 0
    %26 = vsyncpa [#allocation9], 0
    %27 = vsyncpa [#allocation12], 0
    %28 = vsyncpa [#allocation15], 0
    %29 = vsyncpa [#allocation4], 0
    %s30 = scalar_lea.sflag [#allocation4], 1
    %31 = vsyncpa %s30, 0
    loop: start=0, step=1, limit=4
    $region2: #{forward.1} parent=1 // loop_pre_header
      _
    $region3: #{forward.1} parent=1 // loop_header
      %s33 = sphi 0, %s37
      %p34 = scmp.ge.s32.totalorder %s33, 4
      %s43 = sphi 0, %s45
      %s46 = sphi 0, %s43
      %s47 = sphi 0, %s46
      %s63 = sphi 0, %s47
      %s69 = sphi 0, %s71
      %s72 = sphi 0, %s69
      %s73 = sphi 0, %s72
      %s89 = sphi 0, %s73
      %s95 = sphi 0, %s97
      %s98 = sphi 0, %s95
      %s99 = sphi 0, %s98
      %s115 = sphi 0, %s99
      %s121 = sphi 0, %s123
      %s124 = sphi 0, %s121
      %s125 = sphi 0, %s124
      %s141 = sphi 0, %s125
      %s147 = sphi 0, %s149
      %s150 = sphi 0, %s147
      %s151 = sphi 0, %s150
      %s167 = sphi 0, %s151
      %s173 = sphi 0, %s175
      %s176 = sphi 0, %s173
      %s177 = sphi 0, %s176
      %s193 = sphi 0, %s177
      %s197 = sphi 0, %s197
      %s199 = sphi 0, %s197
      %s200 = sphi 0, %s199
      %s214 = sphi 0, %s200
      %s218 = sphi 0, %s218
      %s220 = sphi 0, %s218
      %s221 = sphi 0, %s220
      %s235 = sphi 0, %s221
      %s239 = sphi 0, %s239
      %s241 = sphi 0, %s239
      %s242 = sphi 0, %s241
      %s256 = sphi 0, %s242
      %s260 = sphi 0, %s260
      %s262 = sphi 0, %s260
      %s263 = sphi 0, %s262
      %s277 = sphi 0, %s263
      %s281 = sphi 0, %s281
      %s283 = sphi 0, %s281
      %s284 = sphi 0, %s283
      %s298 = sphi 0, %s284
      %s302 = sphi 0, %s302
      %s304 = sphi 0, %s302
      %s305 = sphi 0, %s304
      %s319 = sphi 0, %s305
      %s323 = sphi 0, %s323
      %s325 = sphi 0, %s323
      %s326 = sphi 0, %s325
      %s340 = sphi 0, %s326
      %s344 = sphi 0, %s344
      %s346 = sphi 0, %s344
      %s347 = sphi 0, %s346
      %s361 = sphi 0, %s347
      %s365 = sphi 0, %s365
      %s367 = sphi 0, %s365
      %s368 = sphi 0, %s367
      %s382 = sphi 0, %s368
      %s388 = sphi 0, %s390
      %s391 = sphi 0, %s388
      %s392 = sphi 0, %s391
      %s408 = sphi 0, %s392
    $region4: #{forward.1} parent=1 // loop_header_branch
      %36 = sbr.rel (%p34) target = $region8
    $region5: #{forward.1} parent=1 // loop_body
      %s38 = ssub.s32 %s33, 1
      %s39 = ssub.s32 %s33, 2
      %s40 = sadd.s32 %s33, 1
      %s41 = ssub.s32 %s33, %s40
      %p42 = scmp.eq.s32.totalorder %s41, 0
      %s44 = sadd.s32 %s43, 1
      %s45 = scalar_select %p42, %s43, %s44
      %p48 = pneg %p42
      %p49 = scmp.eq.s32.totalorder %s33, 1
      %p50 = por %p48, %p49
      %p51 = scmp.ne.s32.totalorder %s43, %s46
      %p52 = scmp.eq.s32.totalorder %s33, 0
      %p53 = por %p51, %p52
      %p54 = scmp.ne.s32.totalorder %s43, %s46
      %p55 = scmp.eq.s32.totalorder %s38, 1
      %p56 = por %p54, %p55
      %p57 = scmp.ne.s32.totalorder %s46, %s47
      %p58 = scmp.eq.s32.totalorder %s38, 0
      %p59 = por %p57, %p58
      %p60 = scmp.ne.s32.totalorder %s46, %s47
      %p61 = scmp.eq.s32.totalorder %s39, 1
      %p62 = por %p60, %p61
      %p64 = scmp.ne.s32.totalorder %s47, %s63
      %p65 = scmp.eq.s32.totalorder %s39, 0
      %p66 = por %p64, %p65
      %s67 = ssub.s32 %s33, %s40
      %p68 = scmp.eq.s32.totalorder %s67, 0
      %s70 = sadd.s32 %s69, 1
      %s71 = scalar_select %p68, %s69, %s70
      %p74 = pneg %p68
      %p75 = scmp.eq.s32.totalorder %s33, 1
      %p76 = por %p74, %p75
      %p77 = scmp.ne.s32.totalorder %s69, %s72
      %p78 = scmp.eq.s32.totalorder %s33, 0
      %p79 = por %p77, %p78
      %p80 = scmp.ne.s32.totalorder %s69, %s72
      %p81 = scmp.eq.s32.totalorder %s38, 1
      %p82 = por %p80, %p81
      %p83 = scmp.ne.s32.totalorder %s72, %s73
      %p84 = scmp.eq.s32.totalorder %s38, 0
      %p85 = por %p83, %p84
      %p86 = scmp.ne.s32.totalorder %s72, %s73
      %p87 = scmp.eq.s32.totalorder %s39, 1
      %p88 = por %p86, %p87
      %p90 = scmp.ne.s32.totalorder %s73, %s89
      %p91 = scmp.eq.s32.totalorder %s39, 0
      %p92 = por %p90, %p91
      %s93 = ssub.s32 %s33, %s40
      %p94 = scmp.eq.s32.totalorder %s93, 0
      %s96 = sadd.s32 %s95, 1
      %s97 = scalar_select %p94, %s95, %s96
      %p100 = pneg %p94
      %p101 = scmp.eq.s32.totalorder %s33, 1
      %p102 = por %p100, %p101
      %p103 = scmp.ne.s32.totalorder %s95, %s98
      %p104 = scmp.eq.s32.totalorder %s33, 0
      %p105 = por %p103, %p104
      %p106 = scmp.ne.s32.totalorder %s95, %s98
      %p107 = scmp.eq.s32.totalorder %s38, 1
      %p108 = por %p106, %p107
      %p109 = scmp.ne.s32.totalorder %s98, %s99
      %p110 = scmp.eq.s32.totalorder %s38, 0
      %p111 = por %p109, %p110
      %p112 = scmp.ne.s32.totalorder %s98, %s99
      %p113 = scmp.eq.s32.totalorder %s39, 1
      %p114 = por %p112, %p113
      %p116 = scmp.ne.s32.totalorder %s99, %s115
      %p117 = scmp.eq.s32.totalorder %s39, 0
      %p118 = por %p116, %p117
      %s119 = ssub.s32 %s33, %s40
      %p120 = scmp.eq.s32.totalorder %s119, 0
      %s122 = sadd.s32 %s121, 1
      %s123 = scalar_select %p120, %s121, %s122
      %p126 = pneg %p120
      %p127 = scmp.eq.s32.totalorder %s33, 1
      %p128 = por %p126, %p127
      %p129 = scmp.ne.s32.totalorder %s121, %s124
      %p130 = scmp.eq.s32.totalorder %s33, 0
      %p131 = por %p129, %p130
      %p132 = scmp.ne.s32.totalorder %s121, %s124
      %p133 = scmp.eq.s32.totalorder %s38, 1
      %p134 = por %p132, %p133
      %p135 = scmp.ne.s32.totalorder %s124, %s125
      %p136 = scmp.eq.s32.totalorder %s38, 0
      %p137 = por %p135, %p136
      %p138 = scmp.ne.s32.totalorder %s124, %s125
      %p139 = scmp.eq.s32.totalorder %s39, 1
      %p140 = por %p138, %p139
      %p142 = scmp.ne.s32.totalorder %s125, %s141
      %p143 = scmp.eq.s32.totalorder %s39, 0
      %p144 = por %p142, %p143
      %s145 = ssub.s32 %s33, %s40
      %p146 = scmp.eq.s32.totalorder %s145, 0
      %s148 = sadd.s32 %s147, 1
      %s149 = scalar_select %p146, %s147, %s148
      %p152 = pneg %p146
      %p153 = scmp.eq.s32.totalorder %s33, 1
      %p154 = por %p152, %p153
      %p155 = scmp.ne.s32.totalorder %s147, %s150
      %p156 = scmp.eq.s32.totalorder %s33, 0
      %p157 = por %p155, %p156
      %p158 = scmp.ne.s32.totalorder %s147, %s150
      %p159 = scmp.eq.s32.totalorder %s38, 1
      %p160 = por %p158, %p159
      %p161 = scmp.ne.s32.totalorder %s150, %s151
      %p162 = scmp.eq.s32.totalorder %s38, 0
      %p163 = por %p161, %p162
      %p164 = scmp.ne.s32.totalorder %s150, %s151
      %p165 = scmp.eq.s32.totalorder %s39, 1
      %p166 = por %p164, %p165
      %p168 = scmp.ne.s32.totalorder %s151, %s167
      %p169 = scmp.eq.s32.totalorder %s39, 0
      %p170 = por %p168, %p169
      %s171 = ssub.s32 %s33, %s40
      %p172 = scmp.eq.s32.totalorder %s171, 0
      %s174 = sadd.s32 %s173, 1
      %s175 = scalar_select %p172, %s173, %s174
      %p178 = pneg %p172
      %p179 = scmp.eq.s32.totalorder %s33, 1
      %p180 = por %p178, %p179
      %p181 = scmp.ne.s32.totalorder %s173, %s176
      %p182 = scmp.eq.s32.totalorder %s33, 0
      %p183 = por %p181, %p182
      %p184 = scmp.ne.s32.totalorder %s173, %s176
      %p185 = scmp.eq.s32.totalorder %s38, 1
      %p186 = por %p184, %p185
      %p187 = scmp.ne.s32.totalorder %s176, %s177
      %p188 = scmp.eq.s32.totalorder %s38, 0
      %p189 = por %p187, %p188
      %p190 = scmp.ne.s32.totalorder %s176, %s177
      %p191 = scmp.eq.s32.totalorder %s39, 1
      %p192 = por %p190, %p191
      %p194 = scmp.ne.s32.totalorder %s177, %s193
      %p195 = scmp.eq.s32.totalorder %s39, 0
      %p196 = por %p194, %p195
      %s198 = sadd.s32 %s197, 1
      %p201 = scmp.eq.s32.totalorder %s33, 1
      %p202 = scmp.ne.s32.totalorder %s197, %s199
      %p203 = scmp.eq.s32.totalorder %s33, 0
      %p204 = por %p202, %p203
      %p205 = scmp.ne.s32.totalorder %s197, %s199
      %p206 = scmp.eq.s32.totalorder %s38, 1
      %p207 = por %p205, %p206
      %p208 = scmp.ne.s32.totalorder %s199, %s200
      %p209 = scmp.eq.s32.totalorder %s38, 0
      %p210 = por %p208, %p209
      %p211 = scmp.ne.s32.totalorder %s199, %s200
      %p212 = scmp.eq.s32.totalorder %s39, 1
      %p213 = por %p211, %p212
      %p215 = scmp.ne.s32.totalorder %s200, %s214
      %p216 = scmp.eq.s32.totalorder %s39, 0
      %p217 = por %p215, %p216
      %s219 = sadd.s32 %s218, 1
      %p222 = scmp.eq.s32.totalorder %s33, 1
      %p223 = scmp.ne.s32.totalorder %s218, %s220
      %p224 = scmp.eq.s32.totalorder %s33, 0
      %p225 = por %p223, %p224
      %p226 = scmp.ne.s32.totalorder %s218, %s220
      %p227 = scmp.eq.s32.totalorder %s38, 1
      %p228 = por %p226, %p227
      %p229 = scmp.ne.s32.totalorder %s220, %s221
      %p230 = scmp.eq.s32.totalorder %s38, 0
      %p231 = por %p229, %p230
      %p232 = scmp.ne.s32.totalorder %s220, %s221
      %p233 = scmp.eq.s32.totalorder %s39, 1
      %p234 = por %p232, %p233
      %p236 = scmp.ne.s32.totalorder %s221, %s235
      %p237 = scmp.eq.s32.totalorder %s39, 0
      %p238 = por %p236, %p237
      %s240 = sadd.s32 %s239, 1
      %p243 = scmp.eq.s32.totalorder %s33, 1
      %p244 = scmp.ne.s32.totalorder %s239, %s241
      %p245 = scmp.eq.s32.totalorder %s33, 0
      %p246 = por %p244, %p245
      %p247 = scmp.ne.s32.totalorder %s239, %s241
      %p248 = scmp.eq.s32.totalorder %s38, 1
      %p249 = por %p247, %p248
      %p250 = scmp.ne.s32.totalorder %s241, %s242
      %p251 = scmp.eq.s32.totalorder %s38, 0
      %p252 = por %p250, %p251
      %p253 = scmp.ne.s32.totalorder %s241, %s242
      %p254 = scmp.eq.s32.totalorder %s39, 1
      %p255 = por %p253, %p254
      %p257 = scmp.ne.s32.totalorder %s242, %s256
      %p258 = scmp.eq.s32.totalorder %s39, 0
      %p259 = por %p257, %p258
      %s261 = sadd.s32 %s260, 1
      %p264 = scmp.eq.s32.totalorder %s33, 1
      %p265 = scmp.ne.s32.totalorder %s260, %s262
      %p266 = scmp.eq.s32.totalorder %s33, 0
      %p267 = por %p265, %p266
      %p268 = scmp.ne.s32.totalorder %s260, %s262
      %p269 = scmp.eq.s32.totalorder %s38, 1
      %p270 = por %p268, %p269
      %p271 = scmp.ne.s32.totalorder %s262, %s263
      %p272 = scmp.eq.s32.totalorder %s38, 0
      %p273 = por %p271, %p272
      %p274 = scmp.ne.s32.totalorder %s262, %s263
      %p275 = scmp.eq.s32.totalorder %s39, 1
      %p276 = por %p274, %p275
      %p278 = scmp.ne.s32.totalorder %s263, %s277
      %p279 = scmp.eq.s32.totalorder %s39, 0
      %p280 = por %p278, %p279
      %s282 = sadd.s32 %s281, 1
      %p285 = scmp.eq.s32.totalorder %s33, 1
      %p286 = scmp.ne.s32.totalorder %s281, %s283
      %p287 = scmp.eq.s32.totalorder %s33, 0
      %p288 = por %p286, %p287
      %p289 = scmp.ne.s32.totalorder %s281, %s283
      %p290 = scmp.eq.s32.totalorder %s38, 1
      %p291 = por %p289, %p290
      %p292 = scmp.ne.s32.totalorder %s283, %s284
      %p293 = scmp.eq.s32.totalorder %s38, 0
      %p294 = por %p292, %p293
      %p295 = scmp.ne.s32.totalorder %s283, %s284
      %p296 = scmp.eq.s32.totalorder %s39, 1
      %p297 = por %p295, %p296
      %p299 = scmp.ne.s32.totalorder %s284, %s298
      %p300 = scmp.eq.s32.totalorder %s39, 0
      %p301 = por %p299, %p300
      %s303 = sadd.s32 %s302, 1
      %p306 = scmp.eq.s32.totalorder %s33, 1
      %p307 = scmp.ne.s32.totalorder %s302, %s304
      %p308 = scmp.eq.s32.totalorder %s33, 0
      %p309 = por %p307, %p308
      %p310 = scmp.ne.s32.totalorder %s302, %s304
      %p311 = scmp.eq.s32.totalorder %s38, 1
      %p312 = por %p310, %p311
      %p313 = scmp.ne.s32.totalorder %s304, %s305
      %p314 = scmp.eq.s32.totalorder %s38, 0
      %p315 = por %p313, %p314
      %p316 = scmp.ne.s32.totalorder %s304, %s305
      %p317 = scmp.eq.s32.totalorder %s39, 1
      %p318 = por %p316, %p317
      %p320 = scmp.ne.s32.totalorder %s305, %s319
      %p321 = scmp.eq.s32.totalorder %s39, 0
      %p322 = por %p320, %p321
      %s324 = sadd.s32 %s323, 1
      %p327 = scmp.eq.s32.totalorder %s33, 1
      %p328 = scmp.ne.s32.totalorder %s323, %s325
      %p329 = scmp.eq.s32.totalorder %s33, 0
      %p330 = por %p328, %p329
      %p331 = scmp.ne.s32.totalorder %s323, %s325
      %p332 = scmp.eq.s32.totalorder %s38, 1
      %p333 = por %p331, %p332
      %p334 = scmp.ne.s32.totalorder %s325, %s326
      %p335 = scmp.eq.s32.totalorder %s38, 0
      %p336 = por %p334, %p335
      %p337 = scmp.ne.s32.totalorder %s325, %s326
      %p338 = scmp.eq.s32.totalorder %s39, 1
      %p339 = por %p337, %p338
      %p341 = scmp.ne.s32.totalorder %s326, %s340
      %p342 = scmp.eq.s32.totalorder %s39, 0
      %p343 = por %p341, %p342
      %s345 = sadd.s32 %s344, 1
      %p348 = scmp.eq.s32.totalorder %s33, 1
      %p349 = scmp.ne.s32.totalorder %s344, %s346
      %p350 = scmp.eq.s32.totalorder %s33, 0
      %p351 = por %p349, %p350
      %p352 = scmp.ne.s32.totalorder %s344, %s346
      %p353 = scmp.eq.s32.totalorder %s38, 1
      %p354 = por %p352, %p353
      %p355 = scmp.ne.s32.totalorder %s346, %s347
      %p356 = scmp.eq.s32.totalorder %s38, 0
      %p357 = por %p355, %p356
      %p358 = scmp.ne.s32.totalorder %s346, %s347
      %p359 = scmp.eq.s32.totalorder %s39, 1
      %p360 = por %p358, %p359
      %p362 = scmp.ne.s32.totalorder %s347, %s361
      %p363 = scmp.eq.s32.totalorder %s39, 0
      %p364 = por %p362, %p363
      %s366 = sadd.s32 %s365, 1
      %p369 = scmp.eq.s32.totalorder %s33, 1
      %p370 = scmp.ne.s32.totalorder %s365, %s367
      %p371 = scmp.eq.s32.totalorder %s33, 0
      %p372 = por %p370, %p371
      %p373 = scmp.ne.s32.totalorder %s365, %s367
      %p374 = scmp.eq.s32.totalorder %s38, 1
      %p375 = por %p373, %p374
      %p376 = scmp.ne.s32.totalorder %s367, %s368
      %p377 = scmp.eq.s32.totalorder %s38, 0
      %p378 = por %p376, %p377
      %p379 = scmp.ne.s32.totalorder %s367, %s368
      %p380 = scmp.eq.s32.totalorder %s39, 1
      %p381 = por %p379, %p380
      %p383 = scmp.ne.s32.totalorder %s368, %s382
      %p384 = scmp.eq.s32.totalorder %s39, 0
      %p385 = por %p383, %p384
      %s386 = ssub.s32 %s33, %s40
      %p387 = scmp.eq.s32.totalorder %s386, 0
      %s389 = sadd.s32 %s388, 1
      %s390 = scalar_select %p387, %s388, %s389
      %p393 = pneg %p387
      %p394 = scmp.eq.s32.totalorder %s33, 1
      %p395 = por %p393, %p394
      %p396 = scmp.ne.s32.totalorder %s388, %s391
      %p397 = scmp.eq.s32.totalorder %s33, 0
      %p398 = por %p396, %p397
      %p399 = scmp.ne.s32.totalorder %s388, %s391
      %p400 = scmp.eq.s32.totalorder %s38, 1
      %p401 = por %p399, %p400
      %p402 = scmp.ne.s32.totalorder %s391, %s392
      %p403 = scmp.eq.s32.totalorder %s38, 0
      %p404 = por %p402, %p403
      %p405 = scmp.ne.s32.totalorder %s391, %s392
      %p406 = scmp.eq.s32.totalorder %s39, 1
      %p407 = por %p405, %p406
      %p409 = scmp.ne.s32.totalorder %s392, %s408
      %p410 = scmp.eq.s32.totalorder %s39, 0
      %p411 = por %p409, %p410
      %p412 = scmp.le.s32.totalorder 1, %s33
      %p413 = scmp.lt.s32.totalorder %s33, 3
      %p414 = pnand %p412, %p413
      %p415 = pneg %p414
      // Predicated region
      $region9: #{forward.1} parent=5 // pred_check
        _
      $region10: #{forward.1} parent=5 // pred_check_branch
        %417 = sbr.rel (%p414) target = $region12
      $region11: #{forward.1} parent=5 // pred_region
        %s418 = ssub.s32 %s33, 1
        // Predicated region
        $region13: #{forward.1} parent=11 // pred_check
          %p419 = pneg %p210
        $region14: #{forward.1} parent=11 // pred_check_branch
          %421 = sbr.rel (%p419) target = $region16
        $region15: #{forward.1} parent=11 // pred_region
          %s423 = ssub.s32 256, 256
          %424 = vsyncadd [#allocation6], %s423
          %s425 = sshll.u32 [#allocation7], 4
          %s426 = int_to_ptr.vmem [resolvable:$true] %s425
          %431 = dma.hbm_to_vmem [thread:$0]  %s6, 256, %s426, [#allocation6], 64, 64, 4
        $region16: #{forward.1} parent=11 // pred_fallthru
          _
        // Predicated region
        $region17: #{forward.1} parent=11 // pred_check
          %p432 = pneg %p231
        $region18: #{forward.1} parent=11 // pred_check_branch
          %434 = sbr.rel (%p432) target = $region20
        $region19: #{forward.1} parent=11 // pred_region
          %s436 = ssub.s32 256, 256
          %437 = vsyncadd [#allocation9], %s436
          %s438 = sshll.u32 [#allocation8], 4
          %s439 = int_to_ptr.vmem [resolvable:$true] %s438
          %444 = dma.hbm_to_vmem [thread:$0]  %s7, 256, %s439, [#allocation9], 64, 64, 4
        $region20: #{forward.1} parent=11 // pred_fallthru
          _
        // Predicated region
        $region21: #{forward.1} parent=11 // pred_check
          %p445 = pneg %p252
        $region22: #{forward.1} parent=11 // pred_check_branch
          %447 = sbr.rel (%p445) target = $region24
        $region23: #{forward.1} parent=11 // pred_region
          %s449 = ssub.s32 256, 256
          %450 = vsyncadd [#allocation9], %s449
          %s451 = sshll.u32 [#allocation10], 4
          %s452 = int_to_ptr.vmem [resolvable:$true] %s451
          %457 = dma.hbm_to_vmem [thread:$0]  %s8, 256, %s452, [#allocation9], 64, 64, 4
        $region24: #{forward.1} parent=11 // pred_fallthru
          _
        // Predicated region
        $region25: #{forward.1} parent=11 // pred_check
          %p458 = pneg %p273
        $region26: #{forward.1} parent=11 // pred_check_branch
          %460 = sbr.rel (%p458) target = $region28
        $region27: #{forward.1} parent=11 // pred_region
          %s462 = ssub.s32 256, 256
          %463 = vsyncadd [#allocation12], %s462
          %s464 = sshll.u32 [#allocation11], 4
          %s465 = int_to_ptr.vmem [resolvable:$true] %s464
          %470 = dma.hbm_to_vmem [thread:$0]  %s9, 256, %s465, [#allocation12], 64, 64, 4
        $region28: #{forward.1} parent=11 // pred_fallthru
          _
        // Predicated region
        $region29: #{forward.1} parent=11 // pred_check
          %p471 = pneg %p294
        $region30: #{forward.1} parent=11 // pred_check_branch
          %473 = sbr.rel (%p471) target = $region32
        $region31: #{forward.1} parent=11 // pred_region
          %s475 = ssub.s32 512, 512
          %476 = vsyncadd [#allocation12], %s475
          %s477 = sshll.u32 [#allocation13], 4
          %s478 = int_to_ptr.vmem [resolvable:$true] %s477
          %483 = dma.hbm_to_vmem [thread:$0]  %s10, 512, %s478, [#allocation12], 128, 128, 8
        $region32: #{forward.1} parent=11 // pred_fallthru
          _
        // Predicated region
        $region33: #{forward.1} parent=11 // pred_check
          %p484 = pneg %p315
        $region34: #{forward.1} parent=11 // pred_check_branch
          %486 = sbr.rel (%p484) target = $region36
        $region35: #{forward.1} parent=11 // pred_region
          %s488 = ssub.s32 256, 256
          %489 = vsyncadd [#allocation15], %s488
          %s490 = sshll.u32 [#allocation14], 4
          %s491 = int_to_ptr.vmem [resolvable:$true] %s490
          %496 = dma.hbm_to_vmem [thread:$0]  %s11, 256, %s491, [#allocation15], 64, 64, 4
        $region36: #{forward.1} parent=11 // pred_fallthru
          _
        // Predicated region
        $region37: #{forward.1} parent=11 // pred_check
          %p497 = pneg %p336
        $region38: #{forward.1} parent=11 // pred_check_branch
          %499 = sbr.rel (%p497) target = $region40
        $region39: #{forward.1} parent=11 // pred_region
          %s501 = ssub.s32 256, 256
          %502 = vsyncadd [#allocation15], %s501
          %s503 = sshll.u32 [#allocation16], 4
          %s504 = int_to_ptr.vmem [resolvable:$true] %s503
          %509 = dma.hbm_to_vmem [thread:$0]  %s12, 256, %s504, [#allocation15], 64, 64, 4
        $region40: #{forward.1} parent=11 // pred_fallthru
          _
        // Predicated region
        $region41: #{forward.1} parent=11 // pred_check
          %p510 = pneg %p357
        $region42: #{forward.1} parent=11 // pred_check_branch
          %512 = sbr.rel (%p510) target = $region44
        $region43: #{forward.1} parent=11 // pred_region
          _
        $region44: #{forward.1} parent=11 // pred_fallthru
          _
        // Predicated region
        $region45: #{forward.1} parent=11 // pred_check
          %p513 = pneg %p378
        $region46: #{forward.1} parent=11 // pred_check_branch
          %515 = sbr.rel (%p513) target = $region48
        $region47: #{forward.1} parent=11 // pred_region
          _
        $region48: #{forward.1} parent=11 // pred_fallthru
          _
      $region12: #{forward.1} parent=5 // pred_fallthru
        _
      %p516 = scmp.lt.s32.totalorder %s33, 2
      // Predicated region
      $region49: #{forward.1} parent=5 // pred_check
        %p517 = pneg %p516
      $region50: #{forward.1} parent=5 // pred_check_branch
        %519 = sbr.rel (%p517) target = $region52
      $region51: #{forward.1} parent=5 // pred_region
        // Predicated region
        $region53: #{forward.1} parent=51 // pred_check
          %p520 = pneg %p53
        $region54: #{forward.1} parent=51 // pred_check_branch
          %522 = sbr.rel (%p520) target = $region56
        $region55: #{forward.1} parent=51 // pred_region
          %s523 = sand.u32 %s43, 1
          %s524 = scalar_lea.sflag [#allocation3], %s523
          %s525 = sand.u32 %s43, 1
          %s526 = smul.addr %s525, 8
          %s527 = scalar_lea.vmem [#allocation2], %s526
          %s529 = ssub.s32 128, 128
          %530 = vsyncadd %s524, %s529
          %s531 = smul.addr %s33, 128
          %s532 = scalar_lea.hbm %s0, %s531
          %s534 = sshll.u32 %s527, 4
          %s535 = int_to_ptr.vmem [resolvable:$true] %s534
          %537 = dma.hbm_to_vmem [thread:$0]  %s532, 128, %s535, %s524
        $region56: #{forward.1} parent=51 // pred_fallthru
          _
        // Predicated region
        $region57: #{forward.1} parent=51 // pred_check
          %p538 = pneg %p79
        $region58: #{forward.1} parent=51 // pred_check_branch
          %540 = sbr.rel (%p538) target = $region60
        $region59: #{forward.1} parent=51 // pred_region
          %s541 = sand.u32 %s33, 1
          %s542 = scalar_lea.sflag [#allocation6], %s541
          %s543 = sand.u32 %s69, 1
          %s544 = smul.addr %s543, 8
          %s545 = scalar_lea.vmem [#allocation5], %s544
          %s547 = ssub.s32 128, 128
          %548 = vsyncadd %s542, %s547
          %s549 = smul.addr %s33, 128
          %s550 = scalar_lea.hbm %s1, %s549
          %s552 = sshll.u32 %s545, 4
          %s553 = int_to_ptr.vmem [resolvable:$true] %s552
          %555 = dma.hbm_to_vmem [thread:$0]  %s550, 128, %s553, %s542
        $region60: #{forward.1} parent=51 // pred_fallthru
          _
        // Predicated region
        $region61: #{forward.1} parent=51 // pred_check
          %p556 = pneg %p105
        $region62: #{forward.1} parent=51 // pred_check_branch
          %558 = sbr.rel (%p556) target = $region64
        $region63: #{forward.1} parent=51 // pred_region
          %p559 = scmp.lt.s32.totalorder %s33, 1
          %s560 = scalar_select %p559, %s33, 1
          %s561 = scalar_lea.vmem %s2, %s560
        $region64: #{forward.1} parent=51 // pred_fallthru
          _
        // Predicated region
        $region65: #{forward.1} parent=51 // pred_check
          %p562 = pneg %p131
        $region66: #{forward.1} parent=51 // pred_check_branch
          %564 = sbr.rel (%p562) target = $region68
        $region67: #{forward.1} parent=51 // pred_region
          %p565 = scmp.lt.s32.totalorder %s33, 1
          %s566 = scalar_select %p565, %s33, 1
          %s567 = smul.addr %s566, 3
          %s568 = smul.addr %s567, 8
          %s569 = scalar_lea.vmem %s3, %s568
        $region68: #{forward.1} parent=51 // pred_fallthru
          _
        // Predicated region
        $region69: #{forward.1} parent=51 // pred_check
          %p570 = pneg %p157
        $region70: #{forward.1} parent=51 // pred_check_branch
          %572 = sbr.rel (%p570) target = $region72
        $region71: #{forward.1} parent=51 // pred_region
          %p573 = scmp.lt.s32.totalorder %s33, 1
          %s574 = scalar_select %p573, %s33, 1
          %s575 = smul.addr %s574, 3
          %s576 = smul.addr %s575, 8
          %s577 = scalar_lea.vmem %s4, %s576
        $region72: #{forward.1} parent=51 // pred_fallthru
          _
        // Predicated region
        $region73: #{forward.1} parent=51 // pred_check
          %p578 = pneg %p183
        $region74: #{forward.1} parent=51 // pred_check_branch
          %580 = sbr.rel (%p578) target = $region76
        $region75: #{forward.1} parent=51 // pred_region
          %p581 = scmp.lt.s32.totalorder %s33, 1
          %s582 = scalar_select %p581, %s33, 1
          %s583 = smul.addr %s582, 8
          %s584 = scalar_lea.vmem %s5, %s583
        $region76: #{forward.1} parent=51 // pred_fallthru
          _
      $region52: #{forward.1} parent=5 // pred_fallthru
        _
      %p585 = scmp.le.s32.totalorder 1, %s33
      %p586 = scmp.lt.s32.totalorder %s33, 3
      %p587 = pnand %p585, %p586
      %p588 = pneg %p587
      // Predicated region
      $region77: #{forward.1} parent=5 // pred_check
        _
      $region78: #{forward.1} parent=5 // pred_check_branch
        %590 = sbr.rel (%p587) target = $region80
      $region79: #{forward.1} parent=5 // pred_region
        %s591 = ssub.s32 %s33, 1
        %s592 = sand.u32 %s46, 1
        %s593 = scalar_lea.sflag [#allocation3], %s592
        %s594 = sand.u32 %s46, 1
        %s595 = smul.addr %s594, 8
        %s596 = scalar_lea.vmem [#allocation2], %s595
        // Predicated region
        $region81: #{forward.1} parent=79 // pred_check
          %p597 = pneg %p59
        $region82: #{forward.1} parent=79 // pred_check_branch
          %599 = sbr.rel (%p597) target = $region84
        $region83: #{forward.1} parent=79 // pred_region
          %600 = dma.done %s593, 128
        $region84: #{forward.1} parent=79 // pred_fallthru
          _
        %s601 = sand.u32 %s38, 1
        %s602 = scalar_lea.sflag [#allocation6], %s601
        %s603 = sand.u32 %s72, 1
        %s604 = smul.addr %s603, 8
        %s605 = scalar_lea.vmem [#allocation5], %s604
        // Predicated region
        $region85: #{forward.1} parent=79 // pred_check
          %p606 = pneg %p85
        $region86: #{forward.1} parent=79 // pred_check_branch
          %608 = sbr.rel (%p606) target = $region88
        $region87: #{forward.1} parent=79 // pred_region
          %609 = dma.done %s602, 128
        $region88: #{forward.1} parent=79 // pred_fallthru
          _
        // Predicated region
        $region89: #{forward.1} parent=79 // pred_check
          %p610 = pneg %p210
        $region90: #{forward.1} parent=79 // pred_check_branch
          %612 = sbr.rel (%p610) target = $region92
        $region91: #{forward.1} parent=79 // pred_region
          %613 = dma.done [#allocation6], 256
        $region92: #{forward.1} parent=79 // pred_fallthru
          _
        // Predicated region
        $region93: #{forward.1} parent=79 // pred_check
          %p614 = pneg %p231
        $region94: #{forward.1} parent=79 // pred_check_branch
          %616 = sbr.rel (%p614) target = $region96
        $region95: #{forward.1} parent=79 // pred_region
          %617 = dma.done [#allocation9], 256
        $region96: #{forward.1} parent=79 // pred_fallthru
          _
        // Predicated region
        $region97: #{forward.1} parent=79 // pred_check
          %p618 = pneg %p252
        $region98: #{forward.1} parent=79 // pred_check_branch
          %620 = sbr.rel (%p618) target = $region100
        $region99: #{forward.1} parent=79 // pred_region
          %621 = dma.done [#allocation9], 256
        $region100: #{forward.1} parent=79 // pred_fallthru
          _
        // Predicated region
        $region101: #{forward.1} parent=79 // pred_check
          %p622 = pneg %p273
        $region102: #{forward.1} parent=79 // pred_check_branch
          %624 = sbr.rel (%p622) target = $region104
        $region103: #{forward.1} parent=79 // pred_region
          %625 = dma.done [#allocation12], 256
        $region104: #{forward.1} parent=79 // pred_fallthru
          _
        // Predicated region
        $region105: #{forward.1} parent=79 // pred_check
          %p626 = pneg %p294
        $region106: #{forward.1} parent=79 // pred_check_branch
          %628 = sbr.rel (%p626) target = $region108
        $region107: #{forward.1} parent=79 // pred_region
          %629 = dma.done [#allocation12], 512
        $region108: #{forward.1} parent=79 // pred_fallthru
          _
        // Predicated region
        $region109: #{forward.1} parent=79 // pred_check
          %p630 = pneg %p315
        $region110: #{forward.1} parent=79 // pred_check_branch
          %632 = sbr.rel (%p630) target = $region112
        $region111: #{forward.1} parent=79 // pred_region
          %633 = dma.done [#allocation15], 256
        $region112: #{forward.1} parent=79 // pred_fallthru
          _
        // Predicated region
        $region113: #{forward.1} parent=79 // pred_check
          %p634 = pneg %p336
        $region114: #{forward.1} parent=79 // pred_check_branch
          %636 = sbr.rel (%p634) target = $region116
        $region115: #{forward.1} parent=79 // pred_region
          %637 = dma.done [#allocation15], 256
        $region116: #{forward.1} parent=79 // pred_fallthru
          _
        %s638 = sand.u32 %s46, 1
        %s639 = scalar_lea.sflag [#allocation3], %s638
        %s640 = sand.u32 %s46, 1
        %s641 = smul.addr %s640, 8
        %s642 = scalar_lea.vmem [#allocation2], %s641
        %p643 = pneg %p59
        %p644 = pneg %p56
        %s645 = sand.u32 %s38, 1
        %s646 = scalar_lea.sflag [#allocation6], %s645
        %s647 = sand.u32 %s72, 1
        %s648 = smul.addr %s647, 8
        %s649 = scalar_lea.vmem [#allocation5], %s648
        %p650 = pneg %p85
        %p651 = pneg %p82
        %p652 = scmp.lt.s32.totalorder %s38, 1
        %s653 = scalar_select %p652, %s38, 1
        %s654 = scalar_lea.vmem %s2, %s653
        %p655 = pneg %p111
        %p656 = pneg %p108
        %p657 = scmp.lt.s32.totalorder %s38, 1
        %s658 = scalar_select %p657, %s38, 1
        %s659 = smul.addr %s658, 3
        %s660 = smul.addr %s659, 8
        %s661 = scalar_lea.vmem %s3, %s660
        %p662 = pneg %p137
        %p663 = pneg %p134
        %p664 = scmp.lt.s32.totalorder %s38, 1
        %s665 = scalar_select %p664, %s38, 1
        %s666 = smul.addr %s665, 3
        %s667 = smul.addr %s666, 8
        %s668 = scalar_lea.vmem %s4, %s667
        %p669 = pneg %p163
        %p670 = pneg %p160
        %p671 = scmp.lt.s32.totalorder %s38, 1
        %s672 = scalar_select %p671, %s38, 1
        %s673 = smul.addr %s672, 8
        %s674 = scalar_lea.vmem %s5, %s673
        %p675 = pneg %p189
        %p676 = pneg %p186
        %p677 = pneg %p210
        %p678 = pneg %p207
        %p679 = pneg %p231
        %p680 = pneg %p228
        %p681 = pneg %p252
        %p682 = pneg %p249
        %p683 = pneg %p273
        %p684 = pneg %p270
        %p685 = pneg %p294
        %p686 = pneg %p291
        %p687 = pneg %p315
        %p688 = pneg %p312
        %p689 = pneg %p336
        %p690 = pneg %p333
        %p691 = pneg %p357
        %p692 = pneg %p354
        %p693 = pneg %p378
        %p694 = pneg %p375
        %p695 = pneg %p404
        %p696 = pneg %p401
        %s697 = sand.u32 %s391, 1
        %s698 = scalar_lea.sflag [#allocation4], %s697
        %s699 = sand.u32 %s391, 1
        %s700 = smul.addr %s699, 8
        %s701 = scalar_lea.vmem [#allocation17], %s700
        %p702 = scmp.lt.s32.totalorder %s38, 1
        %s703 = scalar_select %p702, %s38, 1
        %s704 = scalar_lea.vmem %s2, %s703
        %p705 = scmp.lt.s32.totalorder %s38, 1
        %s706 = scalar_select %p705, %s38, 1
        %s707 = smul.addr %s706, 3
        %s708 = smul.addr %s707, 8
        %s709 = scalar_lea.vmem %s3, %s708
        %p710 = scmp.lt.s32.totalorder %s38, 1
        %s711 = scalar_select %p710, %s38, 1
        %s712 = smul.addr %s711, 3
        %s713 = smul.addr %s712, 8
        %s714 = scalar_lea.vmem %s4, %s713
        %p715 = scmp.lt.s32.totalorder %s38, 1
        %s716 = scalar_select %p715, %s38, 1
        %s717 = smul.addr %s716, 8
        %s718 = scalar_lea.vmem %s5, %s717
        %v720 = vld [vmem:[%s14] sm:$0x1]
        %v721 = vld [vmem:[%s14 + $0x1] sm:$0x1]
        %v722 = vld [vmem:[%s14 + $0x2] sm:$0x1]
        %v723 = vld [vmem:[%s14 + $0x3] sm:$0x1]
        %v724 = vld [vmem:[%s14 + $0x4] sm:$0x1]
        %v725 = vld [vmem:[%s14 + $0x5] sm:$0x1]
        %v726 = vld [vmem:[%s14 + $0x6] sm:$0x1]
        %v727 = vld [vmem:[%s14 + $0x7] sm:$0x1]
        %v728 = vld [vmem:[%s14 + $0x8] sm:$0x1]
        %v729 = vld [vmem:[%s14 + $0x9] sm:$0x1]
        %v730 = vld [vmem:[%s14 + $0xa] sm:$0x1]
        %v731 = vld [vmem:[%s14 + $0xb] sm:$0x1]
        %v732 = vld [vmem:[%s14 + $0xc] sm:$0x1]
        %v733 = vld [vmem:[%s14 + $0xd] sm:$0x1]
        %v734 = vld [vmem:[%s596] sm:$0xff]
        %v735 = vld [vmem:[%s605] sm:$0xff]
        %v736 = vld [vmem:[%s704] sm:$0x1]
        %v737 = vadd.f32 %v734, %v735
        %v738 = vpack.c.bf16 %v737, %v737
        %v739 = vld [vmem:[#allocation7] sm:$0xf]
        %v740 = vld [vmem:[#allocation7 + $0x4] sm:$0xf]
        %v741 = vld [vmem:[#allocation7 + $0x8] sm:$0xf]
        %v742 = vld [vmem:[#allocation7 + $0xc] sm:$0xf]
        %v743 = vlaneseq
        %v744 = vshrl.u32 %v743, 7
        %v745 = vsub.s32 0, %v744
        %v746 = vrot.slane %v720, %v745
        %v751 = vunpack.c.l.b16 %v739
        %v752 = vunpack.c.l.b16 %v740
        %v753 = vunpack.c.l.b16 %v741
        %v754 = vunpack.c.l.b16 %v742
        %v755 = vpack.c.b16 %v752, %v751
        %v756 = vpack.c.b16 %v754, %v753
        %vm759 = vcmask 261120
        %v761 = vsel %vm759, %v738, 0
        %763 = vmatprep.subr.bf16.mxu0 0
        %764 = vmatpush1.bf16.msra.mxu0 0
        %765 = vmatprep.subr.bf16.mxu0 0
        %766 = vmatpush1.bf16.msra.mxu0 0
        %767 = vmatprep.subr.bf16.mxu0 0
        %768 = vmatpush1.bf16.msra.mxu0 0
        %769 = vmatprep.subr.bf16.mxu0 0
        %770 = vmatpush1.bf16.msra.mxu0 0
        %771 = vmatprep.subr.bf16.mxu0 0
        %772 = vmatpush1.bf16.msra.mxu0 0
        %773 = vmatprep.subr.bf16.mxu0 0
        %774 = vmatpush1.bf16.msra.mxu0 0
        %775 = vmatprep.subr.bf16.mxu0 0
        %776 = vmatpush1.bf16.msra.mxu0 %v756
        %777 = vmatprep.subr.bf16.mxu0 0
        %778 = vmatpush1.bf16.msra.mxu0 %v755
        %779 = vmatprep.subr.bf16.mxu0 0
        %780 = vmatpush2.bf16.msra.mxu0 0
        %781 = vmatprep.subr.bf16.mxu0 0
        %782 = vmatpush2.bf16.msra.mxu0 0
        %783 = vmatprep.subr.bf16.mxu0 0
        %784 = vmatpush2.bf16.msra.mxu0 0
        %785 = vmatprep.subr.bf16.mxu0 0
        %786 = vmatpush2.bf16.msra.mxu0 0
        %787 = vmatprep.subr.bf16.mxu0 0
        %788 = vmatpush2.bf16.msra.mxu0 0
        %789 = vmatprep.subr.bf16.mxu0 0
        %790 = vmatpush2.bf16.msra.mxu0 0
        %791 = vmatprep.subr.bf16.mxu0 0
        %792 = vmatpush2.bf16.msra.mxu0 0
        %793 = vmatprep.subr.bf16.mxu0 0
        %794 = vmatpush2.bf16.msra.mxu0 0
        %795 = vmatprep.mubr.bf16.mxu0 0
        %796 = vmatmul.mubr.bf16.gmra.mxu0 %v761
        %v797 = vpop.f32.mrf.mxu0
        %v798 = vadd.f32 %v746, %v797
        %v799 = vpop.f32.mrf.mxu0
        %v800 = vpop.f32.mrf.mxu0
        %v801 = vpop.f32.mrf.mxu0
        %802 = vdwg.mxu0
        %v803 = vpack.c.bf16 %v734, %v734
        %v804 = vld [vmem:[#allocation8] sm:$0xf]
        %v805 = vld [vmem:[#allocation8 + $0x4] sm:$0xf]
        %v806 = vld [vmem:[#allocation8 + $0x8] sm:$0xf]
        %v807 = vld [vmem:[#allocation8 + $0xc] sm:$0xf]
        %v808 = vlaneseq
        %v809 = vshrl.u32 %v808, 7
        %v810 = vsub.s32 0, %v809
        %v811 = vrot.slane %v721, %v810
        %v816 = vunpack.c.l.b16 %v804
        %v817 = vunpack.c.l.b16 %v805
        %v818 = vunpack.c.l.b16 %v806
        %v819 = vunpack.c.l.b16 %v807
        %v820 = vpack.c.b16 %v817, %v816
        %v821 = vpack.c.b16 %v819, %v818
        %v825 = vsel %vm759, %v803, 0
        %827 = vmatprep.subr.bf16.mxu0 0
        %828 = vmatpush1.bf16.msra.mxu0 0
        %829 = vmatprep.subr.bf16.mxu0 0
        %830 = vmatpush1.bf16.msra.mxu0 0
        %831 = vmatprep.subr.bf16.mxu0 0
        %832 = vmatpush1.bf16.msra.mxu0 0
        %833 = vmatprep.subr.bf16.mxu0 0
        %834 = vmatpush1.bf16.msra.mxu0 0
        %835 = vmatprep.subr.bf16.mxu0 0
        %836 = vmatpush1.bf16.msra.mxu0 0
        %837 = vmatprep.subr.bf16.mxu0 0
        %838 = vmatpush1.bf16.msra.mxu0 0
        %839 = vmatprep.subr.bf16.mxu0 0
        %840 = vmatpush1.bf16.msra.mxu0 %v821
        %841 = vmatprep.subr.bf16.mxu0 0
        %842 = vmatpush1.bf16.msra.mxu0 %v820
        %843 = vmatprep.subr.bf16.mxu0 0
        %844 = vmatpush2.bf16.msra.mxu0 0
        %845 = vmatprep.subr.bf16.mxu0 0
        %846 = vmatpush2.bf16.msra.mxu0 0
        %847 = vmatprep.subr.bf16.mxu0 0
        %848 = vmatpush2.bf16.msra.mxu0 0
        %849 = vmatprep.subr.bf16.mxu0 0
        %850 = vmatpush2.bf16.msra.mxu0 0
        %851 = vmatprep.subr.bf16.mxu0 0
        %852 = vmatpush2.bf16.msra.mxu0 0
        %853 = vmatprep.subr.bf16.mxu0 0
        %854 = vmatpush2.bf16.msra.mxu0 0
        %855 = vmatprep.subr.bf16.mxu0 0
        %856 = vmatpush2.bf16.msra.mxu0 0
        %857 = vmatprep.subr.bf16.mxu0 0
        %858 = vmatpush2.bf16.msra.mxu0 0
        %859 = vmatprep.mubr.bf16.mxu0 0
        %860 = vmatmul.mubr.bf16.gmra.mxu0 %v825
        %v861 = vpop.f32.mrf.mxu0
        %v862 = vadd.f32 %v811, %v861
        %v863 = vpop.f32.mrf.mxu0
        %v864 = vpop.f32.mrf.mxu0
        %v865 = vpop.f32.mrf.mxu0
        %866 = vdwg.mxu0
        %868 = vrot.lane.b32.xlu0 %v798, 120
        %v869 = vpop.permute.xlu0 %868
        %871 = vrot.lane.b32.xlu0 %v798, 112
        %v872 = vpop.permute.xlu0 %871
        %874 = vrot.lane.b32.xlu0 %v798, 104
        %v875 = vpop.permute.xlu0 %874
        %v877 = vpack.c.bf16 %v798, %v798
        %v878 = vpack.c.bf16 %v869, %v869
        %v879 = vpack.c.bf16 %v872, %v872
        %v880 = vpack.c.bf16 %v875, %v875
        %882 = vrot.lane.b32.xlu0 %v862, 120
        %v883 = vpop.permute.xlu0 %882
        %885 = vrot.lane.b32.xlu0 %v862, 112
        %v886 = vpop.permute.xlu0 %885
        %888 = vrot.lane.b32.xlu0 %v862, 104
        %v889 = vpop.permute.xlu0 %888
        %v891 = vpack.c.bf16 %v862, %v862
        %v892 = vpack.c.bf16 %v883, %v883
        %v893 = vpack.c.bf16 %v886, %v886
        %v894 = vpack.c.bf16 %v889, %v889
        %v896 = vlaneseq
        %v897 = vshrl.u32 %v896, 7
        %v898 = vsub.s32 0, %v897
        %v899 = vrot.slane %v736, %v898
        %902 = vrot.lane.b32.xlu0 %v877, 96
        %v903 = vpop.permute.xlu0 %902
        %vm904 = vcmask 64512
        %v906 = vsel %vm904, %v877, 0
        %v909 = vsel %vm904, %v903, 0
        %911 = vmatprep.subr.bf16.mxu0 0
        %912 = vmatpush1.bf16.xpose.msra.mxu0 0
        %913 = vmatprep.subr.bf16.mxu0 0
        %914 = vmatpush1.bf16.xpose.msra.mxu0 0
        %915 = vmatprep.subr.bf16.mxu0 0
        %916 = vmatpush1.bf16.xpose.msra.mxu0 0
        %917 = vmatprep.subr.bf16.mxu0 0
        %918 = vmatpush1.bf16.xpose.msra.mxu0 0
        %919 = vmatprep.subr.bf16.mxu0 0
        %920 = vmatpush1.bf16.xpose.msra.mxu0 0
        %921 = vmatprep.subr.bf16.mxu0 0
        %922 = vmatpush1.bf16.xpose.msra.mxu0 0
        %923 = vmatprep.subr.bf16.mxu0 0
        %924 = vmatpush1.bf16.xpose.msra.mxu0 0
        %925 = vmatprep.subr.bf16.mxu0 0
        %926 = vmatpush1.bf16.xpose.msra.mxu0 %v909
        %927 = vmatprep.subr.bf16.mxu0 0
        %928 = vmatpush2.bf16.xpose.msra.mxu0 0
        %929 = vmatprep.subr.bf16.mxu0 0
        %930 = vmatpush2.bf16.xpose.msra.mxu0 0
        %931 = vmatprep.subr.bf16.mxu0 0
        %932 = vmatpush2.bf16.xpose.msra.mxu0 0
        %933 = vmatprep.subr.bf16.mxu0 0
        %934 = vmatpush2.bf16.xpose.msra.mxu0 0
        %935 = vmatprep.subr.bf16.mxu0 0
        %936 = vmatpush2.bf16.xpose.msra.mxu0 0
        %937 = vmatprep.subr.bf16.mxu0 0
        %938 = vmatpush2.bf16.xpose.msra.mxu0 0
        %939 = vmatprep.subr.bf16.mxu0 0
        %940 = vmatpush2.bf16.xpose.msra.mxu0 0
        %941 = vmatprep.subr.bf16.mxu0 0
        %942 = vmatpush2.bf16.xpose.msra.mxu0 0
        %943 = vmatprep.mubr.bf16.mxu0 0
        %944 = vmatmul.mubr.bf16.gmra.mxu0 %v906
        %v945 = vpop.f32.mrf.mxu0
        %v946 = vadd.f32 %v899, %v945
        %v947 = vpop.f32.mrf.mxu0
        %v948 = vpop.f32.mrf.mxu0
        %v949 = vpop.f32.mrf.mxu0
        %950 = vdwg.mxu0
        %952 = vrot.lane.b32.xlu0 %v878, 96
        %v953 = vpop.permute.xlu0 %952
        %v955 = vsel %vm904, %v878, 0
        %v958 = vsel %vm904, %v953, 0
        %960 = vmatprep.subr.bf16.mxu0 0
        %961 = vmatpush1.bf16.xpose.msra.mxu0 0
        %962 = vmatprep.subr.bf16.mxu0 0
        %963 = vmatpush1.bf16.xpose.msra.mxu0 0
        %964 = vmatprep.subr.bf16.mxu0 0
        %965 = vmatpush1.bf16.xpose.msra.mxu0 0
        %966 = vmatprep.subr.bf16.mxu0 0
        %967 = vmatpush1.bf16.xpose.msra.mxu0 0
        %968 = vmatprep.subr.bf16.mxu0 0
        %969 = vmatpush1.bf16.xpose.msra.mxu0 0
        %970 = vmatprep.subr.bf16.mxu0 0
        %971 = vmatpush1.bf16.xpose.msra.mxu0 0
        %972 = vmatprep.subr.bf16.mxu0 0
        %973 = vmatpush1.bf16.xpose.msra.mxu0 0
        %974 = vmatprep.subr.bf16.mxu0 0
        %975 = vmatpush1.bf16.xpose.msra.mxu0 %v958
        %976 = vmatprep.subr.bf16.mxu0 0
        %977 = vmatpush2.bf16.xpose.msra.mxu0 0
        %978 = vmatprep.subr.bf16.mxu0 0
        %979 = vmatpush2.bf16.xpose.msra.mxu0 0
        %980 = vmatprep.subr.bf16.mxu0 0
        %981 = vmatpush2.bf16.xpose.msra.mxu0 0
        %982 = vmatprep.subr.bf16.mxu0 0
        %983 = vmatpush2.bf16.xpose.msra.mxu0 0
        %984 = vmatprep.subr.bf16.mxu0 0
        %985 = vmatpush2.bf16.xpose.msra.mxu0 0
        %986 = vmatprep.subr.bf16.mxu0 0
        %987 = vmatpush2.bf16.xpose.msra.mxu0 0
        %988 = vmatprep.subr.bf16.mxu0 0
        %989 = vmatpush2.bf16.xpose.msra.mxu0 0
        %990 = vmatprep.subr.bf16.mxu0 0
        %991 = vmatpush2.bf16.xpose.msra.mxu0 0
        %992 = vmatprep.mubr.bf16.mxu0 0
        %993 = vmatmul.mubr.bf16.gmra.mxu0 %v955
        %v994 = vpop.f32.mrf.mxu0
        %v995 = vadd.f32 %v899, %v994
        %v996 = vpop.f32.mrf.mxu0
        %v997 = vpop.f32.mrf.mxu0
        %v998 = vpop.f32.mrf.mxu0
        %999 = vdwg.mxu0
        %1001 = vrot.lane.b32.xlu0 %v879, 96
        %v1002 = vpop.permute.xlu0 %1001
        %v1004 = vsel %vm904, %v879, 0
        %v1007 = vsel %vm904, %v1002, 0
        %1009 = vmatprep.subr.bf16.mxu0 0
        %1010 = vmatpush1.bf16.xpose.msra.mxu0 0
        %1011 = vmatprep.subr.bf16.mxu0 0
        %1012 = vmatpush1.bf16.xpose.msra.mxu0 0
        %1013 = vmatprep.subr.bf16.mxu0 0
        %1014 = vmatpush1.bf16.xpose.msra.mxu0 0
        %1015 = vmatprep.subr.bf16.mxu0 0
        %1016 = vmatpush1.bf16.xpose.msra.mxu0 0
        %1017 = vmatprep.subr.bf16.mxu0 0
        %1018 = vmatpush1.bf16.xpose.msra.mxu0 0
        %1019 = vmatprep.subr.bf16.mxu0 0
        %1020 = vmatpush1.bf16.xpose.msra.mxu0 0
        %1021 = vmatprep.subr.bf16.mxu0 0
        %1022 = vmatpush1.bf16.xpose.msra.mxu0 0
        %1023 = vmatprep.subr.bf16.mxu0 0
        %1024 = vmatpush1.bf16.xpose.msra.mxu0 %v1007
        %1025 = vmatprep.subr.bf16.mxu0 0
        %1026 = vmatpush2.bf16.xpose.msra.mxu0 0
        %1027 = vmatprep.subr.bf16.mxu0 0
        %1028 = vmatpush2.bf16.xpose.msra.mxu0 0
        %1029 = vmatprep.subr.bf16.mxu0 0
        %1030 = vmatpush2.bf16.xpose.msra.mxu0 0
        %1031 = vmatprep.subr.bf16.mxu0 0
        %1032 = vmatpush2.bf16.xpose.msra.mxu0 0
        %1033 = vmatprep.subr.bf16.mxu0 0
        %1034 = vmatpush2.bf16.xpose.msra.mxu0 0
        %1035 = vmatprep.subr.bf16.mxu0 0
        %1036 = vmatpush2.bf16.xpose.msra.mxu0 0
        %1037 = vmatprep.subr.bf16.mxu0 0
        %1038 = vmatpush2.bf16.xpose.msra.mxu0 0
        %1039 = vmatprep.subr.bf16.mxu0 0
        %1040 = vmatpush2.bf16.xpose.msra.mxu0 0
        %1041 = vmatprep.mubr.bf16.mxu0 0
        %1042 = vmatmul.mubr.bf16.gmra.mxu0 %v1004
        %v1043 = vpop.f32.mrf.mxu0
        %v1044 = vadd.f32 %v899, %v1043
        %v1045 = vpop.f32.mrf.mxu0
        %v1046 = vpop.f32.mrf.mxu0
        %v1047 = vpop.f32.mrf.mxu0
        %1048 = vdwg.mxu0
        %1050 = vrot.lane.b32.xlu0 %v880, 96
        %v1051 = vpop.permute.xlu0 %1050
        %v1053 = vsel %vm904, %v880, 0
        %v1056 = vsel %vm904, %v1051, 0
        %1058 = vmatprep.subr.bf16.mxu0 0
        %1059 = vmatpush1.bf16.xpose.msra.mxu0 0
        %1060 = vmatprep.subr.bf16.mxu0 0
        %1061 = vmatpush1.bf16.xpose.msra.mxu0 0
        %1062 = vmatprep.subr.bf16.mxu0 0
        %1063 = vmatpush1.bf16.xpose.msra.mxu0 0
        %1064 = vmatprep.subr.bf16.mxu0 0
        %1065 = vmatpush1.bf16.xpose.msra.mxu0 0
        %1066 = vmatprep.subr.bf16.mxu0 0
        %1067 = vmatpush1.bf16.xpose.msra.mxu0 0
        %1068 = vmatprep.subr.bf16.mxu0 0
        %1069 = vmatpush1.bf16.xpose.msra.mxu0 0
        %1070 = vmatprep.subr.bf16.mxu0 0
        %1071 = vmatpush1.bf16.xpose.msra.mxu0 0
        %1072 = vmatprep.subr.bf16.mxu0 0
        %1073 = vmatpush1.bf16.xpose.msra.mxu0 %v1056
        %1074 = vmatprep.subr.bf16.mxu0 0
        %1075 = vmatpush2.bf16.xpose.msra.mxu0 0
        %1076 = vmatprep.subr.bf16.mxu0 0
        %1077 = vmatpush2.bf16.xpose.msra.mxu0 0
        %1078 = vmatprep.subr.bf16.mxu0 0
        %1079 = vmatpush2.bf16.xpose.msra.mxu0 0
        %1080 = vmatprep.subr.bf16.mxu0 0
        %1081 = vmatpush2.bf16.xpose.msra.mxu0 0
        %1082 = vmatprep.subr.bf16.mxu0 0
        %1083 = vmatpush2.bf16.xpose.msra.mxu0 0
        %1084 = vmatprep.subr.bf16.mxu0 0
        %1085 = vmatpush2.bf16.xpose.msra.mxu0 0
        %1086 = vmatprep.subr.bf16.mxu0 0
        %1087 = vmatpush2.bf16.xpose.msra.mxu0 0
        %1088 = vmatprep.subr.bf16.mxu0 0
        %1089 = vmatpush2.bf16.xpose.msra.mxu0 0
        %1090 = vmatprep.mubr.bf16.mxu0 0
        %1091 = vmatmul.mubr.bf16.gmra.mxu0 %v1053
        %v1092 = vpop.f32.mrf.mxu0
        %v1093 = vadd.f32 %v899, %v1092
        %v1094 = vpop.f32.mrf.mxu0
        %v1095 = vpop.f32.mrf.mxu0
        %v1096 = vpop.f32.mrf.mxu0
        %1097 = vdwg.mxu0
        %v1098 = vsel %vm904, %v946, -inf
        %1099 = vmax.xlane.f32.xlu0 %v1098
        %v1100 = vpop.xlane.xlu0 %1099
        %v1101 = vsel %vm904, %v995, -inf
        %1102 = vmax.xlane.f32.xlu0 %v1101
        %v1103 = vpop.xlane.xlu0 %1102
        %v1104 = vsel %vm904, %v1044, -inf
        %1105 = vmax.xlane.f32.xlu0 %v1104
        %v1106 = vpop.xlane.xlu0 %1105
        %v1107 = vsel %vm904, %v1093, -inf
        %1108 = vmax.xlane.f32.xlu0 %v1107
        %v1109 = vpop.xlane.xlu0 %1108
        %v1110 = vsub.f32 %v946, %v1100
        %v1111 = vsub.f32 %v995, %v1103
        %v1112 = vsub.f32 %v1044, %v1106
        %v1113 = vsub.f32 %v1093, %v1109
        %v1114 = vmul.f32 %v1110, 1.442695
        %v1115 = vpow.pop %v1114
        %v1116 = vmul.f32 %v1111, 1.442695
        %v1117 = vpow.pop %v1116
        %v1118 = vmul.f32 %v1112, 1.442695
        %v1119 = vpow.pop %v1118
        %v1120 = vmul.f32 %v1113, 1.442695
        %v1121 = vpow.pop %v1120
        %v1122 = vsel %vm904, %v1115, 0.0
        %1123 = vadd.xlane.f32.xlu0 %v1122
        %v1124 = vpop.xlane.xlu0 %1123
        %v1125 = vsel %vm904, %v1117, 0.0
        %1126 = vadd.xlane.f32.xlu0 %v1125
        %v1127 = vpop.xlane.xlu0 %1126
        %v1128 = vsel %vm904, %v1119, 0.0
        %1129 = vadd.xlane.f32.xlu0 %v1128
        %v1130 = vpop.xlane.xlu0 %1129
        %v1131 = vsel %vm904, %v1121, 0.0
        %1132 = vadd.xlane.f32.xlu0 %v1131
        %v1133 = vpop.xlane.xlu0 %1132
        %v1134 = vrcp.pop %v1124
        %v1135 = vrcp.pop %v1127
        %v1136 = vrcp.pop %v1130
        %v1137 = vrcp.pop %v1133
        %v1138 = vmul.f32 %v1115, %v1134
        %v1139 = vmul.f32 %v1117, %v1135
        %v1140 = vmul.f32 %v1119, %v1136
        %v1141 = vmul.f32 %v1121, %v1137
        %v1142 = vpack.c.bf16 %v1138, %v1138
        %v1143 = vpack.c.bf16 %v1139, %v1139
        %v1144 = vpack.c.bf16 %v1140, %v1140
        %v1145 = vpack.c.bf16 %v1141, %v1141
        %v1147 = vsel %vm904, %v1142, 0
        %vm1149 = vcmask 1043456
        %v1151 = vsel %vm1149, %v891, 0
        %1153 = vmatprep.subr.bf16.mxu0 0
        %1154 = vmatpush1.bf16.msra.mxu0 0
        %1155 = vmatprep.subr.bf16.mxu0 0
        %1156 = vmatpush1.bf16.msra.mxu0 0
        %1157 = vmatprep.subr.bf16.mxu0 0
        %1158 = vmatpush1.bf16.msra.mxu0 0
        %1159 = vmatprep.subr.bf16.mxu0 0
        %1160 = vmatpush1.bf16.msra.mxu0 0
        %1161 = vmatprep.subr.bf16.mxu0 0
        %1162 = vmatpush1.bf16.msra.mxu0 0
        %1163 = vmatprep.subr.bf16.mxu0 0
        %1164 = vmatpush1.bf16.msra.mxu0 0
        %1165 = vmatprep.subr.bf16.mxu0 0
        %1166 = vmatpush1.bf16.msra.mxu0 0
        %1167 = vmatprep.subr.bf16.mxu0 0
        %1168 = vmatpush1.bf16.msra.mxu0 %v1151
        %1169 = vmatprep.subr.bf16.mxu0 0
        %1170 = vmatpush2.bf16.msra.mxu0 0
        %1171 = vmatprep.subr.bf16.mxu0 0
        %1172 = vmatpush2.bf16.msra.mxu0 0
        %1173 = vmatprep.subr.bf16.mxu0 0
        %1174 = vmatpush2.bf16.msra.mxu0 0
        %1175 = vmatprep.subr.bf16.mxu0 0
        %1176 = vmatpush2.bf16.msra.mxu0 0
        %1177 = vmatprep.subr.bf16.mxu0 0
        %1178 = vmatpush2.bf16.msra.mxu0 0
        %1179 = vmatprep.subr.bf16.mxu0 0
        %1180 = vmatpush2.bf16.msra.mxu0 0
        %1181 = vmatprep.subr.bf16.mxu0 0
        %1182 = vmatpush2.bf16.msra.mxu0 0
        %1183 = vmatprep.subr.bf16.mxu0 0
        %1184 = vmatpush2.bf16.msra.mxu0 0
        %1185 = vmatprep.mubr.bf16.mxu0 0
        %1186 = vmatmul.mubr.bf16.gmra.mxu0 %v1147
        %v1187 = vpop.f32.mrf.mxu0
        %v1188 = vadd.f32 0.0, %v1187
        %v1189 = vpop.f32.mrf.mxu0
        %v1190 = vpop.f32.mrf.mxu0
        %v1191 = vpop.f32.mrf.mxu0
        %1192 = vdwg.mxu0
        %v1194 = vsel %vm904, %v1143, 0
        %v1197 = vsel %vm1149, %v892, 0
        %1199 = vmatprep.subr.bf16.mxu0 0
        %1200 = vmatpush1.bf16.msra.mxu0 0
        %1201 = vmatprep.subr.bf16.mxu0 0
        %1202 = vmatpush1.bf16.msra.mxu0 0
        %1203 = vmatprep.subr.bf16.mxu0 0
        %1204 = vmatpush1.bf16.msra.mxu0 0
        %1205 = vmatprep.subr.bf16.mxu0 0
        %1206 = vmatpush1.bf16.msra.mxu0 0
        %1207 = vmatprep.subr.bf16.mxu0 0
        %1208 = vmatpush1.bf16.msra.mxu0 0
        %1209 = vmatprep.subr.bf16.mxu0 0
        %1210 = vmatpush1.bf16.msra.mxu0 0
        %1211 = vmatprep.subr.bf16.mxu0 0
        %1212 = vmatpush1.bf16.msra.mxu0 0
        %1213 = vmatprep.subr.bf16.mxu0 0
        %1214 = vmatpush1.bf16.msra.mxu0 %v1197
        %1215 = vmatprep.subr.bf16.mxu0 0
        %1216 = vmatpush2.bf16.msra.mxu0 0
        %1217 = vmatprep.subr.bf16.mxu0 0
        %1218 = vmatpush2.bf16.msra.mxu0 0
        %1219 = vmatprep.subr.bf16.mxu0 0
        %1220 = vmatpush2.bf16.msra.mxu0 0
        %1221 = vmatprep.subr.bf16.mxu0 0
        %1222 = vmatpush2.bf16.msra.mxu0 0
        %1223 = vmatprep.subr.bf16.mxu0 0
        %1224 = vmatpush2.bf16.msra.mxu0 0
        %1225 = vmatprep.subr.bf16.mxu0 0
        %1226 = vmatpush2.bf16.msra.mxu0 0
        %1227 = vmatprep.subr.bf16.mxu0 0
        %1228 = vmatpush2.bf16.msra.mxu0 0
        %1229 = vmatprep.subr.bf16.mxu0 0
        %1230 = vmatpush2.bf16.msra.mxu0 0
        %1231 = vmatprep.mubr.bf16.mxu0 0
        %1232 = vmatmul.mubr.bf16.gmra.mxu0 %v1194
        %v1233 = vpop.f32.mrf.mxu0
        %v1234 = vadd.f32 0.0, %v1233
        %v1235 = vpop.f32.mrf.mxu0
        %v1236 = vpop.f32.mrf.mxu0
        %v1237 = vpop.f32.mrf.mxu0
        %1238 = vdwg.mxu0
        %v1240 = vsel %vm904, %v1144, 0
        %v1243 = vsel %vm1149, %v893, 0
        %1245 = vmatprep.subr.bf16.mxu0 0
        %1246 = vmatpush1.bf16.msra.mxu0 0
        %1247 = vmatprep.subr.bf16.mxu0 0
        %1248 = vmatpush1.bf16.msra.mxu0 0
        %1249 = vmatprep.subr.bf16.mxu0 0
        %1250 = vmatpush1.bf16.msra.mxu0 0
        %1251 = vmatprep.subr.bf16.mxu0 0
        %1252 = vmatpush1.bf16.msra.mxu0 0
        %1253 = vmatprep.subr.bf16.mxu0 0
        %1254 = vmatpush1.bf16.msra.mxu0 0
        %1255 = vmatprep.subr.bf16.mxu0 0
        %1256 = vmatpush1.bf16.msra.mxu0 0
        %1257 = vmatprep.subr.bf16.mxu0 0
        %1258 = vmatpush1.bf16.msra.mxu0 0
        %1259 = vmatprep.subr.bf16.mxu0 0
        %1260 = vmatpush1.bf16.msra.mxu0 %v1243
        %1261 = vmatprep.subr.bf16.mxu0 0
        %1262 = vmatpush2.bf16.msra.mxu0 0
        %1263 = vmatprep.subr.bf16.mxu0 0
        %1264 = vmatpush2.bf16.msra.mxu0 0
        %1265 = vmatprep.subr.bf16.mxu0 0
        %1266 = vmatpush2.bf16.msra.mxu0 0
        %1267 = vmatprep.subr.bf16.mxu0 0
        %1268 = vmatpush2.bf16.msra.mxu0 0
        %1269 = vmatprep.subr.bf16.mxu0 0
        %1270 = vmatpush2.bf16.msra.mxu0 0
        %1271 = vmatprep.subr.bf16.mxu0 0
        %1272 = vmatpush2.bf16.msra.mxu0 0
        %1273 = vmatprep.subr.bf16.mxu0 0
        %1274 = vmatpush2.bf16.msra.mxu0 0
        %1275 = vmatprep.subr.bf16.mxu0 0
        %1276 = vmatpush2.bf16.msra.mxu0 0
        %1277 = vmatprep.mubr.bf16.mxu0 0
        %1278 = vmatmul.mubr.bf16.gmra.mxu0 %v1240
        %v1279 = vpop.f32.mrf.mxu0
        %v1280 = vadd.f32 0.0, %v1279
        %v1281 = vpop.f32.mrf.mxu0
        %v1282 = vpop.f32.mrf.mxu0
        %v1283 = vpop.f32.mrf.mxu0
        %1284 = vdwg.mxu0
        %v1286 = vsel %vm904, %v1145, 0
        %v1289 = vsel %vm1149, %v894, 0
        %1291 = vmatprep.subr.bf16.mxu0 0
        %1292 = vmatpush1.bf16.msra.mxu0 0
        %1293 = vmatprep.subr.bf16.mxu0 0
        %1294 = vmatpush1.bf16.msra.mxu0 0
        %1295 = vmatprep.subr.bf16.mxu0 0
        %1296 = vmatpush1.bf16.msra.mxu0 0
        %1297 = vmatprep.subr.bf16.mxu0 0
        %1298 = vmatpush1.bf16.msra.mxu0 0
        %1299 = vmatprep.subr.bf16.mxu0 0
        %1300 = vmatpush1.bf16.msra.mxu0 0
        %1301 = vmatprep.subr.bf16.mxu0 0
        %1302 = vmatpush1.bf16.msra.mxu0 0
        %1303 = vmatprep.subr.bf16.mxu0 0
        %1304 = vmatpush1.bf16.msra.mxu0 0
        %1305 = vmatprep.subr.bf16.mxu0 0
        %1306 = vmatpush1.bf16.msra.mxu0 %v1289
        %1307 = vmatprep.subr.bf16.mxu0 0
        %1308 = vmatpush2.bf16.msra.mxu0 0
        %1309 = vmatprep.subr.bf16.mxu0 0
        %1310 = vmatpush2.bf16.msra.mxu0 0
        %1311 = vmatprep.subr.bf16.mxu0 0
        %1312 = vmatpush2.bf16.msra.mxu0 0
        %1313 = vmatprep.subr.bf16.mxu0 0
        %1314 = vmatpush2.bf16.msra.mxu0 0
        %1315 = vmatprep.subr.bf16.mxu0 0
        %1316 = vmatpush2.bf16.msra.mxu0 0
        %1317 = vmatprep.subr.bf16.mxu0 0
        %1318 = vmatpush2.bf16.msra.mxu0 0
        %1319 = vmatprep.subr.bf16.mxu0 0
        %1320 = vmatpush2.bf16.msra.mxu0 0
        %1321 = vmatprep.subr.bf16.mxu0 0
        %1322 = vmatpush2.bf16.msra.mxu0 0
        %1323 = vmatprep.mubr.bf16.mxu0 0
        %1324 = vmatmul.mubr.bf16.gmra.mxu0 %v1286
        %v1325 = vpop.f32.mrf.mxu0
        %v1326 = vadd.f32 0.0, %v1325
        %v1327 = vpop.f32.mrf.mxu0
        %v1328 = vpop.f32.mrf.mxu0
        %v1329 = vpop.f32.mrf.mxu0
        %1330 = vdwg.mxu0
        %1332 = vrot.lane.b32.xlu0 %v1234, 8
        %v1333 = vpop.permute.xlu0 %1332
        %1336 = vrot.lane.b32.xlu0 %v1280, 16
        %v1337 = vpop.permute.xlu0 %1336
        %1340 = vrot.lane.b32.xlu0 %v1326, 24
        %v1341 = vpop.permute.xlu0 %1340
        %v1343 = vsel %vm904, %v1188, %v1333
        %vm1344 = vcmask 130048
        %v1345 = vsel %vm1344, %v1343, %v1337
        %vm1346 = vcmask 195584
        %v1347 = vsel %vm1346, %v1345, %v1341
        %v1348 = vpack.c.bf16 %v1347, %v1347
        %v1349 = vld [vmem:[#allocation10] sm:$0xf]
        %v1350 = vld [vmem:[#allocation10 + $0x4] sm:$0xf]
        %v1351 = vld [vmem:[#allocation10 + $0x8] sm:$0xf]
        %v1352 = vld [vmem:[#allocation10 + $0xc] sm:$0xf]
        %v1353 = vlaneseq
        %v1354 = vshrl.u32 %v1353, 7
        %v1355 = vsub.s32 0, %v1354
        %v1356 = vrot.slane %v722, %v1355
        %v1361 = vunpack.c.l.b16 %v1349
        %v1362 = vunpack.c.l.b16 %v1350
        %v1363 = vunpack.c.l.b16 %v1351
        %v1364 = vunpack.c.l.b16 %v1352
        %v1365 = vpack.c.b16 %v1362, %v1361
        %v1366 = vpack.c.b16 %v1364, %v1363
        %v1370 = vsel %vm759, %v1348, 0
        %1372 = vmatprep.subr.bf16.mxu0 0
        %1373 = vmatpush1.bf16.msra.mxu0 0
        %1374 = vmatprep.subr.bf16.mxu0 0
        %1375 = vmatpush1.bf16.msra.mxu0 0
        %1376 = vmatprep.subr.bf16.mxu0 0
        %1377 = vmatpush1.bf16.msra.mxu0 0
        %1378 = vmatprep.subr.bf16.mxu0 0
        %1379 = vmatpush1.bf16.msra.mxu0 0
        %1380 = vmatprep.subr.bf16.mxu0 0
        %1381 = vmatpush1.bf16.msra.mxu0 0
        %1382 = vmatprep.subr.bf16.mxu0 0
        %1383 = vmatpush1.bf16.msra.mxu0 0
        %1384 = vmatprep.subr.bf16.mxu0 0
        %1385 = vmatpush1.bf16.msra.mxu0 %v1366
        %1386 = vmatprep.subr.bf16.mxu0 0
        %1387 = vmatpush1.bf16.msra.mxu0 %v1365
        %1388 = vmatprep.subr.bf16.mxu0 0
        %1389 = vmatpush2.bf16.msra.mxu0 0
        %1390 = vmatprep.subr.bf16.mxu0 0
        %1391 = vmatpush2.bf16.msra.mxu0 0
        %1392 = vmatprep.subr.bf16.mxu0 0
        %1393 = vmatpush2.bf16.msra.mxu0 0
        %1394 = vmatprep.subr.bf16.mxu0 0
        %1395 = vmatpush2.bf16.msra.mxu0 0
        %1396 = vmatprep.subr.bf16.mxu0 0
        %1397 = vmatpush2.bf16.msra.mxu0 0
        %1398 = vmatprep.subr.bf16.mxu0 0
        %1399 = vmatpush2.bf16.msra.mxu0 0
        %1400 = vmatprep.subr.bf16.mxu0 0
        %1401 = vmatpush2.bf16.msra.mxu0 0
        %1402 = vmatprep.subr.bf16.mxu0 0
        %1403 = vmatpush2.bf16.msra.mxu0 0
        %1404 = vmatprep.mubr.bf16.mxu0 0
        %1405 = vmatmul.mubr.bf16.gmra.mxu0 %v1370
        %v1406 = vpop.f32.mrf.mxu0
        %v1407 = vadd.f32 %v1356, %v1406
        %v1408 = vpop.f32.mrf.mxu0
        %v1409 = vpop.f32.mrf.mxu0
        %v1410 = vpop.f32.mrf.mxu0
        %1411 = vdwg.mxu0
        %v1412 = vadd.f32 %v734, %v1407
        %v1413 = vsel %vm759, %v1412, 0.0
        %1414 = vadd.xlane.f32.xlu0 %v1413
        %v1415 = vpop.xlane.xlu0 %1414
        %v1416 = vrcp.pop 32.0
        %v1417 = vmul.f32 %v1415, %v1416
        %v1418 = vsub.f32 %v1412, %v1417
        %v1419 = vmul.f32 %v1418, %v1418
        %v1420 = vsel %vm759, %v1419, 0.0
        %1421 = vadd.xlane.f32.xlu0 %v1420
        %v1422 = vpop.xlane.xlu0 %1421
        %v1423 = vmul.f32 %v1422, %v1416
        %v1424 = vadd.f32 %v1423, 1e-05
        %v1425 = vrsqrt.pop %v1424
        %v1426 = vmul.f32 %v1418, %v1425
        %v1427 = vlaneseq
        %v1428 = vshrl.u32 %v1427, 7
        %v1429 = vsub.s32 0, %v1428
        %v1430 = vrot.slane %v723, %v1429
        %v1431 = vmul.f32 %v1426, %v1430
        %v1432 = vlaneseq
        %v1433 = vshrl.u32 %v1432, 7
        %v1434 = vsub.s32 0, %v1433
        %v1435 = vrot.slane %v724, %v1434
        %v1436 = vadd.f32 %v1431, %v1435
        %v1437 = vadd.f32 %v1436, %v735
        %v1438 = vld [vmem:[%s709] sm:$0xff]
        %v1439 = vld [vmem:[%s709 + $0x8] sm:$0xff]
        %v1440 = vld [vmem:[%s709 + $0x10] sm:$0xff]
        %v1441 = vpack.c.bf16 %v1439, %v1438
        %v1442 = vpack.c.bf16 %v1440, %v1440
        %v1443 = vld [vmem:[#allocation11] sm:$0xf]
        %v1444 = vld [vmem:[#allocation11 + $0x4] sm:$0xf]
        %v1445 = vld [vmem:[#allocation11 + $0x8] sm:$0xf]
        %v1446 = vld [vmem:[#allocation11 + $0xc] sm:$0xf]
        %v1447 = vlaneseq
        %v1448 = vshrl.u32 %v1447, 7
        %v1449 = vsub.s32 0, %v1448
        %v1450 = vrot.slane %v725, %v1449
        %v1455 = vunpack.c.l.b16 %v1443
        %v1456 = vunpack.c.l.b16 %v1444
        %v1457 = vunpack.c.l.b16 %v1445
        %v1458 = vunpack.c.l.b16 %v1446
        %v1459 = vpack.c.b16 %v1456, %v1455
        %v1460 = vpack.c.b16 %v1458, %v1457
        %v1464 = vsel %vm759, %v1441, 0
        %v1467 = vsel %vm759, %v1442, 0
        %1469 = vmatprep.subr.bf16.mxu0 0
        %1470 = vmatpush1.bf16.msra.mxu0 0
        %1471 = vmatprep.subr.bf16.mxu0 0
        %1472 = vmatpush1.bf16.msra.mxu0 0
        %1473 = vmatprep.subr.bf16.mxu0 0
        %1474 = vmatpush1.bf16.msra.mxu0 0
        %1475 = vmatprep.subr.bf16.mxu0 0
        %1476 = vmatpush1.bf16.msra.mxu0 0
        %1477 = vmatprep.subr.bf16.mxu0 0
        %1478 = vmatpush1.bf16.msra.mxu0 0
        %1479 = vmatprep.subr.bf16.mxu0 0
        %1480 = vmatpush1.bf16.msra.mxu0 0
        %1481 = vmatprep.subr.bf16.mxu0 0
        %1482 = vmatpush1.bf16.msra.mxu0 %v1460
        %1483 = vmatprep.subr.bf16.mxu0 0
        %1484 = vmatpush1.bf16.msra.mxu0 %v1459
        %1485 = vmatprep.subr.bf16.mxu0 0
        %1486 = vmatpush2.bf16.msra.mxu0 0
        %1487 = vmatprep.subr.bf16.mxu0 0
        %1488 = vmatpush2.bf16.msra.mxu0 0
        %1489 = vmatprep.subr.bf16.mxu0 0
        %1490 = vmatpush2.bf16.msra.mxu0 0
        %1491 = vmatprep.subr.bf16.mxu0 0
        %1492 = vmatpush2.bf16.msra.mxu0 0
        %1493 = vmatprep.subr.bf16.mxu0 0
        %1494 = vmatpush2.bf16.msra.mxu0 0
        %1495 = vmatprep.subr.bf16.mxu0 0
        %1496 = vmatpush2.bf16.msra.mxu0 0
        %1497 = vmatprep.subr.bf16.mxu0 0
        %1498 = vmatpush2.bf16.msra.mxu0 0
        %1499 = vmatprep.subr.bf16.mxu0 0
        %1500 = vmatpush2.bf16.msra.mxu0 0
        %1501 = vmatprep.mubr.bf16.mxu0 0
        %1502 = vmatmul.mubr.bf16.gmra.mxu0 %v1464
        %v1503 = vpop.f32.mrf.mxu0
        %v1504 = vadd.f32 %v1450, %v1503
        %v1505 = vpop.f32.mrf.mxu0
        %v1506 = vpop.f32.mrf.mxu0
        %v1507 = vadd.f32 %v1450, %v1506
        %v1508 = vpop.f32.mrf.mxu0
        %1509 = vmatprep.mubr.bf16.mxu0 0
        %1510 = vmatmul.mubr.bf16.gmra.mxu0 %v1467
        %v1511 = vpop.f32.mrf.mxu0
        %v1512 = vadd.f32 %v1450, %v1511
        %v1513 = vpop.f32.mrf.mxu0
        %v1514 = vpop.f32.mrf.mxu0
        %v1515 = vpop.f32.mrf.mxu0
        %1516 = vdwg.mxu0
        %v1517 = vld [vmem:[%s714] sm:$0xff]
        %v1518 = vld [vmem:[%s714 + $0x8] sm:$0xff]
        %v1519 = vld [vmem:[%s714 + $0x10] sm:$0xff]
        %v1520 = vsub.f32 1.0, %v1517
        %v1521 = vsub.f32 1.0, %v1518
        %v1522 = vsub.f32 1.0, %v1519
        %1524 = vset.pattern.permute.xlu0 0
        %1525 = vperm.xlu0 %1524, %v1520
        %v1526 = vpop.permute.xlu0 %1525
        %1529 = vset.pattern.permute.xlu0 0
        %1530 = vperm.xlu0 %1529, %v1521
        %v1531 = vpop.permute.xlu0 %1530
        %1534 = vset.pattern.permute.xlu0 0
        %1535 = vperm.xlu0 %1534, %v1522
        %v1536 = vpop.permute.xlu0 %1535
        %v1538 = vmul.f32 %v1504, %v1526
        %v1539 = vmul.f32 %v1507, %v1531
        %v1540 = vmul.f32 %v1512, %v1536
        %v1541 = vpack.c.bf16 %v1539, %v1538
        %v1542 = vpack.c.bf16 %v1540, %v1540
        %v1543 = vld [vmem:[#allocation13] sm:$0xff]
        %v1544 = vld [vmem:[#allocation13 + $0x8] sm:$0xff]
        %v1545 = vld [vmem:[#allocation13 + $0x10] sm:$0xff]
        %v1546 = vld [vmem:[#allocation13 + $0x18] sm:$0xff]
        %v1547 = vlaneseq
        %v1548 = vshrl.u32 %v1547, 7
        %v1549 = vsub.s32 0, %v1548
        %v1550 = vrot.slane %v726, %v1549
        %v1552 = vsel %vm759, %v1437, 0
        %1554 = vmatprep.subr.mxu0 0.0
        %1555 = vmatpush1.msra.mxu0 0.0
        %1556 = vmatprep.subr.mxu0 0.0
        %1557 = vmatpush1.msra.mxu0 0.0
        %1558 = vmatprep.subr.mxu0 0.0
        %1559 = vmatpush1.msra.mxu0 0.0
        %1560 = vmatprep.subr.mxu0 0.0
        %1561 = vmatpush1.msra.mxu0 0.0
        %1562 = vmatprep.subr.mxu0 0.0
        %1563 = vmatpush1.msra.mxu0 0.0
        %1564 = vmatprep.subr.mxu0 0.0
        %1565 = vmatpush1.msra.mxu0 0.0
        %1566 = vmatprep.subr.mxu0 0.0
        %1567 = vmatpush1.msra.mxu0 0.0
        %1568 = vmatprep.subr.mxu0 0.0
        %1569 = vmatpush1.msra.mxu0 0.0
        %1570 = vmatprep.subr.mxu0 0.0
        %1571 = vmatpush1.msra.mxu0 0.0
        %1572 = vmatprep.subr.mxu0 0.0
        %1573 = vmatpush1.msra.mxu0 0.0
        %1574 = vmatprep.subr.mxu0 0.0
        %1575 = vmatpush1.msra.mxu0 0.0
        %1576 = vmatprep.subr.mxu0 0.0
        %1577 = vmatpush1.msra.mxu0 0.0
        %1578 = vmatprep.subr.mxu0 0.0
        %1579 = vmatpush1.msra.mxu0 %v1546
        %1580 = vmatprep.subr.mxu0 0.0
        %1581 = vmatpush1.msra.mxu0 %v1545
        %1582 = vmatprep.subr.mxu0 0.0
        %1583 = vmatpush1.msra.mxu0 %v1544
        %1584 = vmatprep.subr.mxu0 0.0
        %1585 = vmatpush1.msra.mxu0 %v1543
        %1586 = vmatprep.subr.mxu0 0.0
        %1587 = vmatpush2.msra.mxu0 0.0
        %1588 = vmatprep.subr.mxu0 0.0
        %1589 = vmatpush2.msra.mxu0 0.0
        %1590 = vmatprep.subr.mxu0 0.0
        %1591 = vmatpush2.msra.mxu0 0.0
        %1592 = vmatprep.subr.mxu0 0.0
        %1593 = vmatpush2.msra.mxu0 0.0
        %1594 = vmatprep.subr.mxu0 0.0
        %1595 = vmatpush2.msra.mxu0 0.0
        %1596 = vmatprep.subr.mxu0 0.0
        %1597 = vmatpush2.msra.mxu0 0.0
        %1598 = vmatprep.subr.mxu0 0.0
        %1599 = vmatpush2.msra.mxu0 0.0
        %1600 = vmatprep.subr.mxu0 0.0
        %1601 = vmatpush2.msra.mxu0 0.0
        %1602 = vmatprep.subr.mxu0 0.0
        %1603 = vmatpush2.msra.mxu0 0.0
        %1604 = vmatprep.subr.mxu0 0.0
        %1605 = vmatpush2.msra.mxu0 0.0
        %1606 = vmatprep.subr.mxu0 0.0
        %1607 = vmatpush2.msra.mxu0 0.0
        %1608 = vmatprep.subr.mxu0 0.0
        %1609 = vmatpush2.msra.mxu0 0.0
        %1610 = vmatprep.subr.mxu0 0.0
        %1611 = vmatpush2.msra.mxu0 0.0
        %1612 = vmatprep.subr.mxu0 0.0
        %1613 = vmatpush2.msra.mxu0 0.0
        %1614 = vmatprep.subr.mxu0 0.0
        %1615 = vmatpush2.msra.mxu0 0.0
        %1616 = vmatprep.subr.mxu0 0.0
        %1617 = vmatpush2.msra.mxu0 0.0
        %1618 = vmatprep.mubr.f32.mxu0 0.0
        %1619 = vmatmul.mubr.f32.gmra.mxu0 %v1552
        %v1620 = vpop.f32.mrf.mxu0
        %v1621 = vadd.f32 %v1550, %v1620
        %v1622 = vpop.f32.mrf.mxu0
        %1623 = vdwg.mxu0
        %v1624 = vld [vmem:[%s718] sm:$0xff]
        %v1625 = vlaneseq
        %v1626 = vand.u32 %v1625, 127
        %v1627 = vcvt.s32.f32 %v1626
        %v1628 = vmul.f32 %v1624, 16.0
        %v1629 = vsub.f32 %v1628, 0.5
        %v1630 = vmul.f32 %v1624, 8.0
        %v1631 = vsub.f32 %v1630, 0.5
        %vm1632 = vcmask 162944
        %v1633 = vsel %vm1632, %v1621, -inf
        %1634 = vmax.xlane.f32.xlu0 %v1633
        %v1635 = vpop.xlane.xlu0 %1634
        %v1636 = vsub.f32 %v1621, %v1635
        %v1637 = vmul.f32 %v1636, 1.442695
        %v1638 = vpow.pop %v1637
        %1640 = vrot.lane.b32.xlu0 %v1638, 112
        %v1641 = vpop.permute.xlu0 %1640
        %vm1643 = vcmask 31744
        %v1644 = vsel %vm1643, %v1641, 0.0
        %1645 = vadd.xlane.f32.xlu0 %v1644
        %v1646 = vpop.xlane.xlu0 %1645
        %v1647 = vrcp.pop %v1646
        %v1648 = vmul.f32 %v1638, %v1647
        %v1649 = vadd.f32 %v1629, %v1621
        %1651 = vset.pattern.permute.xlu0 0
        %1652 = vperm.xlu0 %1651, %v1649
        %v1653 = vpop.permute.xlu0 %1652
        %v1655 = vsub.f32 %v1627, %v1653
        %v1656 = vand.u32 2147483647, %v1655
        %v1657 = vsub.f32 1.0, %v1656
        %v1658 = vmax.f32 %v1657, 0.0
        %1660 = vset.pattern.permute.xlu0 16
        %1661 = vperm.xlu0 %1660, %v1648
        %v1662 = vpop.permute.xlu0 %1661
        %v1664 = vmul.f32 %v1662, %v1658
        %v1665 = vadd.f32 %v1664, 0.0
        %1667 = vrot.lane.b32.xlu0 %v1621, 127
        %v1668 = vpop.permute.xlu0 %1667
        %v1670 = vadd.f32 %v1629, %v1668
        %1672 = vset.pattern.permute.xlu0 0
        %1673 = vperm.xlu0 %1672, %v1670
        %v1674 = vpop.permute.xlu0 %1673
        %v1676 = vsub.f32 %v1627, %v1674
        %v1677 = vand.u32 2147483647, %v1676
        %v1678 = vsub.f32 1.0, %v1677
        %v1679 = vmax.f32 %v1678, 0.0
        %1680 = vset.pattern.permute.xlu0 17
        %1681 = vperm.xlu0 %1680, %v1648
        %v1682 = vpop.permute.xlu0 %1681
        %v1684 = vmul.f32 %v1682, %v1679
        %v1685 = vadd.f32 %v1665, %v1684
        %v1686 = vpack.c.bf16 %v1685, %v1685
        %v1687 = vadd.f32 %v1631, %v1668
        %1689 = vset.pattern.permute.xlu0 1
        %1690 = vperm.xlu0 %1689, %v1687
        %v1691 = vpop.permute.xlu0 %1690
        %v1693 = vsub.f32 %v1627, %v1691
        %v1694 = vand.u32 2147483647, %v1693
        %v1695 = vsub.f32 1.0, %v1694
        %v1696 = vmax.f32 %v1695, 0.0
        %1697 = vset.pattern.permute.xlu0 18
        %1698 = vperm.xlu0 %1697, %v1648
        %v1699 = vpop.permute.xlu0 %1698
        %v1701 = vmul.f32 %v1699, %v1696
        %v1702 = vadd.f32 %v1701, 0.0
        %1703 = vrot.lane.b32.xlu0 %v1621, 126
        %v1704 = vpop.permute.xlu0 %1703
        %v1706 = vadd.f32 %v1631, %v1704
        %1708 = vset.pattern.permute.xlu0 1
        %1709 = vperm.xlu0 %1708, %v1706
        %v1710 = vpop.permute.xlu0 %1709
        %v1712 = vsub.f32 %v1627, %v1710
        %v1713 = vand.u32 2147483647, %v1712
        %v1714 = vsub.f32 1.0, %v1713
        %v1715 = vmax.f32 %v1714, 0.0
        %1716 = vset.pattern.permute.xlu0 19
        %1717 = vperm.xlu0 %1716, %v1648
        %v1718 = vpop.permute.xlu0 %1717
        %v1720 = vmul.f32 %v1718, %v1715
        %v1721 = vadd.f32 %v1702, %v1720
        %v1722 = vpack.c.bf16 %v1721, %v1721
        %v1724 = vsel %vm904, %v1722, 0
        %v1727 = vsel %vm1149, %v1542, 0
        %1729 = vmatprep.subr.bf16.mxu0 0
        %1730 = vmatpush1.bf16.msra.mxu0 0
        %1731 = vmatprep.subr.bf16.mxu0 0
        %1732 = vmatpush1.bf16.msra.mxu0 0
        %1733 = vmatprep.subr.bf16.mxu0 0
        %1734 = vmatpush1.bf16.msra.mxu0 0
        %1735 = vmatprep.subr.bf16.mxu0 0
        %1736 = vmatpush1.bf16.msra.mxu0 0
        %1737 = vmatprep.subr.bf16.mxu0 0
        %1738 = vmatpush1.bf16.msra.mxu0 0
        %1739 = vmatprep.subr.bf16.mxu0 0
        %1740 = vmatpush1.bf16.msra.mxu0 0
        %1741 = vmatprep.subr.bf16.mxu0 0
        %1742 = vmatpush1.bf16.msra.mxu0 0
        %1743 = vmatprep.subr.bf16.mxu0 0
        %1744 = vmatpush1.bf16.msra.mxu0 %v1727
        %1745 = vmatprep.subr.bf16.mxu0 0
        %1746 = vmatpush2.bf16.msra.mxu0 0
        %1747 = vmatprep.subr.bf16.mxu0 0
        %1748 = vmatpush2.bf16.msra.mxu0 0
        %1749 = vmatprep.subr.bf16.mxu0 0
        %1750 = vmatpush2.bf16.msra.mxu0 0
        %1751 = vmatprep.subr.bf16.mxu0 0
        %1752 = vmatpush2.bf16.msra.mxu0 0
        %1753 = vmatprep.subr.bf16.mxu0 0
        %1754 = vmatpush2.bf16.msra.mxu0 0
        %1755 = vmatprep.subr.bf16.mxu0 0
        %1756 = vmatpush2.bf16.msra.mxu0 0
        %1757 = vmatprep.subr.bf16.mxu0 0
        %1758 = vmatpush2.bf16.msra.mxu0 0
        %1759 = vmatprep.subr.bf16.mxu0 0
        %1760 = vmatpush2.bf16.msra.mxu0 0
        %1761 = vmatprep.mubr.bf16.mxu0 0
        %1762 = vmatmul.mubr.bf16.gmra.mxu0 %v1724
        %v1763 = vpop.f32.mrf.mxu0
        %v1764 = vadd.f32 0.0, %v1763
        %v1765 = vpop.f32.mrf.mxu0
        %v1766 = vpop.f32.mrf.mxu0
        %v1767 = vpop.f32.mrf.mxu0
        %1768 = vdwg.mxu0
        %v1770 = vsel %vm1344, %v1686, 0
        %1772 = vmatprep.subr.bf16.mxu0 0
        %1773 = vmatpush1.bf16.msra.mxu0 0
        %1774 = vmatprep.subr.bf16.mxu0 0
        %1775 = vmatpush1.bf16.msra.mxu0 0
        %1776 = vmatprep.subr.bf16.mxu0 0
        %1777 = vmatpush1.bf16.msra.mxu0 0
        %1778 = vmatprep.subr.bf16.mxu0 0
        %1779 = vmatpush1.bf16.msra.mxu0 0
        %1780 = vmatprep.subr.bf16.mxu0 0
        %1781 = vmatpush1.bf16.msra.mxu0 0
        %1782 = vmatprep.subr.bf16.mxu0 0
        %1783 = vmatpush1.bf16.msra.mxu0 0
        %1784 = vmatprep.subr.bf16.mxu0 0
        %1785 = vmatpush1.bf16.msra.mxu0 0
        %1786 = vmatprep.subr.bf16.mxu0 0
        %1787 = vmatpush1.bf16.msra.mxu0 %v1541
        %1788 = vmatprep.subr.bf16.mxu0 0
        %1789 = vmatpush2.bf16.msra.mxu0 0
        %1790 = vmatprep.subr.bf16.mxu0 0
        %1791 = vmatpush2.bf16.msra.mxu0 0
        %1792 = vmatprep.subr.bf16.mxu0 0
        %1793 = vmatpush2.bf16.msra.mxu0 0
        %1794 = vmatprep.subr.bf16.mxu0 0
        %1795 = vmatpush2.bf16.msra.mxu0 0
        %1796 = vmatprep.subr.bf16.mxu0 0
        %1797 = vmatpush2.bf16.msra.mxu0 0
        %1798 = vmatprep.subr.bf16.mxu0 0
        %1799 = vmatpush2.bf16.msra.mxu0 0
        %1800 = vmatprep.subr.bf16.mxu0 0
        %1801 = vmatpush2.bf16.msra.mxu0 0
        %1802 = vmatprep.subr.bf16.mxu0 0
        %1803 = vmatpush2.bf16.msra.mxu0 0
        %1804 = vmatprep.mubr.bf16.mxu0 0
        %1805 = vmatmul.mubr.bf16.gmra.mxu0 %v1770
        %v1806 = vpop.f32.mrf.mxu0
        %v1807 = vadd.f32 %v1764, %v1806
        %v1808 = vpop.f32.mrf.mxu0
        %v1809 = vpop.f32.mrf.mxu0
        %v1810 = vpop.f32.mrf.mxu0
        %1811 = vdwg.mxu0
        %vm1812 = vcmask 195744
        %v1813 = vsel %vm1812, %v1621, -inf
        %1814 = vmax.xlane.f32.xlu0 %v1813
        %v1815 = vpop.xlane.xlu0 %1814
        %v1816 = vsub.f32 %v1621, %v1815
        %v1817 = vmul.f32 %v1816, 1.442695
        %v1818 = vpow.pop %v1817
        %1820 = vrot.lane.b32.xlu0 %v1818, 108
        %v1821 = vpop.permute.xlu0 %1820
        %v1823 = vsel %vm1643, %v1821, 0.0
        %1824 = vadd.xlane.f32.xlu0 %v1823
        %v1825 = vpop.xlane.xlu0 %1824
        %v1826 = vrcp.pop %v1825
        %v1827 = vmul.f32 %v1818, %v1826
        %1828 = vrot.lane.b32.xlu0 %v1621, 124
        %v1829 = vpop.permute.xlu0 %1828
        %v1831 = vadd.f32 %v1629, %v1829
        %1833 = vset.pattern.permute.xlu0 0
        %1834 = vperm.xlu0 %1833, %v1831
        %v1835 = vpop.permute.xlu0 %1834
        %v1837 = vsub.f32 %v1627, %v1835
        %v1838 = vand.u32 2147483647, %v1837
        %v1839 = vsub.f32 1.0, %v1838
        %v1840 = vmax.f32 %v1839, 0.0
        %1842 = vset.pattern.permute.xlu0 20
        %1843 = vperm.xlu0 %1842, %v1827
        %v1844 = vpop.permute.xlu0 %1843
        %v1846 = vmul.f32 %v1844, %v1840
        %v1847 = vadd.f32 %v1846, 0.0
        %1848 = vrot.lane.b32.xlu0 %v1621, 123
        %v1849 = vpop.permute.xlu0 %1848
        %v1851 = vadd.f32 %v1629, %v1849
        %1853 = vset.pattern.permute.xlu0 0
        %1854 = vperm.xlu0 %1853, %v1851
        %v1855 = vpop.permute.xlu0 %1854
        %v1857 = vsub.f32 %v1627, %v1855
        %v1858 = vand.u32 2147483647, %v1857
        %v1859 = vsub.f32 1.0, %v1858
        %v1860 = vmax.f32 %v1859, 0.0
        %1861 = vset.pattern.permute.xlu0 21
        %1862 = vperm.xlu0 %1861, %v1827
        %v1863 = vpop.permute.xlu0 %1862
        %v1865 = vmul.f32 %v1863, %v1860
        %v1866 = vadd.f32 %v1847, %v1865
        %v1867 = vpack.c.bf16 %v1866, %v1866
        %v1868 = vadd.f32 %v1631, %v1849
        %1870 = vset.pattern.permute.xlu0 1
        %1871 = vperm.xlu0 %1870, %v1868
        %v1872 = vpop.permute.xlu0 %1871
        %v1874 = vsub.f32 %v1627, %v1872
        %v1875 = vand.u32 2147483647, %v1874
        %v1876 = vsub.f32 1.0, %v1875
        %v1877 = vmax.f32 %v1876, 0.0
        %1878 = vset.pattern.permute.xlu0 22
        %1879 = vperm.xlu0 %1878, %v1827
        %v1880 = vpop.permute.xlu0 %1879
        %v1882 = vmul.f32 %v1880, %v1877
        %v1883 = vadd.f32 %v1882, 0.0
        %1884 = vrot.lane.b32.xlu0 %v1621, 122
        %v1885 = vpop.permute.xlu0 %1884
        %v1887 = vadd.f32 %v1631, %v1885
        %1889 = vset.pattern.permute.xlu0 1
        %1890 = vperm.xlu0 %1889, %v1887
        %v1891 = vpop.permute.xlu0 %1890
        %v1893 = vsub.f32 %v1627, %v1891
        %v1894 = vand.u32 2147483647, %v1893
        %v1895 = vsub.f32 1.0, %v1894
        %v1896 = vmax.f32 %v1895, 0.0
        %1897 = vset.pattern.permute.xlu0 23
        %1898 = vperm.xlu0 %1897, %v1827
        %v1899 = vpop.permute.xlu0 %1898
        %v1901 = vmul.f32 %v1899, %v1896
        %v1902 = vadd.f32 %v1883, %v1901
        %v1903 = vpack.c.bf16 %v1902, %v1902
        %1905 = vrot.lane.b32.xlu0 %v1542, 120
        %v1906 = vpop.permute.xlu0 %1905
        %v1908 = vsel %vm904, %v1903, 0
        %v1911 = vsel %vm1149, %v1906, 0
        %1913 = vmatprep.subr.bf16.mxu0 0
        %1914 = vmatpush1.bf16.msra.mxu0 0
        %1915 = vmatprep.subr.bf16.mxu0 0
        %1916 = vmatpush1.bf16.msra.mxu0 0
        %1917 = vmatprep.subr.bf16.mxu0 0
        %1918 = vmatpush1.bf16.msra.mxu0 0
        %1919 = vmatprep.subr.bf16.mxu0 0
        %1920 = vmatpush1.bf16.msra.mxu0 0
        %1921 = vmatprep.subr.bf16.mxu0 0
        %1922 = vmatpush1.bf16.msra.mxu0 0
        %1923 = vmatprep.subr.bf16.mxu0 0
        %1924 = vmatpush1.bf16.msra.mxu0 0
        %1925 = vmatprep.subr.bf16.mxu0 0
        %1926 = vmatpush1.bf16.msra.mxu0 0
        %1927 = vmatprep.subr.bf16.mxu0 0
        %1928 = vmatpush1.bf16.msra.mxu0 %v1911
        %1929 = vmatprep.subr.bf16.mxu0 0
        %1930 = vmatpush2.bf16.msra.mxu0 0
        %1931 = vmatprep.subr.bf16.mxu0 0
        %1932 = vmatpush2.bf16.msra.mxu0 0
        %1933 = vmatprep.subr.bf16.mxu0 0
        %1934 = vmatpush2.bf16.msra.mxu0 0
        %1935 = vmatprep.subr.bf16.mxu0 0
        %1936 = vmatpush2.bf16.msra.mxu0 0
        %1937 = vmatprep.subr.bf16.mxu0 0
        %1938 = vmatpush2.bf16.msra.mxu0 0
        %1939 = vmatprep.subr.bf16.mxu0 0
        %1940 = vmatpush2.bf16.msra.mxu0 0
        %1941 = vmatprep.subr.bf16.mxu0 0
        %1942 = vmatpush2.bf16.msra.mxu0 0
        %1943 = vmatprep.subr.bf16.mxu0 0
        %1944 = vmatpush2.bf16.msra.mxu0 0
        %1945 = vmatprep.mubr.bf16.mxu0 0
        %1946 = vmatmul.mubr.bf16.gmra.mxu0 %v1908
        %v1947 = vpop.f32.mrf.mxu0
        %v1948 = vadd.f32 0.0, %v1947
        %v1949 = vpop.f32.mrf.mxu0
        %v1950 = vpop.f32.mrf.mxu0
        %v1951 = vpop.f32.mrf.mxu0
        %1952 = vdwg.mxu0
        %1954 = vrot.lane.b32.xlu0 %v1541, 120
        %v1955 = vpop.permute.xlu0 %1954
        %v1958 = vsel %vm1344, %v1867, 0
        %1960 = vmatprep.subr.bf16.mxu0 0
        %1961 = vmatpush1.bf16.msra.mxu0 0
        %1962 = vmatprep.subr.bf16.mxu0 0
        %1963 = vmatpush1.bf16.msra.mxu0 0
        %1964 = vmatprep.subr.bf16.mxu0 0
        %1965 = vmatpush1.bf16.msra.mxu0 0
        %1966 = vmatprep.subr.bf16.mxu0 0
        %1967 = vmatpush1.bf16.msra.mxu0 0
        %1968 = vmatprep.subr.bf16.mxu0 0
        %1969 = vmatpush1.bf16.msra.mxu0 0
        %1970 = vmatprep.subr.bf16.mxu0 0
        %1971 = vmatpush1.bf16.msra.mxu0 0
        %1972 = vmatprep.subr.bf16.mxu0 0
        %1973 = vmatpush1.bf16.msra.mxu0 0
        %1974 = vmatprep.subr.bf16.mxu0 0
        %1975 = vmatpush1.bf16.msra.mxu0 %v1955
        %1976 = vmatprep.subr.bf16.mxu0 0
        %1977 = vmatpush2.bf16.msra.mxu0 0
        %1978 = vmatprep.subr.bf16.mxu0 0
        %1979 = vmatpush2.bf16.msra.mxu0 0
        %1980 = vmatprep.subr.bf16.mxu0 0
        %1981 = vmatpush2.bf16.msra.mxu0 0
        %1982 = vmatprep.subr.bf16.mxu0 0
        %1983 = vmatpush2.bf16.msra.mxu0 0
        %1984 = vmatprep.subr.bf16.mxu0 0
        %1985 = vmatpush2.bf16.msra.mxu0 0
        %1986 = vmatprep.subr.bf16.mxu0 0
        %1987 = vmatpush2.bf16.msra.mxu0 0
        %1988 = vmatprep.subr.bf16.mxu0 0
        %1989 = vmatpush2.bf16.msra.mxu0 0
        %1990 = vmatprep.subr.bf16.mxu0 0
        %1991 = vmatpush2.bf16.msra.mxu0 0
        %1992 = vmatprep.mubr.bf16.mxu0 0
        %1993 = vmatmul.mubr.bf16.gmra.mxu0 %v1958
        %v1994 = vpop.f32.mrf.mxu0
        %v1995 = vadd.f32 %v1948, %v1994
        %v1996 = vpop.f32.mrf.mxu0
        %v1997 = vpop.f32.mrf.mxu0
        %v1998 = vpop.f32.mrf.mxu0
        %1999 = vdwg.mxu0
        %vm2000 = vcmask 228544
        %v2001 = vsel %vm2000, %v1621, -inf
        %2002 = vmax.xlane.f32.xlu0 %v2001
        %v2003 = vpop.xlane.xlu0 %2002
        %v2004 = vsub.f32 %v1621, %v2003
        %v2005 = vmul.f32 %v2004, 1.442695
        %v2006 = vpow.pop %v2005
        %2008 = vrot.lane.b32.xlu0 %v2006, 104
        %v2009 = vpop.permute.xlu0 %2008
        %v2011 = vsel %vm1643, %v2009, 0.0
        %2012 = vadd.xlane.f32.xlu0 %v2011
        %v2013 = vpop.xlane.xlu0 %2012
        %v2014 = vrcp.pop %v2013
        %v2015 = vmul.f32 %v2006, %v2014
        %2016 = vrot.lane.b32.xlu0 %v1621, 120
        %v2017 = vpop.permute.xlu0 %2016
        %v2019 = vadd.f32 %v1629, %v2017
        %2021 = vset.pattern.permute.xlu0 0
        %2022 = vperm.xlu0 %2021, %v2019
        %v2023 = vpop.permute.xlu0 %2022
        %v2025 = vsub.f32 %v1627, %v2023
        %v2026 = vand.u32 2147483647, %v2025
        %v2027 = vsub.f32 1.0, %v2026
        %v2028 = vmax.f32 %v2027, 0.0
        %2030 = vset.pattern.permute.xlu0 24
        %2031 = vperm.xlu0 %2030, %v2015
        %v2032 = vpop.permute.xlu0 %2031
        %v2034 = vmul.f32 %v2032, %v2028
        %v2035 = vadd.f32 %v2034, 0.0
        %2036 = vrot.lane.b32.xlu0 %v1621, 119
        %v2037 = vpop.permute.xlu0 %2036
        %v2039 = vadd.f32 %v1629, %v2037
        %2041 = vset.pattern.permute.xlu0 0
        %2042 = vperm.xlu0 %2041, %v2039
        %v2043 = vpop.permute.xlu0 %2042
        %v2045 = vsub.f32 %v1627, %v2043
        %v2046 = vand.u32 2147483647, %v2045
        %v2047 = vsub.f32 1.0, %v2046
        %v2048 = vmax.f32 %v2047, 0.0
        %2049 = vset.pattern.permute.xlu0 25
        %2050 = vperm.xlu0 %2049, %v2015
        %v2051 = vpop.permute.xlu0 %2050
        %v2053 = vmul.f32 %v2051, %v2048
        %v2054 = vadd.f32 %v2035, %v2053
        %v2055 = vpack.c.bf16 %v2054, %v2054
        %v2056 = vadd.f32 %v1631, %v2037
        %2058 = vset.pattern.permute.xlu0 1
        %2059 = vperm.xlu0 %2058, %v2056
        %v2060 = vpop.permute.xlu0 %2059
        %v2062 = vsub.f32 %v1627, %v2060
        %v2063 = vand.u32 2147483647, %v2062
        %v2064 = vsub.f32 1.0, %v2063
        %v2065 = vmax.f32 %v2064, 0.0
        %2066 = vset.pattern.permute.xlu0 26
        %2067 = vperm.xlu0 %2066, %v2015
        %v2068 = vpop.permute.xlu0 %2067
        %v2070 = vmul.f32 %v2068, %v2065
        %v2071 = vadd.f32 %v2070, 0.0
        %2072 = vrot.lane.b32.xlu0 %v1621, 118
        %v2073 = vpop.permute.xlu0 %2072
        %v2075 = vadd.f32 %v1631, %v2073
        %2077 = vset.pattern.permute.xlu0 1
        %2078 = vperm.xlu0 %2077, %v2075
        %v2079 = vpop.permute.xlu0 %2078
        %v2081 = vsub.f32 %v1627, %v2079
        %v2082 = vand.u32 2147483647, %v2081
        %v2083 = vsub.f32 1.0, %v2082
        %v2084 = vmax.f32 %v2083, 0.0
        %2085 = vset.pattern.permute.xlu0 27
        %2086 = vperm.xlu0 %2085, %v2015
        %v2087 = vpop.permute.xlu0 %2086
        %v2089 = vmul.f32 %v2087, %v2084
        %v2090 = vadd.f32 %v2071, %v2089
        %v2091 = vpack.c.bf16 %v2090, %v2090
        %2092 = vrot.lane.b32.xlu0 %v1542, 112
        %v2093 = vpop.permute.xlu0 %2092
        %v2095 = vsel %vm904, %v2091, 0
        %v2098 = vsel %vm1149, %v2093, 0
        %2100 = vmatprep.subr.bf16.mxu0 0
        %2101 = vmatpush1.bf16.msra.mxu0 0
        %2102 = vmatprep.subr.bf16.mxu0 0
        %2103 = vmatpush1.bf16.msra.mxu0 0
        %2104 = vmatprep.subr.bf16.mxu0 0
        %2105 = vmatpush1.bf16.msra.mxu0 0
        %2106 = vmatprep.subr.bf16.mxu0 0
        %2107 = vmatpush1.bf16.msra.mxu0 0
        %2108 = vmatprep.subr.bf16.mxu0 0
        %2109 = vmatpush1.bf16.msra.mxu0 0
        %2110 = vmatprep.subr.bf16.mxu0 0
        %2111 = vmatpush1.bf16.msra.mxu0 0
        %2112 = vmatprep.subr.bf16.mxu0 0
        %2113 = vmatpush1.bf16.msra.mxu0 0
        %2114 = vmatprep.subr.bf16.mxu0 0
        %2115 = vmatpush1.bf16.msra.mxu0 %v2098
        %2116 = vmatprep.subr.bf16.mxu0 0
        %2117 = vmatpush2.bf16.msra.mxu0 0
        %2118 = vmatprep.subr.bf16.mxu0 0
        %2119 = vmatpush2.bf16.msra.mxu0 0
        %2120 = vmatprep.subr.bf16.mxu0 0
        %2121 = vmatpush2.bf16.msra.mxu0 0
        %2122 = vmatprep.subr.bf16.mxu0 0
        %2123 = vmatpush2.bf16.msra.mxu0 0
        %2124 = vmatprep.subr.bf16.mxu0 0
        %2125 = vmatpush2.bf16.msra.mxu0 0
        %2126 = vmatprep.subr.bf16.mxu0 0
        %2127 = vmatpush2.bf16.msra.mxu0 0
        %2128 = vmatprep.subr.bf16.mxu0 0
        %2129 = vmatpush2.bf16.msra.mxu0 0
        %2130 = vmatprep.subr.bf16.mxu0 0
        %2131 = vmatpush2.bf16.msra.mxu0 0
        %2132 = vmatprep.mubr.bf16.mxu0 0
        %2133 = vmatmul.mubr.bf16.gmra.mxu0 %v2095
        %v2134 = vpop.f32.mrf.mxu0
        %v2135 = vadd.f32 0.0, %v2134
        %v2136 = vpop.f32.mrf.mxu0
        %v2137 = vpop.f32.mrf.mxu0
        %v2138 = vpop.f32.mrf.mxu0
        %2139 = vdwg.mxu0
        %2140 = vrot.lane.b32.xlu0 %v1541, 112
        %v2141 = vpop.permute.xlu0 %2140
        %v2144 = vsel %vm1344, %v2055, 0
        %2146 = vmatprep.subr.bf16.mxu0 0
        %2147 = vmatpush1.bf16.msra.mxu0 0
        %2148 = vmatprep.subr.bf16.mxu0 0
        %2149 = vmatpush1.bf16.msra.mxu0 0
        %2150 = vmatprep.subr.bf16.mxu0 0
        %2151 = vmatpush1.bf16.msra.mxu0 0
        %2152 = vmatprep.subr.bf16.mxu0 0
        %2153 = vmatpush1.bf16.msra.mxu0 0
        %2154 = vmatprep.subr.bf16.mxu0 0
        %2155 = vmatpush1.bf16.msra.mxu0 0
        %2156 = vmatprep.subr.bf16.mxu0 0
        %2157 = vmatpush1.bf16.msra.mxu0 0
        %2158 = vmatprep.subr.bf16.mxu0 0
        %2159 = vmatpush1.bf16.msra.mxu0 0
        %2160 = vmatprep.subr.bf16.mxu0 0
        %2161 = vmatpush1.bf16.msra.mxu0 %v2141
        %2162 = vmatprep.subr.bf16.mxu0 0
        %2163 = vmatpush2.bf16.msra.mxu0 0
        %2164 = vmatprep.subr.bf16.mxu0 0
        %2165 = vmatpush2.bf16.msra.mxu0 0
        %2166 = vmatprep.subr.bf16.mxu0 0
        %2167 = vmatpush2.bf16.msra.mxu0 0
        %2168 = vmatprep.subr.bf16.mxu0 0
        %2169 = vmatpush2.bf16.msra.mxu0 0
        %2170 = vmatprep.subr.bf16.mxu0 0
        %2171 = vmatpush2.bf16.msra.mxu0 0
        %2172 = vmatprep.subr.bf16.mxu0 0
        %2173 = vmatpush2.bf16.msra.mxu0 0
        %2174 = vmatprep.subr.bf16.mxu0 0
        %2175 = vmatpush2.bf16.msra.mxu0 0
        %2176 = vmatprep.subr.bf16.mxu0 0
        %2177 = vmatpush2.bf16.msra.mxu0 0
        %2178 = vmatprep.mubr.bf16.mxu0 0
        %2179 = vmatmul.mubr.bf16.gmra.mxu0 %v2144
        %v2180 = vpop.f32.mrf.mxu0
        %v2181 = vadd.f32 %v2135, %v2180
        %v2182 = vpop.f32.mrf.mxu0
        %v2183 = vpop.f32.mrf.mxu0
        %v2184 = vpop.f32.mrf.mxu0
        %2185 = vdwg.mxu0
        %vm2186 = vcmask 261344
        %v2187 = vsel %vm2186, %v1621, -inf
        %2188 = vmax.xlane.f32.xlu0 %v2187
        %v2189 = vpop.xlane.xlu0 %2188
        %v2190 = vsub.f32 %v1621, %v2189
        %v2191 = vmul.f32 %v2190, 1.442695
        %v2192 = vpow.pop %v2191
        %2194 = vrot.lane.b32.xlu0 %v2192, 100
        %v2195 = vpop.permute.xlu0 %2194
        %v2197 = vsel %vm1643, %v2195, 0.0
        %2198 = vadd.xlane.f32.xlu0 %v2197
        %v2199 = vpop.xlane.xlu0 %2198
        %v2200 = vrcp.pop %v2199
        %v2201 = vmul.f32 %v2192, %v2200
        %2202 = vrot.lane.b32.xlu0 %v1621, 116
        %v2203 = vpop.permute.xlu0 %2202
        %v2205 = vadd.f32 %v1629, %v2203
        %2207 = vset.pattern.permute.xlu0 0
        %2208 = vperm.xlu0 %2207, %v2205
        %v2209 = vpop.permute.xlu0 %2208
        %v2211 = vsub.f32 %v1627, %v2209
        %v2212 = vand.u32 2147483647, %v2211
        %v2213 = vsub.f32 1.0, %v2212
        %v2214 = vmax.f32 %v2213, 0.0
        %2216 = vset.pattern.permute.xlu0 28
        %2217 = vperm.xlu0 %2216, %v2201
        %v2218 = vpop.permute.xlu0 %2217
        %v2220 = vmul.f32 %v2218, %v2214
        %v2221 = vadd.f32 %v2220, 0.0
        %2222 = vrot.lane.b32.xlu0 %v1621, 115
        %v2223 = vpop.permute.xlu0 %2222
        %v2225 = vadd.f32 %v1629, %v2223
        %2227 = vset.pattern.permute.xlu0 0
        %2228 = vperm.xlu0 %2227, %v2225
        %v2229 = vpop.permute.xlu0 %2228
        %v2231 = vsub.f32 %v1627, %v2229
        %v2232 = vand.u32 2147483647, %v2231
        %v2233 = vsub.f32 1.0, %v2232
        %v2234 = vmax.f32 %v2233, 0.0
        %2235 = vset.pattern.permute.xlu0 29
        %2236 = vperm.xlu0 %2235, %v2201
        %v2237 = vpop.permute.xlu0 %2236
        %v2239 = vmul.f32 %v2237, %v2234
        %v2240 = vadd.f32 %v2221, %v2239
        %v2241 = vpack.c.bf16 %v2240, %v2240
        %v2242 = vadd.f32 %v1631, %v2223
        %2244 = vset.pattern.permute.xlu0 1
        %2245 = vperm.xlu0 %2244, %v2242
        %v2246 = vpop.permute.xlu0 %2245
        %v2248 = vsub.f32 %v1627, %v2246
        %v2249 = vand.u32 2147483647, %v2248
        %v2250 = vsub.f32 1.0, %v2249
        %v2251 = vmax.f32 %v2250, 0.0
        %2252 = vset.pattern.permute.xlu0 30
        %2253 = vperm.xlu0 %2252, %v2201
        %v2254 = vpop.permute.xlu0 %2253
        %v2256 = vmul.f32 %v2254, %v2251
        %v2257 = vadd.f32 %v2256, 0.0
        %2258 = vrot.lane.b32.xlu0 %v1621, 114
        %v2259 = vpop.permute.xlu0 %2258
        %v2261 = vadd.f32 %v1631, %v2259
        %2263 = vset.pattern.permute.xlu0 1
        %2264 = vperm.xlu0 %2263, %v2261
        %v2265 = vpop.permute.xlu0 %2264
        %v2267 = vsub.f32 %v1627, %v2265
        %v2268 = vand.u32 2147483647, %v2267
        %v2269 = vsub.f32 1.0, %v2268
        %v2270 = vmax.f32 %v2269, 0.0
        %2271 = vset.pattern.permute.xlu0 31
        %2272 = vperm.xlu0 %2271, %v2201
        %v2273 = vpop.permute.xlu0 %2272
        %v2275 = vmul.f32 %v2273, %v2270
        %v2276 = vadd.f32 %v2257, %v2275
        %v2277 = vpack.c.bf16 %v2276, %v2276
        %2278 = vrot.lane.b32.xlu0 %v1542, 104
        %v2279 = vpop.permute.xlu0 %2278
        %v2281 = vsel %vm904, %v2277, 0
        %v2284 = vsel %vm1149, %v2279, 0
        %2286 = vmatprep.subr.bf16.mxu0 0
        %2287 = vmatpush1.bf16.msra.mxu0 0
        %2288 = vmatprep.subr.bf16.mxu0 0
        %2289 = vmatpush1.bf16.msra.mxu0 0
        %2290 = vmatprep.subr.bf16.mxu0 0
        %2291 = vmatpush1.bf16.msra.mxu0 0
        %2292 = vmatprep.subr.bf16.mxu0 0
        %2293 = vmatpush1.bf16.msra.mxu0 0
        %2294 = vmatprep.subr.bf16.mxu0 0
        %2295 = vmatpush1.bf16.msra.mxu0 0
        %2296 = vmatprep.subr.bf16.mxu0 0
        %2297 = vmatpush1.bf16.msra.mxu0 0
        %2298 = vmatprep.subr.bf16.mxu0 0
        %2299 = vmatpush1.bf16.msra.mxu0 0
        %2300 = vmatprep.subr.bf16.mxu0 0
        %2301 = vmatpush1.bf16.msra.mxu0 %v2284
        %2302 = vmatprep.subr.bf16.mxu0 0
        %2303 = vmatpush2.bf16.msra.mxu0 0
        %2304 = vmatprep.subr.bf16.mxu0 0
        %2305 = vmatpush2.bf16.msra.mxu0 0
        %2306 = vmatprep.subr.bf16.mxu0 0
        %2307 = vmatpush2.bf16.msra.mxu0 0
        %2308 = vmatprep.subr.bf16.mxu0 0
        %2309 = vmatpush2.bf16.msra.mxu0 0
        %2310 = vmatprep.subr.bf16.mxu0 0
        %2311 = vmatpush2.bf16.msra.mxu0 0
        %2312 = vmatprep.subr.bf16.mxu0 0
        %2313 = vmatpush2.bf16.msra.mxu0 0
        %2314 = vmatprep.subr.bf16.mxu0 0
        %2315 = vmatpush2.bf16.msra.mxu0 0
        %2316 = vmatprep.subr.bf16.mxu0 0
        %2317 = vmatpush2.bf16.msra.mxu0 0
        %2318 = vmatprep.mubr.bf16.mxu0 0
        %2319 = vmatmul.mubr.bf16.gmra.mxu0 %v2281
        %v2320 = vpop.f32.mrf.mxu0
        %v2321 = vadd.f32 0.0, %v2320
        %v2322 = vpop.f32.mrf.mxu0
        %v2323 = vpop.f32.mrf.mxu0
        %v2324 = vpop.f32.mrf.mxu0
        %2325 = vdwg.mxu0
        %2326 = vrot.lane.b32.xlu0 %v1541, 104
        %v2327 = vpop.permute.xlu0 %2326
        %v2330 = vsel %vm1344, %v2241, 0
        %2332 = vmatprep.subr.bf16.mxu0 0
        %2333 = vmatpush1.bf16.msra.mxu0 0
        %2334 = vmatprep.subr.bf16.mxu0 0
        %2335 = vmatpush1.bf16.msra.mxu0 0
        %2336 = vmatprep.subr.bf16.mxu0 0
        %2337 = vmatpush1.bf16.msra.mxu0 0
        %2338 = vmatprep.subr.bf16.mxu0 0
        %2339 = vmatpush1.bf16.msra.mxu0 0
        %2340 = vmatprep.subr.bf16.mxu0 0
        %2341 = vmatpush1.bf16.msra.mxu0 0
        %2342 = vmatprep.subr.bf16.mxu0 0
        %2343 = vmatpush1.bf16.msra.mxu0 0
        %2344 = vmatprep.subr.bf16.mxu0 0
        %2345 = vmatpush1.bf16.msra.mxu0 0
        %2346 = vmatprep.subr.bf16.mxu0 0
        %2347 = vmatpush1.bf16.msra.mxu0 %v2327
        %2348 = vmatprep.subr.bf16.mxu0 0
        %2349 = vmatpush2.bf16.msra.mxu0 0
        %2350 = vmatprep.subr.bf16.mxu0 0
        %2351 = vmatpush2.bf16.msra.mxu0 0
        %2352 = vmatprep.subr.bf16.mxu0 0
        %2353 = vmatpush2.bf16.msra.mxu0 0
        %2354 = vmatprep.subr.bf16.mxu0 0
        %2355 = vmatpush2.bf16.msra.mxu0 0
        %2356 = vmatprep.subr.bf16.mxu0 0
        %2357 = vmatpush2.bf16.msra.mxu0 0
        %2358 = vmatprep.subr.bf16.mxu0 0
        %2359 = vmatpush2.bf16.msra.mxu0 0
        %2360 = vmatprep.subr.bf16.mxu0 0
        %2361 = vmatpush2.bf16.msra.mxu0 0
        %2362 = vmatprep.subr.bf16.mxu0 0
        %2363 = vmatpush2.bf16.msra.mxu0 0
        %2364 = vmatprep.mubr.bf16.mxu0 0
        %2365 = vmatmul.mubr.bf16.gmra.mxu0 %v2330
        %v2366 = vpop.f32.mrf.mxu0
        %v2367 = vadd.f32 %v2321, %v2366
        %v2368 = vpop.f32.mrf.mxu0
        %v2369 = vpop.f32.mrf.mxu0
        %v2370 = vpop.f32.mrf.mxu0
        %2371 = vdwg.mxu0
        %2373 = vrot.lane.b32.xlu0 %v1995, 8
        %v2374 = vpop.permute.xlu0 %2373
        %2377 = vrot.lane.b32.xlu0 %v2181, 16
        %v2378 = vpop.permute.xlu0 %2377
        %2381 = vrot.lane.b32.xlu0 %v2367, 24
        %v2382 = vpop.permute.xlu0 %2381
        %v2384 = vsel %vm904, %v1807, %v2374
        %v2385 = vsel %vm1344, %v2384, %v2378
        %v2386 = vsel %vm1346, %v2385, %v2382
        %v2387 = vpack.c.bf16 %v2386, %v2386
        %v2388 = vld [vmem:[#allocation14] sm:$0xf]
        %v2389 = vld [vmem:[#allocation14 + $0x4] sm:$0xf]
        %v2390 = vld [vmem:[#allocation14 + $0x8] sm:$0xf]
        %v2391 = vld [vmem:[#allocation14 + $0xc] sm:$0xf]
        %v2392 = vlaneseq
        %v2393 = vshrl.u32 %v2392, 7
        %v2394 = vsub.s32 0, %v2393
        %v2395 = vrot.slane %v727, %v2394
        %v2400 = vunpack.c.l.b16 %v2388
        %v2401 = vunpack.c.l.b16 %v2389
        %v2402 = vunpack.c.l.b16 %v2390
        %v2403 = vunpack.c.l.b16 %v2391
        %v2404 = vpack.c.b16 %v2401, %v2400
        %v2405 = vpack.c.b16 %v2403, %v2402
        %v2409 = vsel %vm759, %v2387, 0
        %2411 = vmatprep.subr.bf16.mxu0 0
        %2412 = vmatpush1.bf16.msra.mxu0 0
        %2413 = vmatprep.subr.bf16.mxu0 0
        %2414 = vmatpush1.bf16.msra.mxu0 0
        %2415 = vmatprep.subr.bf16.mxu0 0
        %2416 = vmatpush1.bf16.msra.mxu0 0
        %2417 = vmatprep.subr.bf16.mxu0 0
        %2418 = vmatpush1.bf16.msra.mxu0 0
        %2419 = vmatprep.subr.bf16.mxu0 0
        %2420 = vmatpush1.bf16.msra.mxu0 0
        %2421 = vmatprep.subr.bf16.mxu0 0
        %2422 = vmatpush1.bf16.msra.mxu0 0
        %2423 = vmatprep.subr.bf16.mxu0 0
        %2424 = vmatpush1.bf16.msra.mxu0 %v2405
        %2425 = vmatprep.subr.bf16.mxu0 0
        %2426 = vmatpush1.bf16.msra.mxu0 %v2404
        %2427 = vmatprep.subr.bf16.mxu0 0
        %2428 = vmatpush2.bf16.msra.mxu0 0
        %2429 = vmatprep.subr.bf16.mxu0 0
        %2430 = vmatpush2.bf16.msra.mxu0 0
        %2431 = vmatprep.subr.bf16.mxu0 0
        %2432 = vmatpush2.bf16.msra.mxu0 0
        %2433 = vmatprep.subr.bf16.mxu0 0
        %2434 = vmatpush2.bf16.msra.mxu0 0
        %2435 = vmatprep.subr.bf16.mxu0 0
        %2436 = vmatpush2.bf16.msra.mxu0 0
        %2437 = vmatprep.subr.bf16.mxu0 0
        %2438 = vmatpush2.bf16.msra.mxu0 0
        %2439 = vmatprep.subr.bf16.mxu0 0
        %2440 = vmatpush2.bf16.msra.mxu0 0
        %2441 = vmatprep.subr.bf16.mxu0 0
        %2442 = vmatpush2.bf16.msra.mxu0 0
        %2443 = vmatprep.mubr.bf16.mxu0 0
        %2444 = vmatmul.mubr.bf16.gmra.mxu0 %v2409
        %v2445 = vpop.f32.mrf.mxu0
        %v2446 = vadd.f32 %v2395, %v2445
        %v2447 = vpop.f32.mrf.mxu0
        %v2448 = vpop.f32.mrf.mxu0
        %v2449 = vpop.f32.mrf.mxu0
        %2450 = vdwg.mxu0
        %v2451 = vadd.f32 %v1436, %v2446
        %v2452 = vsel %vm759, %v2451, 0.0
        %2453 = vadd.xlane.f32.xlu0 %v2452
        %v2454 = vpop.xlane.xlu0 %2453
        %v2455 = vmul.f32 %v2454, %v1416
        %v2456 = vsub.f32 %v2451, %v2455
        %v2457 = vmul.f32 %v2456, %v2456
        %v2458 = vsel %vm759, %v2457, 0.0
        %2459 = vadd.xlane.f32.xlu0 %v2458
        %v2460 = vpop.xlane.xlu0 %2459
        %v2461 = vmul.f32 %v2460, %v1416
        %v2462 = vadd.f32 %v2461, 1e-05
        %v2463 = vrsqrt.pop %v2462
        %v2464 = vmul.f32 %v2456, %v2463
        %v2465 = vlaneseq
        %v2466 = vshrl.u32 %v2465, 7
        %v2467 = vsub.s32 0, %v2466
        %v2468 = vrot.slane %v728, %v2467
        %v2469 = vmul.f32 %v2464, %v2468
        %v2470 = vlaneseq
        %v2471 = vshrl.u32 %v2470, 7
        %v2472 = vsub.s32 0, %v2471
        %v2473 = vrot.slane %v729, %v2472
        %v2474 = vadd.f32 %v2469, %v2473
        %v2475 = vpack.c.bf16 %v2474, %v2474
        %v2476 = vld [vmem:[#allocation16] sm:$0xf]
        %v2477 = vld [vmem:[#allocation16 + $0x4] sm:$0xf]
        %v2478 = vld [vmem:[#allocation16 + $0x8] sm:$0xf]
        %v2479 = vld [vmem:[#allocation16 + $0xc] sm:$0xf]
        %v2480 = vlaneseq
        %v2481 = vshrl.u32 %v2480, 7
        %v2482 = vsub.s32 0, %v2481
        %v2483 = vrot.slane %v730, %v2482
        %v2488 = vunpack.c.l.b16 %v2476
        %v2489 = vunpack.c.l.b16 %v2477
        %v2490 = vunpack.c.l.b16 %v2478
        %v2491 = vunpack.c.l.b16 %v2479
        %v2492 = vpack.c.b16 %v2489, %v2488
        %v2493 = vpack.c.b16 %v2491, %v2490
        %v2497 = vsel %vm759, %v2475, 0
        %2499 = vmatprep.subr.bf16.mxu0 0
        %2500 = vmatpush1.bf16.msra.mxu0 0
        %2501 = vmatprep.subr.bf16.mxu0 0
        %2502 = vmatpush1.bf16.msra.mxu0 0
        %2503 = vmatprep.subr.bf16.mxu0 0
        %2504 = vmatpush1.bf16.msra.mxu0 0
        %2505 = vmatprep.subr.bf16.mxu0 0
        %2506 = vmatpush1.bf16.msra.mxu0 0
        %2507 = vmatprep.subr.bf16.mxu0 0
        %2508 = vmatpush1.bf16.msra.mxu0 0
        %2509 = vmatprep.subr.bf16.mxu0 0
        %2510 = vmatpush1.bf16.msra.mxu0 0
        %2511 = vmatprep.subr.bf16.mxu0 0
        %2512 = vmatpush1.bf16.msra.mxu0 %v2493
        %2513 = vmatprep.subr.bf16.mxu0 0
        %2514 = vmatpush1.bf16.msra.mxu0 %v2492
        %2515 = vmatprep.subr.bf16.mxu0 0
        %2516 = vmatpush2.bf16.msra.mxu0 0
        %2517 = vmatprep.subr.bf16.mxu0 0
        %2518 = vmatpush2.bf16.msra.mxu0 0
        %2519 = vmatprep.subr.bf16.mxu0 0
        %2520 = vmatpush2.bf16.msra.mxu0 0
        %2521 = vmatprep.subr.bf16.mxu0 0
        %2522 = vmatpush2.bf16.msra.mxu0 0
        %2523 = vmatprep.subr.bf16.mxu0 0
        %2524 = vmatpush2.bf16.msra.mxu0 0
        %2525 = vmatprep.subr.bf16.mxu0 0
        %2526 = vmatpush2.bf16.msra.mxu0 0
        %2527 = vmatprep.subr.bf16.mxu0 0
        %2528 = vmatpush2.bf16.msra.mxu0 0
        %2529 = vmatprep.subr.bf16.mxu0 0
        %2530 = vmatpush2.bf16.msra.mxu0 0
        %2531 = vmatprep.mubr.bf16.mxu0 0
        %2532 = vmatmul.mubr.bf16.gmra.mxu0 %v2497
        %v2533 = vpop.f32.mrf.mxu0
        %v2534 = vadd.f32 %v2483, %v2533
        %v2535 = vpop.f32.mrf.mxu0
        %v2536 = vpop.f32.mrf.mxu0
        %v2537 = vpop.f32.mrf.mxu0
        %2538 = vdwg.mxu0
        %v2539 = vmax.f32 %v2534, 0.0
        %v2540 = vpack.c.bf16 %v2539, %v2539
        %v2541 = vld [vmem:[%s13] sm:$0xf]
        %v2542 = vld [vmem:[%s13 + $0x4] sm:$0xf]
        %v2543 = vld [vmem:[%s13 + $0x8] sm:$0xf]
        %v2544 = vld [vmem:[%s13 + $0xc] sm:$0xf]
        %v2545 = vld [vmem:[%s13 + $0x10] sm:$0xf]
        %v2546 = vld [vmem:[%s13 + $0x14] sm:$0xf]
        %v2547 = vld [vmem:[%s13 + $0x18] sm:$0xf]
        %v2548 = vld [vmem:[%s13 + $0x1c] sm:$0xf]
        %v2549 = vlaneseq
        %v2550 = vshrl.u32 %v2549, 7
        %v2551 = vsub.s32 0, %v2550
        %v2552 = vrot.slane %v731, %v2551
        %v2561 = vunpack.c.l.b16 %v2541
        %v2562 = vunpack.c.l.b16 %v2542
        %v2563 = vunpack.c.l.b16 %v2543
        %v2564 = vunpack.c.l.b16 %v2544
        %v2565 = vunpack.c.l.b16 %v2545
        %v2566 = vunpack.c.l.b16 %v2546
        %v2567 = vunpack.c.l.b16 %v2547
        %v2568 = vunpack.c.l.b16 %v2548
        %v2569 = vpack.c.b16 %v2562, %v2561
        %v2570 = vpack.c.b16 %v2564, %v2563
        %v2571 = vpack.c.b16 %v2566, %v2565
        %v2572 = vpack.c.b16 %v2568, %v2567
        %vm2577 = vcmask 523264
        %v2579 = vsel %vm2577, %v2540, 0
        %2581 = vmatprep.subr.bf16.mxu0 0
        %2582 = vmatpush1.bf16.msra.mxu0 0
        %2583 = vmatprep.subr.bf16.mxu0 0
        %2584 = vmatpush1.bf16.msra.mxu0 0
        %2585 = vmatprep.subr.bf16.mxu0 0
        %2586 = vmatpush1.bf16.msra.mxu0 0
        %2587 = vmatprep.subr.bf16.mxu0 0
        %2588 = vmatpush1.bf16.msra.mxu0 0
        %2589 = vmatprep.subr.bf16.mxu0 0
        %2590 = vmatpush1.bf16.msra.mxu0 %v2572
        %2591 = vmatprep.subr.bf16.mxu0 0
        %2592 = vmatpush1.bf16.msra.mxu0 %v2571
        %2593 = vmatprep.subr.bf16.mxu0 0
        %2594 = vmatpush1.bf16.msra.mxu0 %v2570
        %2595 = vmatprep.subr.bf16.mxu0 0
        %2596 = vmatpush1.bf16.msra.mxu0 %v2569
        %2597 = vmatprep.subr.bf16.mxu0 0
        %2598 = vmatpush2.bf16.msra.mxu0 0
        %2599 = vmatprep.subr.bf16.mxu0 0
        %2600 = vmatpush2.bf16.msra.mxu0 0
        %2601 = vmatprep.subr.bf16.mxu0 0
        %2602 = vmatpush2.bf16.msra.mxu0 0
        %2603 = vmatprep.subr.bf16.mxu0 0
        %2604 = vmatpush2.bf16.msra.mxu0 0
        %2605 = vmatprep.subr.bf16.mxu0 0
        %2606 = vmatpush2.bf16.msra.mxu0 0
        %2607 = vmatprep.subr.bf16.mxu0 0
        %2608 = vmatpush2.bf16.msra.mxu0 0
        %2609 = vmatprep.subr.bf16.mxu0 0
        %2610 = vmatpush2.bf16.msra.mxu0 0
        %2611 = vmatprep.subr.bf16.mxu0 0
        %2612 = vmatpush2.bf16.msra.mxu0 0
        %2613 = vmatprep.mubr.bf16.mxu0 0
        %2614 = vmatmul.mubr.bf16.gmra.mxu0 %v2579
        %v2615 = vpop.f32.mrf.mxu0
        %v2616 = vadd.f32 %v2552, %v2615
        %v2617 = vpop.f32.mrf.mxu0
        %v2618 = vpop.f32.mrf.mxu0
        %v2619 = vpop.f32.mrf.mxu0
        %2620 = vdwg.mxu0
        %v2621 = vadd.f32 %v2474, %v2616
        %v2622 = vsel %vm759, %v2621, 0.0
        %2623 = vadd.xlane.f32.xlu0 %v2622
        %v2624 = vpop.xlane.xlu0 %2623
        %v2625 = vmul.f32 %v2624, %v1416
        %v2626 = vsub.f32 %v2621, %v2625
        %v2627 = vmul.f32 %v2626, %v2626
        %v2628 = vsel %vm759, %v2627, 0.0
        %2629 = vadd.xlane.f32.xlu0 %v2628
        %v2630 = vpop.xlane.xlu0 %2629
        %v2631 = vmul.f32 %v2630, %v1416
        %v2632 = vadd.f32 %v2631, 1e-05
        %v2633 = vrsqrt.pop %v2632
        %v2634 = vmul.f32 %v2626, %v2633
        %v2635 = vlaneseq
        %v2636 = vshrl.u32 %v2635, 7
        %v2637 = vsub.s32 0, %v2636
        %v2638 = vrot.slane %v732, %v2637
        %v2639 = vmul.f32 %v2634, %v2638
        %v2640 = vlaneseq
        %v2641 = vshrl.u32 %v2640, 7
        %v2642 = vsub.s32 0, %v2641
        %v2643 = vrot.slane %v733, %v2642
        %v2644 = vadd.f32 %v2639, %v2643
        %2645 = vst.msk [vmem:[%s701] sm:$0xff] %vm759, %v2644
        %s2646 = sand.u32 %s391, 1
        %s2647 = scalar_lea.sflag [#allocation4], %s2646
        %s2648 = sand.u32 %s391, 1
        %s2649 = smul.addr %s2648, 8
        %s2650 = scalar_lea.vmem [#allocation17], %s2649
        // Predicated region
        $region117: #{forward.1} parent=79 // pred_check
          %p2651 = pneg %p401
        $region118: #{forward.1} parent=79 // pred_check_branch
          %2653 = sbr.rel (%p2651) target = $region120
        $region119: #{forward.1} parent=79 // pred_region
          %s2655 = ssub.s32 128, 128
          %2656 = vsyncadd %s2647, %s2655
          %s2657 = smul.addr %s38, 128
          %s2658 = scalar_lea.hbm %s15, %s2657
          %s2660 = sshll.u32 %s2650, 4
          %s2661 = int_to_ptr.vmem [resolvable:$true] %s2660
          %2663 = dma.vmem_to_hbm [thread:$0]  %s2661, 128, %s2658, %s2647
        $region120: #{forward.1} parent=79 // pred_fallthru
          _
      $region80: #{forward.1} parent=5 // pred_fallthru
        _
      %p2664 = scmp.le.s32.totalorder 2, %s33
      // Predicated region
      $region121: #{forward.1} parent=5 // pred_check
        %p2665 = pneg %p2664
      $region122: #{forward.1} parent=5 // pred_check_branch
        %2667 = sbr.rel (%p2665) target = $region124
      $region123: #{forward.1} parent=5 // pred_region
        %s2668 = ssub.s32 %s33, 2
        // Predicated region
        $region125: #{forward.1} parent=123 // pred_check
          %p2669 = pneg %p407
        $region126: #{forward.1} parent=123 // pred_check_branch
          %2671 = sbr.rel (%p2669) target = $region128
        $region127: #{forward.1} parent=123 // pred_region
          %s2672 = sand.u32 %s392, 1
          %s2673 = scalar_lea.sflag [#allocation4], %s2672
          %s2674 = sand.u32 %s392, 1
          %s2675 = smul.addr %s2674, 8
          %s2676 = scalar_lea.vmem [#allocation17], %s2675
          %2677 = dma.done %s2673, 128
        $region128: #{forward.1} parent=123 // pred_fallthru
          _
      $region124: #{forward.1} parent=5 // pred_fallthru
        _
    $region6: #{forward.1} parent=1 // loop_footer
      %s37 = sadd.s32 1, %s33
    $region7: #{forward.1} parent=1 // loop_footer_branch
      %32 = sbr.rel target = $region3
    $region8: #{forward.1} parent=1 // loop_exit
      _
    %2678 = vsyncpa [#allocation3], 1
    %s2679 = scalar_lea.sflag [#allocation3], 1
    %2680 = vsyncpa %s2679, 1
    %2681 = vsyncpa [#allocation6], 1
    %s2682 = scalar_lea.sflag [#allocation6], 1
    %2683 = vsyncpa %s2682, 1
    %2684 = vsyncpa [#allocation9], 1
    %2685 = vsyncpa [#allocation12], 1
    %2686 = vsyncpa [#allocation15], 1
    %2687 = vsyncpa [#allocation4], 1
    %s2688 = scalar_lea.sflag [#allocation4], 1
    %2689 = vsyncpa %s2688, 1

</llo_original>
